<compile_context>
chip_gen: v7x
topology: tpu7x:2x2x1
jax: 0.10.0
libtpu: 0.0.40
codegen_flags: <defaults>
</compile_context>

<pallas_src>
import math
import functools

import jax
import jax.numpy as jnp
from jax.experimental import pallas as pl
from jax.experimental.pallas import tpu as pltpu


def _layer_norm(x, g, b, eps=1e-5):
    mu = jnp.mean(x, axis=-1, keepdims=True)
    var = jnp.mean(jnp.square(x - mu), axis=-1, keepdims=True)
    return (x - mu) * jax.lax.rsqrt(var + eps) * g + b


def _softmax_lastdim(s):
    s = s - jnp.max(s, axis=-1, keepdims=True)
    p = jnp.exp(s)
    return p / jnp.sum(p, axis=-1, keepdims=True)


def _sigmoid(x):
    return 1.0 / (1.0 + jnp.exp(-x))


def fused_forward_kernel(x_ref, inw_ref, inb_ref, pos_ref,
                         wq_ref, wk_ref, wv_ref, bq_ref, bk_ref, bv_ref,
                         wo_ref, bo_ref,
                         ln1g_ref, ln1b_ref,
                         w1_ref, b1_ref, w2_ref, b2_ref,
                         ln2g_ref, ln2b_ref,
                         wh_ref, bh_ref,
                         hid_ref, pooled_ref, heads_ref,
                         h_scratch,
                         *, num_heads):
    l = pl.program_id(1)
    num_layers = pl.num_programs(1)

    bB, S, D = x_ref.shape
    H = inw_ref.shape[1]
    nh = num_heads
    hd = H // nh
    R = bB * S
    scale = 1.0 / math.sqrt(hd)

    # ---- prologue (first layer only): input projection + positional enc ----
    @pl.when(l == 0)
    def _():
        x = x_ref[...].reshape(R, D).astype(jnp.bfloat16)
        h0 = jnp.dot(x, inw_ref[...],
                     preferred_element_type=jnp.float32) + inb_ref[...]
        h0 = (h0.reshape(bB, S, H) + pos_ref[...][None, :, :]).reshape(R, H)
        h_scratch[...] = h0

    # ---- one encoder layer (grid axis 1 = layer index) ----
    h = h_scratch[...]                       # (R, H) float32
    h_b = h.astype(jnp.bfloat16)

    # multi-head self-attention: heads indexed on a leading ref axis (free
    # static slice, no lane relayout); out-projection accumulated per head.
    attn = jnp.zeros((R, H), jnp.float32)
    for n in range(nh):                      # static, nh is small
        q = jnp.dot(h_b, wq_ref[0, n],
                    preferred_element_type=jnp.float32) + bq_ref[0, n]
        k = jnp.dot(h_b, wk_ref[0, n],
                    preferred_element_type=jnp.float32) + bk_ref[0, n]
        v = jnp.dot(h_b, wv_ref[0, n],
                    preferred_element_type=jnp.float32) + bv_ref[0, n]
        q3 = q.reshape(bB, S, hd).astype(jnp.bfloat16)
        k3 = k.reshape(bB, S, hd).astype(jnp.bfloat16)
        v3 = v.reshape(bB, S, hd).astype(jnp.bfloat16)
        s = jnp.einsum('bqd,bkd->bqk', q3, k3,
                       preferred_element_type=jnp.float32) * scale
        p = _softmax_lastdim(s).astype(jnp.bfloat16)
        o = jnp.einsum('bqk,bkd->bqd', p, v3,
                       preferred_element_type=jnp.float32).reshape(R, hd)
        attn = attn + jnp.dot(o.astype(jnp.bfloat16), wo_ref[0, n],
                              preferred_element_type=jnp.float32)
    attn = attn + bo_ref[0]

    # add & norm 1 (post-LN, PyTorch default)
    h = _layer_norm(h + attn, ln1g_ref[0], ln1b_ref[0])

    # feed-forward (ReLU; dropout omitted -- eval mode)
    f = jnp.dot(h.astype(jnp.bfloat16), w1_ref[0],
                preferred_element_type=jnp.float32) + b1_ref[0]
    f = jnp.maximum(f, 0.0)
    f = jnp.dot(f.astype(jnp.bfloat16), w2_ref[0],
                preferred_element_type=jnp.float32) + b2_ref[0]

    # add & norm 2
    h = _layer_norm(h + f, ln2g_ref[0], ln2b_ref[0])
    h_scratch[...] = h

    # ---- epilogue (last layer only): hidden states, pooling, fused heads ----
    @pl.when(l == num_layers - 1)
    def _():
        hfin = h_scratch[...]
        h3 = hfin.reshape(bB, S, H)
        hid_ref[...] = h3.astype(hid_ref.dtype)

        pooled = jnp.mean(h3, axis=1)                       # (bB, H)
        pooled_ref[...] = pooled[:, None, :].astype(pooled_ref.dtype)

        logits = jnp.dot(pooled, wh_ref[...],
                         preferred_element_type=jnp.float32) + bh_ref[...]
        patterns = _softmax_lastdim(logits[:, 0:7])
        loads = _sigmoid(logits[:, 7:14])
        conf = _sigmoid(logits[:, 14:15])
        heads = jnp.concatenate(
            [patterns, loads, conf, jnp.zeros((bB, 1), jnp.float32)], axis=-1)
        heads_ref[...] = heads[:, None, :].astype(heads_ref.dtype)


# ----------------------------------------------------------------------------
# Parameter init (PyTorch-style layouts, deterministic synthetic values)
# ----------------------------------------------------------------------------
def init_params(key, input_dim, hidden_dim, num_heads, num_layers, ffn_dim,
                max_len=1000):
    def dense(k, out_f, in_f, scale=0.02):
        w = scale * jax.random.normal(k, (out_f, in_f), jnp.float32)
        b = jnp.zeros((1, out_f), jnp.float32)
        return w, b

    keys = jax.random.split(key, 8 + num_layers)
    p = {}
    p["in_w"], p["in_b"] = dense(keys[0], hidden_dim, input_dim)
    p["pos"] = 0.1 * jax.random.normal(keys[1], (max_len, hidden_dim), jnp.float32)

    layers = []
    for li in range(num_layers):
        lk = jax.random.split(keys[2 + li], 4)
        wqkv, bqkv = dense(lk[0], 3 * hidden_dim, hidden_dim)
        wo, bo = dense(lk[1], hidden_dim, hidden_dim)
        w1, b1 = dense(lk[2], ffn_dim, hidden_dim)
        w2, b2 = dense(lk[3], hidden_dim, ffn_dim)
        layers.append(dict(
            wqkv=wqkv, bqkv=bqkv, wo=wo, bo=bo,
            ln1_g=jnp.ones((1, hidden_dim), jnp.float32),
            ln1_b=jnp.zeros((1, hidden_dim), jnp.float32),
            w1=w1, b1=b1, w2=w2, b2=b2,
            ln2_g=jnp.ones((1, hidden_dim), jnp.float32),
            ln2_b=jnp.zeros((1, hidden_dim), jnp.float32),
        ))
    p["layers"] = layers
    p["pat_w"], p["pat_b"] = dense(keys[2 + num_layers], 7, hidden_dim)
    p["load_w"], p["load_b"] = dense(keys[3 + num_layers], 7, hidden_dim)
    p["conf_w"], p["conf_b"] = dense(keys[4 + num_layers], 1, hidden_dim)
    return p


def pack_params(p, num_heads):
    """One-time wrapper-side repack:
       * linears transposed to (in, out), matmul weights cast to bf16,
       * per-layer weights stacked along a leading L axis (streamed per layer),
       * Q/K/V/out-proj split per head on a leading head axis (no in-kernel
         lane slicing), three output heads fused into one (H, 16) projection.
    """
    H = p["in_w"].shape[0]
    nh = num_heads
    hd = H // nh
    layers = p["layers"]

    def per_head_in(w):            # (H_out, H_in) -> x @ w.T split by head
        return w.T.reshape(H, nh, hd).transpose(1, 0, 2)          # (nh, H, hd)

    wq, wk, wv, bq, bk, bv, wo = [], [], [], [], [], [], []
    for lyr in layers:
        wqkv, bqkv = lyr["wqkv"], lyr["bqkv"]
        wq.append(per_head_in(wqkv[0:H]))
        wk.append(per_head_in(wqkv[H:2 * H]))
        wv.append(per_head_in(wqkv[2 * H:3 * H]))
        bq.append(bqkv[:, 0:H].reshape(nh, 1, hd))
        bk.append(bqkv[:, H:2 * H].reshape(nh, 1, hd))
        bv.append(bqkv[:, 2 * H:3 * H].reshape(nh, 1, hd))
        wo.append(lyr["wo"].T.reshape(nh, hd, H))                  # (nh, hd, H)

    stack = lambda name: jnp.stack([l[name] for l in layers])
    stack_t = lambda name: jnp.stack([l[name].T for l in layers])
    bf = lambda a: a.astype(jnp.bfloat16)

    head_w = jnp.concatenate(
        [p["pat_w"].T, p["load_w"].T, p["conf_w"].T, jnp.zeros((H, 1), jnp.float32)],
        axis=1)                                                    # (H, 16)
    head_b = jnp.concatenate(
        [p["pat_b"], p["load_b"], p["conf_b"], jnp.zeros((1, 1), jnp.float32)],
        axis=1)                                                    # (1, 16)

    return dict(
        in_w=bf(p["in_w"].T), in_b=p["in_b"], pos=p["pos"],
        wq=bf(jnp.stack(wq)), wk=bf(jnp.stack(wk)), wv=bf(jnp.stack(wv)),
        bq=jnp.stack(bq), bk=jnp.stack(bk), bv=jnp.stack(bv),
        wo=bf(jnp.stack(wo)), bo=stack("bo"),
        ln1_g=stack("ln1_g"), ln1_b=stack("ln1_b"),
        w1=bf(stack_t("w1")), b1=stack("b1"),
        w2=bf(stack_t("w2")), b2=stack("b2"),
        ln2_g=stack("ln2_g"), ln2_b=stack("ln2_b"),
        head_w=head_w, head_b=head_b,
    )


# ----------------------------------------------------------------------------
# Forward wrapper: one pallas_call, grid = (batch_tiles, layers)
# ----------------------------------------------------------------------------
def cognitive_transformer_forward(x, packed, num_heads):
    # TODO(synk): attention_mask / src_key_padding_mask path not implemented
    # (matches forward(x, attention_mask=None)); dropout omitted (eval mode).
    B, S, D = x.shape
    H = packed["in_w"].shape[1]
    L = packed["wq"].shape[0]
    nh = num_heads
    hd = H // nh
    F = packed["w1"].shape[2]
    pos = packed["pos"][:S]

    # Up to two "parallel" batch tiles: uses v7x's second TensorCore, no-op on
    # v5e/v6e (single TC).
    bB = B // 2 if (B % 2 == 0 and B >= 2) else B
    nb = B // bB

    batch_only = lambda shape: pl.BlockSpec(
        shape, lambda b, l: (b,) + (0,) * (len(shape) - 1))
    layer_only = lambda shape: pl.BlockSpec(
        shape, lambda b, l: (l,) + (0,) * (len(shape) - 1))
    const = lambda shape: pl.BlockSpec(shape, lambda b, l: (0,) * len(shape))

    kernel = functools.partial(fused_forward_kernel, num_heads=num_heads)

    hidden, pooled, heads = pl.pallas_call(
        kernel,
        grid=(nb, L),
        out_shape=(jax.ShapeDtypeStruct((B, S, H), jnp.float32),
                   jax.ShapeDtypeStruct((B, 1, H), jnp.float32),
                   jax.ShapeDtypeStruct((B, 1, 16), jnp.float32)),
        in_specs=[batch_only((bB, S, D)),
                  const((D, H)), const((1, H)), const((S, H)),
                  layer_only((1, nh, H, hd)), layer_only((1, nh, H, hd)),
                  layer_only((1, nh, H, hd)),
                  layer_only((1, nh, 1, hd)), layer_only((1, nh, 1, hd)),
                  layer_only((1, nh, 1, hd)),
                  layer_only((1, nh, hd, H)), layer_only((1, 1, H)),
                  layer_only((1, 1, H)), layer_only((1, 1, H)),
                  layer_only((1, H, F)), layer_only((1, 1, F)),
                  layer_only((1, F, H)), layer_only((1, 1, H)),
                  layer_only((1, 1, H)), layer_only((1, 1, H)),
                  const((H, 16)), const((1, 16))],
        out_specs=(batch_only((bB, S, H)),
                   batch_only((bB, 1, H)),
                   batch_only((bB, 1, 16))),
        scratch_shapes=[pltpu.VMEM((bB * S, H), jnp.float32)],
        compiler_params=pltpu.CompilerParams(
            dimension_semantics=("parallel", "arbitrary"),
            vmem_limit_bytes=32 * 1024 * 1024),
    )(x, packed["in_w"], packed["in_b"], pos,
      packed["wq"], packed["wk"], packed["wv"],
      packed["bq"], packed["bk"], packed["bv"],
      packed["wo"], packed["bo"],
      packed["ln1_g"], packed["ln1_b"],
      packed["w1"], packed["b1"], packed["w2"], packed["b2"],
      packed["ln2_g"], packed["ln2_b"],
      packed["head_w"], packed["head_b"])

    pooled = pooled[:, 0, :]
    heads = heads[:, 0, :]
    return {
        "cognitive_patterns": heads[:, 0:7],
        "cognitive_loads": heads[:, 7:14],
        "confidence": heads[:, 14:15],
        "hidden_states": hidden,
        "pooled_representation": pooled,
    }


if __name__ == "__main__":
    # Small shapes consistent with the module's forward.
    B, S = 2, 8
    input_dim, hidden_dim, num_heads, num_layers = 32, 64, 4, 2
    ffn_dim = hidden_dim * 4

    key = jax.random.PRNGKey(0)
    k_params, k_x = jax.random.split(key)
    params = init_params(k_params, input_dim, hidden_dim, num_heads,
                         num_layers, ffn_dim)
    packed = pack_params(params, num_heads)
    x = jax.random.normal(k_x, (B, S, input_dim), jnp.float32)

    out = cognitive_transformer_forward(x, packed, num_heads)
    out = jax.block_until_ready(out)

    assert out["cognitive_patterns"].shape == (B, 7)
    assert out["cognitive_loads"].shape == (B, 7)
    assert out["confidence"].shape == (B, 1)
    assert out["hidden_states"].shape == (B, S, hidden_dim)
    assert out["pooled_representation"].shape == (B, hidden_dim)
    assert bool(jnp.all(jnp.isfinite(out["hidden_states"])))
    assert bool(jnp.all(jnp.isfinite(out["cognitive_patterns"])))
    # softmax rows should now sum to ~1 exactly (no approx reciprocal)
    assert bool(jnp.allclose(jnp.sum(out["cognitive_patterns"], axis=-1), 1.0,
                             atol=1e-5))
    print("KERNEL_OK")
</pallas_src>

<mosaic_0001>
module attributes {stable_mosaic.version = 11 : i64} {
  func.func @fused_forward_kernel(%arg0: i32, %arg1: i32, %arg2: memref<1x8x32xf32, #tpu.memory_space<vmem>>, %arg3: memref<32x64xbf16, #tpu.memory_space<vmem>>, %arg4: memref<1x64xf32, #tpu.memory_space<vmem>>, %arg5: memref<8x64xf32, #tpu.memory_space<vmem>>, %arg6: memref<1x4x64x16xbf16, #tpu.memory_space<vmem>>, %arg7: memref<1x4x64x16xbf16, #tpu.memory_space<vmem>>, %arg8: memref<1x4x64x16xbf16, #tpu.memory_space<vmem>>, %arg9: memref<1x4x1x16xf32, #tpu.memory_space<vmem>>, %arg10: memref<1x4x1x16xf32, #tpu.memory_space<vmem>>, %arg11: memref<1x4x1x16xf32, #tpu.memory_space<vmem>>, %arg12: memref<1x4x16x64xbf16, #tpu.memory_space<vmem>>, %arg13: memref<1x1x64xf32, #tpu.memory_space<vmem>>, %arg14: memref<1x1x64xf32, #tpu.memory_space<vmem>>, %arg15: memref<1x1x64xf32, #tpu.memory_space<vmem>>, %arg16: memref<1x64x256xbf16, #tpu.memory_space<vmem>>, %arg17: memref<1x1x256xf32, #tpu.memory_space<vmem>>, %arg18: memref<1x256x64xbf16, #tpu.memory_space<vmem>>, %arg19: memref<1x1x64xf32, #tpu.memory_space<vmem>>, %arg20: memref<1x1x64xf32, #tpu.memory_space<vmem>>, %arg21: memref<1x1x64xf32, #tpu.memory_space<vmem>>, %arg22: memref<64x16xf32, #tpu.memory_space<vmem>>, %arg23: memref<1x16xf32, #tpu.memory_space<vmem>>, %arg24: memref<1x8x64xf32, #tpu.memory_space<vmem>>, %arg25: memref<1x1x64xf32, #tpu.memory_space<vmem>>, %arg26: memref<1x1x16xf32, #tpu.memory_space<vmem>>, %arg27: memref<8x64xf32, #tpu.memory_space<vmem>>) attributes {dimension_semantics = [#tpu.dimension_semantics<parallel>, #tpu.dimension_semantics<arbitrary>], iteration_bounds = array<i64: 2, 2>, scalar_prefetch = 0 : i64, scratch_operands = 1 : i64, tpu.core_type = #tpu.core_type<tc>, window_params = [{transform_indices = @transform_0, window_bounds = array<i64: 1, 8, 32>}, {pipeline_mode = #tpu.pipeline_mode<synchronous>, transform_indices = @transform_1, window_bounds = array<i64: 32, 64>}, {pipeline_mode = #tpu.pipeline_mode<synchronous>, transform_indices = @transform_2, window_bounds = array<i64: 1, 64>}, {pipeline_mode = #tpu.pipeline_mode<synchronous>, transform_indices = @transform_3, window_bounds = array<i64: 8, 64>}, {transform_indices = @transform_4, window_bounds = array<i64: 1, 4, 64, 16>}, {transform_indices = @transform_5, window_bounds = array<i64: 1, 4, 64, 16>}, {transform_indices = @transform_6, window_bounds = array<i64: 1, 4, 64, 16>}, {transform_indices = @transform_7, window_bounds = array<i64: 1, 4, 1, 16>}, {transform_indices = @transform_8, window_bounds = array<i64: 1, 4, 1, 16>}, {transform_indices = @transform_9, window_bounds = array<i64: 1, 4, 1, 16>}, {transform_indices = @transform_10, window_bounds = array<i64: 1, 4, 16, 64>}, {transform_indices = @transform_11, window_bounds = array<i64: 1, 1, 64>}, {transform_indices = @transform_12, window_bounds = array<i64: 1, 1, 64>}, {transform_indices = @transform_13, window_bounds = array<i64: 1, 1, 64>}, {transform_indices = @transform_14, window_bounds = array<i64: 1, 64, 256>}, {transform_indices = @transform_15, window_bounds = array<i64: 1, 1, 256>}, {transform_indices = @transform_16, window_bounds = array<i64: 1, 256, 64>}, {transform_indices = @transform_17, window_bounds = array<i64: 1, 1, 64>}, {transform_indices = @transform_18, window_bounds = array<i64: 1, 1, 64>}, {transform_indices = @transform_19, window_bounds = array<i64: 1, 1, 64>}, {pipeline_mode = #tpu.pipeline_mode<synchronous>, transform_indices = @transform_20, window_bounds = array<i64: 64, 16>}, {pipeline_mode = #tpu.pipeline_mode<synchronous>, transform_indices = @transform_21, window_bounds = array<i64: 1, 16>}, {transform_indices = @transform_22, window_bounds = array<i64: 1, 8, 64>}, {transform_indices = @transform_23, window_bounds = array<i64: 1, 1, 64>}, {transform_indices = @transform_24, window_bounds = array<i64: 1, 1, 16>}]} {
    %c0_i32 = arith.constant 0 : i32
    %0 = arith.cmpi eq, %arg1, %c0_i32 : i32
    %1 = arith.extui %0 : i1 to i32
    %c0_i32_0 = arith.constant 0 : i32
    %2 = arith.cmpi ne, %1, %c0_i32_0 : i32
    scf.if %2 {
      %c0_190 = arith.constant 0 : index
      %c0_191 = arith.constant 0 : index
      %c0_192 = arith.constant 0 : index
      %274 = vector.load %arg2[%c0_190, %c0_191, %c0_192] : memref<1x8x32xf32, #tpu.memory_space<vmem>>, vector<1x8x32xf32>
      %275 = vector.shape_cast %274 : vector<1x8x32xf32> to vector<8x32xf32>
      %276 = arith.truncf %275 : vector<8x32xf32> to vector<8x32xbf16>
      %c0_193 = arith.constant 0 : index
      %c0_194 = arith.constant 0 : index
      %277 = vector.load %arg3[%c0_193, %c0_194] : memref<32x64xbf16, #tpu.memory_space<vmem>>, vector<32x64xbf16>
      %cst_195 = arith.constant dense<0.000000e+00> : vector<8x64xf32>
      %278 = tpu.matmul %276, %277, %cst_195 {dimension_numbers = #tpu.dot_dimension_numbers<[1], [0], [0], [1], [0, 0, 1, 1], [], []>} : vector<8x32xbf16>, vector<32x64xbf16>, vector<8x64xf32> -> vector<8x64xf32>
      %c0_196 = arith.constant 0 : index
      %c0_197 = arith.constant 0 : index
      %279 = vector.load %arg4[%c0_196, %c0_197] : memref<1x64xf32, #tpu.memory_space<vmem>>, vector<1x64xf32>
      %280 = vector.broadcast %279 : vector<1x64xf32> to vector<8x64xf32>
      %281 = arith.addf %278, %280 : vector<8x64xf32>
      %282 = vector.shape_cast %281 : vector<8x64xf32> to vector<1x8x64xf32>
      %c0_198 = arith.constant 0 : index
      %c0_199 = arith.constant 0 : index
      %283 = vector.load %arg5[%c0_198, %c0_199] : memref<8x64xf32, #tpu.memory_space<vmem>>, vector<8x64xf32>
      %284 = vector.shape_cast %283 : vector<8x64xf32> to vector<1x8x64xf32>
      %285 = arith.addf %282, %284 : vector<1x8x64xf32>
      %286 = vector.shape_cast %285 : vector<1x8x64xf32> to vector<8x64xf32>
      %c0_200 = arith.constant 0 : index
      %c0_201 = arith.constant 0 : index
      %287 = vector.load %arg27[%c0_200, %c0_201] : memref<8x64xf32, #tpu.memory_space<vmem>>, vector<8x64xf32>
      tpu.vector_store %arg27[%c0_200, %c0_201], %286 {strides = array<i32>} : memref<8x64xf32, #tpu.memory_space<vmem>>, vector<8x64xf32>,
    } else {
    }
    %c0 = arith.constant 0 : index
    %c0_1 = arith.constant 0 : index
    %3 = vector.load %arg27[%c0, %c0_1] : memref<8x64xf32, #tpu.memory_space<vmem>>, vector<8x64xf32>
    %4 = arith.truncf %3 : vector<8x64xf32> to vector<8x64xbf16>
    %cst = arith.constant 0.000000e+00 : f32
    %5 = vector.broadcast %cst : f32 to vector<8x64xf32>
    %c0_2 = arith.constant 0 : index
    %c0_3 = arith.constant 0 : index
    %c0_4 = arith.constant 0 : index
    %c0_5 = arith.constant 0 : index
    %6 = vector.load %arg6[%c0_2, %c0_3, %c0_4, %c0_5] : memref<1x4x64x16xbf16, #tpu.memory_space<vmem>>, vector<1x1x64x16xbf16>
    %7 = vector.shape_cast %6 : vector<1x1x64x16xbf16> to vector<64x16xbf16>
    %cst_6 = arith.constant dense<0.000000e+00> : vector<8x16xf32>
    %8 = tpu.matmul %4, %7, %cst_6 {dimension_numbers = #tpu.dot_dimension_numbers<[1], [0], [0], [1], [0, 0, 1, 1], [], []>} : vector<8x64xbf16>, vector<64x16xbf16>, vector<8x16xf32> -> vector<8x16xf32>
    %c0_7 = arith.constant 0 : index
    %c0_8 = arith.constant 0 : index
    %c0_9 = arith.constant 0 : index
    %c0_10 = arith.constant 0 : index
    %9 = vector.load %arg9[%c0_7, %c0_8, %c0_9, %c0_10] : memref<1x4x1x16xf32, #tpu.memory_space<vmem>>, vector<1x1x1x16xf32>
    %10 = vector.shape_cast %9 : vector<1x1x1x16xf32> to vector<1x16xf32>
    %11 = vector.broadcast %10 : vector<1x16xf32> to vector<8x16xf32>
    %12 = arith.addf %8, %11 : vector<8x16xf32>
    %c0_11 = arith.constant 0 : index
    %c0_12 = arith.constant 0 : index
    %c0_13 = arith.constant 0 : index
    %c0_14 = arith.constant 0 : index
    %13 = vector.load %arg7[%c0_11, %c0_12, %c0_13, %c0_14] : memref<1x4x64x16xbf16, #tpu.memory_space<vmem>>, vector<1x1x64x16xbf16>
    %14 = vector.shape_cast %13 : vector<1x1x64x16xbf16> to vector<64x16xbf16>
    %cst_15 = arith.constant dense<0.000000e+00> : vector<8x16xf32>
    %15 = tpu.matmul %4, %14, %cst_15 {dimension_numbers = #tpu.dot_dimension_numbers<[1], [0], [0], [1], [0, 0, 1, 1], [], []>} : vector<8x64xbf16>, vector<64x16xbf16>, vector<8x16xf32> -> vector<8x16xf32>
    %c0_16 = arith.constant 0 : index
    %c0_17 = arith.constant 0 : index
    %c0_18 = arith.constant 0 : index
    %c0_19 = arith.constant 0 : index
    %16 = vector.load %arg10[%c0_16, %c0_17, %c0_18, %c0_19] : memref<1x4x1x16xf32, #tpu.memory_space<vmem>>, vector<1x1x1x16xf32>
    %17 = vector.shape_cast %16 : vector<1x1x1x16xf32> to vector<1x16xf32>
    %18 = vector.broadcast %17 : vector<1x16xf32> to vector<8x16xf32>
    %19 = arith.addf %15, %18 : vector<8x16xf32>
    %c0_20 = arith.constant 0 : index
    %c0_21 = arith.constant 0 : index
    %c0_22 = arith.constant 0 : index
    %c0_23 = arith.constant 0 : index
    %20 = vector.load %arg8[%c0_20, %c0_21, %c0_22, %c0_23] : memref<1x4x64x16xbf16, #tpu.memory_space<vmem>>, vector<1x1x64x16xbf16>
    %21 = vector.shape_cast %20 : vector<1x1x64x16xbf16> to vector<64x16xbf16>
    %cst_24 = arith.constant dense<0.000000e+00> : vector<8x16xf32>
    %22 = tpu.matmul %4, %21, %cst_24 {dimension_numbers = #tpu.dot_dimension_numbers<[1], [0], [0], [1], [0, 0, 1, 1], [], []>} : vector<8x64xbf16>, vector<64x16xbf16>, vector<8x16xf32> -> vector<8x16xf32>
    %c0_25 = arith.constant 0 : index
    %c0_26 = arith.constant 0 : index
    %c0_27 = arith.constant 0 : index
    %c0_28 = arith.constant 0 : index
    %23 = vector.load %arg11[%c0_25, %c0_26, %c0_27, %c0_28] : memref<1x4x1x16xf32, #tpu.memory_space<vmem>>, vector<1x1x1x16xf32>
    %24 = vector.shape_cast %23 : vector<1x1x1x16xf32> to vector<1x16xf32>
    %25 = vector.broadcast %24 : vector<1x16xf32> to vector<8x16xf32>
    %26 = arith.addf %22, %25 : vector<8x16xf32>
    %27 = vector.shape_cast %12 : vector<8x16xf32> to vector<1x8x16xf32>
    %28 = arith.truncf %27 : vector<1x8x16xf32> to vector<1x8x16xbf16>
    %29 = vector.shape_cast %19 : vector<8x16xf32> to vector<1x8x16xf32>
    %30 = arith.truncf %29 : vector<1x8x16xf32> to vector<1x8x16xbf16>
    %31 = vector.shape_cast %26 : vector<8x16xf32> to vector<1x8x16xf32>
    %32 = arith.truncf %31 : vector<1x8x16xf32> to vector<1x8x16xbf16>
    "tpu.trace_start"() <{level = 10 : i32, message = "bqd,bkd->bqk"}> : () -> ()
    %cst_29 = arith.constant dense<0.000000e+00> : vector<1x8x8xf32>
    %33 = tpu.matmul %28, %30, %cst_29 {dimension_numbers = #tpu.dot_dimension_numbers<[2], [2], [1], [1], [0, 0, 0, 1, 1, 1], [0], [0]>} : vector<1x8x16xbf16>, vector<1x8x16xbf16>, vector<1x8x8xf32> -> vector<1x8x8xf32>
    "tpu.trace_stop"() : () -> ()
    %cst_30 = arith.constant 2.500000e-01 : f32
    %34 = vector.broadcast %cst_30 : f32 to vector<1x8x8xf32>
    %35 = arith.mulf %33, %34 : vector<1x8x8xf32>
    %cst_31 = arith.constant dense<0xFF800000> : vector<1x8xf32>
    %36 = vector.multi_reduction <maximumf>, %35, %cst_31 [2] : vector<1x8x8xf32> to vector<1x8xf32>
    %37 = vector.shape_cast %36 : vector<1x8xf32> to vector<1x8x1xf32>
    %38 = vector.broadcast %37 : vector<1x8x1xf32> to vector<1x8x8xf32>
    %39 = arith.subf %35, %38 : vector<1x8x8xf32>
    %40 = math.exp %39 : vector<1x8x8xf32>
    %cst_32 = arith.constant dense<0.000000e+00> : vector<1x8xf32>
    %41 = vector.multi_reduction <add>, %40, %cst_32 [2] : vector<1x8x8xf32> to vector<1x8xf32>
    %42 = vector.shape_cast %41 : vector<1x8xf32> to vector<1x8x1xf32>
    %43 = vector.broadcast %42 : vector<1x8x1xf32> to vector<1x8x8xf32>
    %44 = arith.divf %40, %43 : vector<1x8x8xf32>
    %45 = arith.truncf %44 : vector<1x8x8xf32> to vector<1x8x8xbf16>
    "tpu.trace_start"() <{level = 10 : i32, message = "bqk,bkd->bqd"}> : () -> ()
    %cst_33 = arith.constant dense<0.000000e+00> : vector<1x8x16xf32>
    %46 = tpu.matmul %45, %32, %cst_33 {dimension_numbers = #tpu.dot_dimension_numbers<[2], [1], [1], [2], [0, 0, 0, 1, 1, 2], [0], [0]>} : vector<1x8x8xbf16>, vector<1x8x16xbf16>, vector<1x8x16xf32> -> vector<1x8x16xf32>
    "tpu.trace_stop"() : () -> ()
    %47 = vector.shape_cast %46 : vector<1x8x16xf32> to vector<8x16xf32>
    %48 = arith.truncf %47 : vector<8x16xf32> to vector<8x16xbf16>
    %c0_34 = arith.constant 0 : index
    %c0_35 = arith.constant 0 : index
    %c0_36 = arith.constant 0 : index
    %c0_37 = arith.constant 0 : index
    %49 = vector.load %arg12[%c0_34, %c0_35, %c0_36, %c0_37] : memref<1x4x16x64xbf16, #tpu.memory_space<vmem>>, vector<1x1x16x64xbf16>
    %50 = vector.shape_cast %49 : vector<1x1x16x64xbf16> to vector<16x64xbf16>
    %cst_38 = arith.constant dense<0.000000e+00> : vector<8x64xf32>
    %51 = tpu.matmul %48, %50, %cst_38 {dimension_numbers = #tpu.dot_dimension_numbers<[1], [0], [0], [1], [0, 0, 1, 1], [], []>} : vector<8x16xbf16>, vector<16x64xbf16>, vector<8x64xf32> -> vector<8x64xf32>
    %52 = arith.addf %5, %51 : vector<8x64xf32>
    %c0_39 = arith.constant 0 : index
    %c1 = arith.constant 1 : index
    %c0_40 = arith.constant 0 : index
    %c0_41 = arith.constant 0 : index
    %53 = vector.load %arg6[%c0_39, %c1, %c0_40, %c0_41] : memref<1x4x64x16xbf16, #tpu.memory_space<vmem>>, vector<1x1x64x16xbf16>
    %54 = vector.shape_cast %53 : vector<1x1x64x16xbf16> to vector<64x16xbf16>
    %cst_42 = arith.constant dense<0.000000e+00> : vector<8x16xf32>
    %55 = tpu.matmul %4, %54, %cst_42 {dimension_numbers = #tpu.dot_dimension_numbers<[1], [0], [0], [1], [0, 0, 1, 1], [], []>} : vector<8x64xbf16>, vector<64x16xbf16>, vector<8x16xf32> -> vector<8x16xf32>
    %c0_43 = arith.constant 0 : index
    %c1_44 = arith.constant 1 : index
    %c0_45 = arith.constant 0 : index
    %c0_46 = arith.constant 0 : index
    %56 = vector.load %arg9[%c0_43, %c1_44, %c0_45, %c0_46] : memref<1x4x1x16xf32, #tpu.memory_space<vmem>>, vector<1x1x1x16xf32>
    %57 = vector.shape_cast %56 : vector<1x1x1x16xf32> to vector<1x16xf32>
    %58 = vector.broadcast %57 : vector<1x16xf32> to vector<8x16xf32>
    %59 = arith.addf %55, %58 : vector<8x16xf32>
    %c0_47 = arith.constant 0 : index
    %c1_48 = arith.constant 1 : index
    %c0_49 = arith.constant 0 : index
    %c0_50 = arith.constant 0 : index
    %60 = vector.load %arg7[%c0_47, %c1_48, %c0_49, %c0_50] : memref<1x4x64x16xbf16, #tpu.memory_space<vmem>>, vector<1x1x64x16xbf16>
    %61 = vector.shape_cast %60 : vector<1x1x64x16xbf16> to vector<64x16xbf16>
    %cst_51 = arith.constant dense<0.000000e+00> : vector<8x16xf32>
    %62 = tpu.matmul %4, %61, %cst_51 {dimension_numbers = #tpu.dot_dimension_numbers<[1], [0], [0], [1], [0, 0, 1, 1], [], []>} : vector<8x64xbf16>, vector<64x16xbf16>, vector<8x16xf32> -> vector<8x16xf32>
    %c0_52 = arith.constant 0 : index
    %c1_53 = arith.constant 1 : index
    %c0_54 = arith.constant 0 : index
    %c0_55 = arith.constant 0 : index
    %63 = vector.load %arg10[%c0_52, %c1_53, %c0_54, %c0_55] : memref<1x4x1x16xf32, #tpu.memory_space<vmem>>, vector<1x1x1x16xf32>
    %64 = vector.shape_cast %63 : vector<1x1x1x16xf32> to vector<1x16xf32>
    %65 = vector.broadcast %64 : vector<1x16xf32> to vector<8x16xf32>
    %66 = arith.addf %62, %65 : vector<8x16xf32>
    %c0_56 = arith.constant 0 : index
    %c1_57 = arith.constant 1 : index
    %c0_58 = arith.constant 0 : index
    %c0_59 = arith.constant 0 : index
    %67 = vector.load %arg8[%c0_56, %c1_57, %c0_58, %c0_59] : memref<1x4x64x16xbf16, #tpu.memory_space<vmem>>, vector<1x1x64x16xbf16>
    %68 = vector.shape_cast %67 : vector<1x1x64x16xbf16> to vector<64x16xbf16>
    %cst_60 = arith.constant dense<0.000000e+00> : vector<8x16xf32>
    %69 = tpu.matmul %4, %68, %cst_60 {dimension_numbers = #tpu.dot_dimension_numbers<[1], [0], [0], [1], [0, 0, 1, 1], [], []>} : vector<8x64xbf16>, vector<64x16xbf16>, vector<8x16xf32> -> vector<8x16xf32>
    %c0_61 = arith.constant 0 : index
    %c1_62 = arith.constant 1 : index
    %c0_63 = arith.constant 0 : index
    %c0_64 = arith.constant 0 : index
    %70 = vector.load %arg11[%c0_61, %c1_62, %c0_63, %c0_64] : memref<1x4x1x16xf32, #tpu.memory_space<vmem>>, vector<1x1x1x16xf32>
    %71 = vector.shape_cast %70 : vector<1x1x1x16xf32> to vector<1x16xf32>
    %72 = vector.broadcast %71 : vector<1x16xf32> to vector<8x16xf32>
    %73 = arith.addf %69, %72 : vector<8x16xf32>
    %74 = vector.shape_cast %59 : vector<8x16xf32> to vector<1x8x16xf32>
    %75 = arith.truncf %74 : vector<1x8x16xf32> to vector<1x8x16xbf16>
    %76 = vector.shape_cast %66 : vector<8x16xf32> to vector<1x8x16xf32>
    %77 = arith.truncf %76 : vector<1x8x16xf32> to vector<1x8x16xbf16>
    %78 = vector.shape_cast %73 : vector<8x16xf32> to vector<1x8x16xf32>
    %79 = arith.truncf %78 : vector<1x8x16xf32> to vector<1x8x16xbf16>
    "tpu.trace_start"() <{level = 10 : i32, message = "bqd,bkd->bqk"}> : () -> ()
    %cst_65 = arith.constant dense<0.000000e+00> : vector<1x8x8xf32>
    %80 = tpu.matmul %75, %77, %cst_65 {dimension_numbers = #tpu.dot_dimension_numbers<[2], [2], [1], [1], [0, 0, 0, 1, 1, 1], [0], [0]>} : vector<1x8x16xbf16>, vector<1x8x16xbf16>, vector<1x8x8xf32> -> vector<1x8x8xf32>
    "tpu.trace_stop"() : () -> ()
    %cst_66 = arith.constant 2.500000e-01 : f32
    %81 = vector.broadcast %cst_66 : f32 to vector<1x8x8xf32>
    %82 = arith.mulf %80, %81 : vector<1x8x8xf32>
    %cst_67 = arith.constant dense<0xFF800000> : vector<1x8xf32>
    %83 = vector.multi_reduction <maximumf>, %82, %cst_67 [2] : vector<1x8x8xf32> to vector<1x8xf32>
    %84 = vector.shape_cast %83 : vector<1x8xf32> to vector<1x8x1xf32>
    %85 = vector.broadcast %84 : vector<1x8x1xf32> to vector<1x8x8xf32>
    %86 = arith.subf %82, %85 : vector<1x8x8xf32>
    %87 = math.exp %86 : vector<1x8x8xf32>
    %cst_68 = arith.constant dense<0.000000e+00> : vector<1x8xf32>
    %88 = vector.multi_reduction <add>, %87, %cst_68 [2] : vector<1x8x8xf32> to vector<1x8xf32>
    %89 = vector.shape_cast %88 : vector<1x8xf32> to vector<1x8x1xf32>
    %90 = vector.broadcast %89 : vector<1x8x1xf32> to vector<1x8x8xf32>
    %91 = arith.divf %87, %90 : vector<1x8x8xf32>
    %92 = arith.truncf %91 : vector<1x8x8xf32> to vector<1x8x8xbf16>
    "tpu.trace_start"() <{level = 10 : i32, message = "bqk,bkd->bqd"}> : () -> ()
    %cst_69 = arith.constant dense<0.000000e+00> : vector<1x8x16xf32>
    %93 = tpu.matmul %92, %79, %cst_69 {dimension_numbers = #tpu.dot_dimension_numbers<[2], [1], [1], [2], [0, 0, 0, 1, 1, 2], [0], [0]>} : vector<1x8x8xbf16>, vector<1x8x16xbf16>, vector<1x8x16xf32> -> vector<1x8x16xf32>
    "tpu.trace_stop"() : () -> ()
    %94 = vector.shape_cast %93 : vector<1x8x16xf32> to vector<8x16xf32>
    %95 = arith.truncf %94 : vector<8x16xf32> to vector<8x16xbf16>
    %c0_70 = arith.constant 0 : index
    %c1_71 = arith.constant 1 : index
    %c0_72 = arith.constant 0 : index
    %c0_73 = arith.constant 0 : index
    %96 = vector.load %arg12[%c0_70, %c1_71, %c0_72, %c0_73] : memref<1x4x16x64xbf16, #tpu.memory_space<vmem>>, vector<1x1x16x64xbf16>
    %97 = vector.shape_cast %96 : vector<1x1x16x64xbf16> to vector<16x64xbf16>
    %cst_74 = arith.constant dense<0.000000e+00> : vector<8x64xf32>
    %98 = tpu.matmul %95, %97, %cst_74 {dimension_numbers = #tpu.dot_dimension_numbers<[1], [0], [0], [1], [0, 0, 1, 1], [], []>} : vector<8x16xbf16>, vector<16x64xbf16>, vector<8x64xf32> -> vector<8x64xf32>
    %99 = arith.addf %52, %98 : vector<8x64xf32>
    %c0_75 = arith.constant 0 : index
    %c2 = arith.constant 2 : index
    %c0_76 = arith.constant 0 : index
    %c0_77 = arith.constant 0 : index
    %100 = vector.load %arg6[%c0_75, %c2, %c0_76, %c0_77] : memref<1x4x64x16xbf16, #tpu.memory_space<vmem>>, vector<1x1x64x16xbf16>
    %101 = vector.shape_cast %100 : vector<1x1x64x16xbf16> to vector<64x16xbf16>
    %cst_78 = arith.constant dense<0.000000e+00> : vector<8x16xf32>
    %102 = tpu.matmul %4, %101, %cst_78 {dimension_numbers = #tpu.dot_dimension_numbers<[1], [0], [0], [1], [0, 0, 1, 1], [], []>} : vector<8x64xbf16>, vector<64x16xbf16>, vector<8x16xf32> -> vector<8x16xf32>
    %c0_79 = arith.constant 0 : index
    %c2_80 = arith.constant 2 : index
    %c0_81 = arith.constant 0 : index
    %c0_82 = arith.constant 0 : index
    %103 = vector.load %arg9[%c0_79, %c2_80, %c0_81, %c0_82] : memref<1x4x1x16xf32, #tpu.memory_space<vmem>>, vector<1x1x1x16xf32>
    %104 = vector.shape_cast %103 : vector<1x1x1x16xf32> to vector<1x16xf32>
    %105 = vector.broadcast %104 : vector<1x16xf32> to vector<8x16xf32>
    %106 = arith.addf %102, %105 : vector<8x16xf32>
    %c0_83 = arith.constant 0 : index
    %c2_84 = arith.constant 2 : index
    %c0_85 = arith.constant 0 : index
    %c0_86 = arith.constant 0 : index
    %107 = vector.load %arg7[%c0_83, %c2_84, %c0_85, %c0_86] : memref<1x4x64x16xbf16, #tpu.memory_space<vmem>>, vector<1x1x64x16xbf16>
    %108 = vector.shape_cast %107 : vector<1x1x64x16xbf16> to vector<64x16xbf16>
    %cst_87 = arith.constant dense<0.000000e+00> : vector<8x16xf32>
    %109 = tpu.matmul %4, %108, %cst_87 {dimension_numbers = #tpu.dot_dimension_numbers<[1], [0], [0], [1], [0, 0, 1, 1], [], []>} : vector<8x64xbf16>, vector<64x16xbf16>, vector<8x16xf32> -> vector<8x16xf32>
    %c0_88 = arith.constant 0 : index
    %c2_89 = arith.constant 2 : index
    %c0_90 = arith.constant 0 : index
    %c0_91 = arith.constant 0 : index
    %110 = vector.load %arg10[%c0_88, %c2_89, %c0_90, %c0_91] : memref<1x4x1x16xf32, #tpu.memory_space<vmem>>, vector<1x1x1x16xf32>
    %111 = vector.shape_cast %110 : vector<1x1x1x16xf32> to vector<1x16xf32>
    %112 = vector.broadcast %111 : vector<1x16xf32> to vector<8x16xf32>
    %113 = arith.addf %109, %112 : vector<8x16xf32>
    %c0_92 = arith.constant 0 : index
    %c2_93 = arith.constant 2 : index
    %c0_94 = arith.constant 0 : index
    %c0_95 = arith.constant 0 : index
    %114 = vector.load %arg8[%c0_92, %c2_93, %c0_94, %c0_95] : memref<1x4x64x16xbf16, #tpu.memory_space<vmem>>, vector<1x1x64x16xbf16>
    %115 = vector.shape_cast %114 : vector<1x1x64x16xbf16> to vector<64x16xbf16>
    %cst_96 = arith.constant dense<0.000000e+00> : vector<8x16xf32>
    %116 = tpu.matmul %4, %115, %cst_96 {dimension_numbers = #tpu.dot_dimension_numbers<[1], [0], [0], [1], [0, 0, 1, 1], [], []>} : vector<8x64xbf16>, vector<64x16xbf16>, vector<8x16xf32> -> vector<8x16xf32>
    %c0_97 = arith.constant 0 : index
    %c2_98 = arith.constant 2 : index
    %c0_99 = arith.constant 0 : index
    %c0_100 = arith.constant 0 : index
    %117 = vector.load %arg11[%c0_97, %c2_98, %c0_99, %c0_100] : memref<1x4x1x16xf32, #tpu.memory_space<vmem>>, vector<1x1x1x16xf32>
    %118 = vector.shape_cast %117 : vector<1x1x1x16xf32> to vector<1x16xf32>
    %119 = vector.broadcast %118 : vector<1x16xf32> to vector<8x16xf32>
    %120 = arith.addf %116, %119 : vector<8x16xf32>
    %121 = vector.shape_cast %106 : vector<8x16xf32> to vector<1x8x16xf32>
    %122 = arith.truncf %121 : vector<1x8x16xf32> to vector<1x8x16xbf16>
    %123 = vector.shape_cast %113 : vector<8x16xf32> to vector<1x8x16xf32>
    %124 = arith.truncf %123 : vector<1x8x16xf32> to vector<1x8x16xbf16>
    %125 = vector.shape_cast %120 : vector<8x16xf32> to vector<1x8x16xf32>
    %126 = arith.truncf %125 : vector<1x8x16xf32> to vector<1x8x16xbf16>
    "tpu.trace_start"() <{level = 10 : i32, message = "bqd,bkd->bqk"}> : () -> ()
    %cst_101 = arith.constant dense<0.000000e+00> : vector<1x8x8xf32>
    %127 = tpu.matmul %122, %124, %cst_101 {dimension_numbers = #tpu.dot_dimension_numbers<[2], [2], [1], [1], [0, 0, 0, 1, 1, 1], [0], [0]>} : vector<1x8x16xbf16>, vector<1x8x16xbf16>, vector<1x8x8xf32> -> vector<1x8x8xf32>
    "tpu.trace_stop"() : () -> ()
    %cst_102 = arith.constant 2.500000e-01 : f32
    %128 = vector.broadcast %cst_102 : f32 to vector<1x8x8xf32>
    %129 = arith.mulf %127, %128 : vector<1x8x8xf32>
    %cst_103 = arith.constant dense<0xFF800000> : vector<1x8xf32>
    %130 = vector.multi_reduction <maximumf>, %129, %cst_103 [2] : vector<1x8x8xf32> to vector<1x8xf32>
    %131 = vector.shape_cast %130 : vector<1x8xf32> to vector<1x8x1xf32>
    %132 = vector.broadcast %131 : vector<1x8x1xf32> to vector<1x8x8xf32>
    %133 = arith.subf %129, %132 : vector<1x8x8xf32>
    %134 = math.exp %133 : vector<1x8x8xf32>
    %cst_104 = arith.constant dense<0.000000e+00> : vector<1x8xf32>
    %135 = vector.multi_reduction <add>, %134, %cst_104 [2] : vector<1x8x8xf32> to vector<1x8xf32>
    %136 = vector.shape_cast %135 : vector<1x8xf32> to vector<1x8x1xf32>
    %137 = vector.broadcast %136 : vector<1x8x1xf32> to vector<1x8x8xf32>
    %138 = arith.divf %134, %137 : vector<1x8x8xf32>
    %139 = arith.truncf %138 : vector<1x8x8xf32> to vector<1x8x8xbf16>
    "tpu.trace_start"() <{level = 10 : i32, message = "bqk,bkd->bqd"}> : () -> ()
    %cst_105 = arith.constant dense<0.000000e+00> : vector<1x8x16xf32>
    %140 = tpu.matmul %139, %126, %cst_105 {dimension_numbers = #tpu.dot_dimension_numbers<[2], [1], [1], [2], [0, 0, 0, 1, 1, 2], [0], [0]>} : vector<1x8x8xbf16>, vector<1x8x16xbf16>, vector<1x8x16xf32> -> vector<1x8x16xf32>
    "tpu.trace_stop"() : () -> ()
    %141 = vector.shape_cast %140 : vector<1x8x16xf32> to vector<8x16xf32>
    %142 = arith.truncf %141 : vector<8x16xf32> to vector<8x16xbf16>
    %c0_106 = arith.constant 0 : index
    %c2_107 = arith.constant 2 : index
    %c0_108 = arith.constant 0 : index
    %c0_109 = arith.constant 0 : index
    %143 = vector.load %arg12[%c0_106, %c2_107, %c0_108, %c0_109] : memref<1x4x16x64xbf16, #tpu.memory_space<vmem>>, vector<1x1x16x64xbf16>
    %144 = vector.shape_cast %143 : vector<1x1x16x64xbf16> to vector<16x64xbf16>
    %cst_110 = arith.constant dense<0.000000e+00> : vector<8x64xf32>
    %145 = tpu.matmul %142, %144, %cst_110 {dimension_numbers = #tpu.dot_dimension_numbers<[1], [0], [0], [1], [0, 0, 1, 1], [], []>} : vector<8x16xbf16>, vector<16x64xbf16>, vector<8x64xf32> -> vector<8x64xf32>
    %146 = arith.addf %99, %145 : vector<8x64xf32>
    %c0_111 = arith.constant 0 : index
    %c3 = arith.constant 3 : index
    %c0_112 = arith.constant 0 : index
    %c0_113 = arith.constant 0 : index
    %147 = vector.load %arg6[%c0_111, %c3, %c0_112, %c0_113] : memref<1x4x64x16xbf16, #tpu.memory_space<vmem>>, vector<1x1x64x16xbf16>
    %148 = vector.shape_cast %147 : vector<1x1x64x16xbf16> to vector<64x16xbf16>
    %cst_114 = arith.constant dense<0.000000e+00> : vector<8x16xf32>
    %149 = tpu.matmul %4, %148, %cst_114 {dimension_numbers = #tpu.dot_dimension_numbers<[1], [0], [0], [1], [0, 0, 1, 1], [], []>} : vector<8x64xbf16>, vector<64x16xbf16>, vector<8x16xf32> -> vector<8x16xf32>
    %c0_115 = arith.constant 0 : index
    %c3_116 = arith.constant 3 : index
    %c0_117 = arith.constant 0 : index
    %c0_118 = arith.constant 0 : index
    %150 = vector.load %arg9[%c0_115, %c3_116, %c0_117, %c0_118] : memref<1x4x1x16xf32, #tpu.memory_space<vmem>>, vector<1x1x1x16xf32>
    %151 = vector.shape_cast %150 : vector<1x1x1x16xf32> to vector<1x16xf32>
    %152 = vector.broadcast %151 : vector<1x16xf32> to vector<8x16xf32>
    %153 = arith.addf %149, %152 : vector<8x16xf32>
    %c0_119 = arith.constant 0 : index
    %c3_120 = arith.constant 3 : index
    %c0_121 = arith.constant 0 : index
    %c0_122 = arith.constant 0 : index
    %154 = vector.load %arg7[%c0_119, %c3_120, %c0_121, %c0_122] : memref<1x4x64x16xbf16, #tpu.memory_space<vmem>>, vector<1x1x64x16xbf16>
    %155 = vector.shape_cast %154 : vector<1x1x64x16xbf16> to vector<64x16xbf16>
    %cst_123 = arith.constant dense<0.000000e+00> : vector<8x16xf32>
    %156 = tpu.matmul %4, %155, %cst_123 {dimension_numbers = #tpu.dot_dimension_numbers<[1], [0], [0], [1], [0, 0, 1, 1], [], []>} : vector<8x64xbf16>, vector<64x16xbf16>, vector<8x16xf32> -> vector<8x16xf32>
    %c0_124 = arith.constant 0 : index
    %c3_125 = arith.constant 3 : index
    %c0_126 = arith.constant 0 : index
    %c0_127 = arith.constant 0 : index
    %157 = vector.load %arg10[%c0_124, %c3_125, %c0_126, %c0_127] : memref<1x4x1x16xf32, #tpu.memory_space<vmem>>, vector<1x1x1x16xf32>
    %158 = vector.shape_cast %157 : vector<1x1x1x16xf32> to vector<1x16xf32>
    %159 = vector.broadcast %158 : vector<1x16xf32> to vector<8x16xf32>
    %160 = arith.addf %156, %159 : vector<8x16xf32>
    %c0_128 = arith.constant 0 : index
    %c3_129 = arith.constant 3 : index
    %c0_130 = arith.constant 0 : index
    %c0_131 = arith.constant 0 : index
    %161 = vector.load %arg8[%c0_128, %c3_129, %c0_130, %c0_131] : memref<1x4x64x16xbf16, #tpu.memory_space<vmem>>, vector<1x1x64x16xbf16>
    %162 = vector.shape_cast %161 : vector<1x1x64x16xbf16> to vector<64x16xbf16>
    %cst_132 = arith.constant dense<0.000000e+00> : vector<8x16xf32>
    %163 = tpu.matmul %4, %162, %cst_132 {dimension_numbers = #tpu.dot_dimension_numbers<[1], [0], [0], [1], [0, 0, 1, 1], [], []>} : vector<8x64xbf16>, vector<64x16xbf16>, vector<8x16xf32> -> vector<8x16xf32>
    %c0_133 = arith.constant 0 : index
    %c3_134 = arith.constant 3 : index
    %c0_135 = arith.constant 0 : index
    %c0_136 = arith.constant 0 : index
    %164 = vector.load %arg11[%c0_133, %c3_134, %c0_135, %c0_136] : memref<1x4x1x16xf32, #tpu.memory_space<vmem>>, vector<1x1x1x16xf32>
    %165 = vector.shape_cast %164 : vector<1x1x1x16xf32> to vector<1x16xf32>
    %166 = vector.broadcast %165 : vector<1x16xf32> to vector<8x16xf32>
    %167 = arith.addf %163, %166 : vector<8x16xf32>
    %168 = vector.shape_cast %153 : vector<8x16xf32> to vector<1x8x16xf32>
    %169 = arith.truncf %168 : vector<1x8x16xf32> to vector<1x8x16xbf16>
    %170 = vector.shape_cast %160 : vector<8x16xf32> to vector<1x8x16xf32>
    %171 = arith.truncf %170 : vector<1x8x16xf32> to vector<1x8x16xbf16>
    %172 = vector.shape_cast %167 : vector<8x16xf32> to vector<1x8x16xf32>
    %173 = arith.truncf %172 : vector<1x8x16xf32> to vector<1x8x16xbf16>
    "tpu.trace_start"() <{level = 10 : i32, message = "bqd,bkd->bqk"}> : () -> ()
    %cst_137 = arith.constant dense<0.000000e+00> : vector<1x8x8xf32>
    %174 = tpu.matmul %169, %171, %cst_137 {dimension_numbers = #tpu.dot_dimension_numbers<[2], [2], [1], [1], [0, 0, 0, 1, 1, 1], [0], [0]>} : vector<1x8x16xbf16>, vector<1x8x16xbf16>, vector<1x8x8xf32> -> vector<1x8x8xf32>
    "tpu.trace_stop"() : () -> ()
    %cst_138 = arith.constant 2.500000e-01 : f32
    %175 = vector.broadcast %cst_138 : f32 to vector<1x8x8xf32>
    %176 = arith.mulf %174, %175 : vector<1x8x8xf32>
    %cst_139 = arith.constant dense<0xFF800000> : vector<1x8xf32>
    %177 = vector.multi_reduction <maximumf>, %176, %cst_139 [2] : vector<1x8x8xf32> to vector<1x8xf32>
    %178 = vector.shape_cast %177 : vector<1x8xf32> to vector<1x8x1xf32>
    %179 = vector.broadcast %178 : vector<1x8x1xf32> to vector<1x8x8xf32>
    %180 = arith.subf %176, %179 : vector<1x8x8xf32>
    %181 = math.exp %180 : vector<1x8x8xf32>
    %cst_140 = arith.constant dense<0.000000e+00> : vector<1x8xf32>
    %182 = vector.multi_reduction <add>, %181, %cst_140 [2] : vector<1x8x8xf32> to vector<1x8xf32>
    %183 = vector.shape_cast %182 : vector<1x8xf32> to vector<1x8x1xf32>
    %184 = vector.broadcast %183 : vector<1x8x1xf32> to vector<1x8x8xf32>
    %185 = arith.divf %181, %184 : vector<1x8x8xf32>
    %186 = arith.truncf %185 : vector<1x8x8xf32> to vector<1x8x8xbf16>
    "tpu.trace_start"() <{level = 10 : i32, message = "bqk,bkd->bqd"}> : () -> ()
    %cst_141 = arith.constant dense<0.000000e+00> : vector<1x8x16xf32>
    %187 = tpu.matmul %186, %173, %cst_141 {dimension_numbers = #tpu.dot_dimension_numbers<[2], [1], [1], [2], [0, 0, 0, 1, 1, 2], [0], [0]>} : vector<1x8x8xbf16>, vector<1x8x16xbf16>, vector<1x8x16xf32> -> vector<1x8x16xf32>
    "tpu.trace_stop"() : () -> ()
    %188 = vector.shape_cast %187 : vector<1x8x16xf32> to vector<8x16xf32>
    %189 = arith.truncf %188 : vector<8x16xf32> to vector<8x16xbf16>
    %c0_142 = arith.constant 0 : index
    %c3_143 = arith.constant 3 : index
    %c0_144 = arith.constant 0 : index
    %c0_145 = arith.constant 0 : index
    %190 = vector.load %arg12[%c0_142, %c3_143, %c0_144, %c0_145] : memref<1x4x16x64xbf16, #tpu.memory_space<vmem>>, vector<1x1x16x64xbf16>
    %191 = vector.shape_cast %190 : vector<1x1x16x64xbf16> to vector<16x64xbf16>
    %cst_146 = arith.constant dense<0.000000e+00> : vector<8x64xf32>
    %192 = tpu.matmul %189, %191, %cst_146 {dimension_numbers = #tpu.dot_dimension_numbers<[1], [0], [0], [1], [0, 0, 1, 1], [], []>} : vector<8x16xbf16>, vector<16x64xbf16>, vector<8x64xf32> -> vector<8x64xf32>
    %193 = arith.addf %146, %192 : vector<8x64xf32>
    %c0_147 = arith.constant 0 : index
    %c0_148 = arith.constant 0 : index
    %c0_149 = arith.constant 0 : index
    %194 = vector.load %arg13[%c0_147, %c0_148, %c0_149] : memref<1x1x64xf32, #tpu.memory_space<vmem>>, vector<1x1x64xf32>
    %195 = vector.shape_cast %194 : vector<1x1x64xf32> to vector<1x64xf32>
    %196 = vector.broadcast %195 : vector<1x64xf32> to vector<8x64xf32>
    %197 = arith.addf %193, %196 : vector<8x64xf32>
    %198 = arith.addf %3, %197 : vector<8x64xf32>
    %c0_150 = arith.constant 0 : index
    %c0_151 = arith.constant 0 : index
    %c0_152 = arith.constant 0 : index
    %199 = vector.load %arg14[%c0_150, %c0_151, %c0_152] : memref<1x1x64xf32, #tpu.memory_space<vmem>>, vector<1x1x64xf32>
    %200 = vector.shape_cast %199 : vector<1x1x64xf32> to vector<1x64xf32>
    %c0_153 = arith.constant 0 : index
    %c0_154 = arith.constant 0 : index
    %c0_155 = arith.constant 0 : index
    %201 = vector.load %arg15[%c0_153, %c0_154, %c0_155] : memref<1x1x64xf32, #tpu.memory_space<vmem>>, vector<1x1x64xf32>
    %202 = vector.shape_cast %201 : vector<1x1x64xf32> to vector<1x64xf32>
    %cst_156 = arith.constant dense<0.000000e+00> : vector<8xf32>
    %203 = vector.multi_reduction <add>, %198, %cst_156 [1] : vector<8x64xf32> to vector<8xf32>
    %204 = vector.shape_cast %203 : vector<8xf32> to vector<8x1xf32>
    %cst_157 = arith.constant 6.400000e+01 : f32
    %205 = vector.broadcast %cst_157 : f32 to vector<8x1xf32>
    %206 = arith.divf %204, %205 : vector<8x1xf32>
    %207 = vector.broadcast %206 : vector<8x1xf32> to vector<8x64xf32>
    %208 = arith.subf %198, %207 : vector<8x64xf32>
    %209 = arith.mulf %208, %208 : vector<8x64xf32>
    %cst_158 = arith.constant dense<0.000000e+00> : vector<8xf32>
    %210 = vector.multi_reduction <add>, %209, %cst_158 [1] : vector<8x64xf32> to vector<8xf32>
    %211 = vector.shape_cast %210 : vector<8xf32> to vector<8x1xf32>
    %cst_159 = arith.constant 6.400000e+01 : f32
    %212 = vector.broadcast %cst_159 : f32 to vector<8x1xf32>
    %213 = arith.divf %211, %212 : vector<8x1xf32>
    %214 = vector.broadcast %206 : vector<8x1xf32> to vector<8x64xf32>
    %215 = arith.subf %198, %214 : vector<8x64xf32>
    %cst_160 = arith.constant 9.99999974E-6 : f32
    %216 = vector.broadcast %cst_160 : f32 to vector<8x1xf32>
    %217 = arith.addf %213, %216 : vector<8x1xf32>
    %218 = math.rsqrt %217 : vector<8x1xf32>
    %219 = vector.broadcast %218 : vector<8x1xf32> to vector<8x64xf32>
    %220 = arith.mulf %215, %219 : vector<8x64xf32>
    %221 = vector.broadcast %200 : vector<1x64xf32> to vector<8x64xf32>
    %222 = arith.mulf %220, %221 : vector<8x64xf32>
    %223 = vector.broadcast %202 : vector<1x64xf32> to vector<8x64xf32>
    %224 = arith.addf %222, %223 : vector<8x64xf32>
    %225 = arith.truncf %224 : vector<8x64xf32> to vector<8x64xbf16>
    %c0_161 = arith.constant 0 : index
    %c0_162 = arith.constant 0 : index
    %c0_163 = arith.constant 0 : index
    %226 = vector.load %arg16[%c0_161, %c0_162, %c0_163] : memref<1x64x256xbf16, #tpu.memory_space<vmem>>, vector<1x64x256xbf16>
    %227 = vector.shape_cast %226 : vector<1x64x256xbf16> to vector<64x256xbf16>
    %cst_164 = arith.constant dense<0.000000e+00> : vector<8x256xf32>
    %228 = tpu.matmul %225, %227, %cst_164 {dimension_numbers = #tpu.dot_dimension_numbers<[1], [0], [0], [1], [0, 0, 1, 1], [], []>} : vector<8x64xbf16>, vector<64x256xbf16>, vector<8x256xf32> -> vector<8x256xf32>
    %c0_165 = arith.constant 0 : index
    %c0_166 = arith.constant 0 : index
    %c0_167 = arith.constant 0 : index
    %229 = vector.load %arg17[%c0_165, %c0_166, %c0_167] : memref<1x1x256xf32, #tpu.memory_space<vmem>>, vector<1x1x256xf32>
    %230 = vector.shape_cast %229 : vector<1x1x256xf32> to vector<1x256xf32>
    %231 = vector.broadcast %230 : vector<1x256xf32> to vector<8x256xf32>
    %232 = arith.addf %228, %231 : vector<8x256xf32>
    %cst_168 = arith.constant 0.000000e+00 : f32
    %233 = vector.broadcast %cst_168 : f32 to vector<8x256xf32>
    %234 = arith.maximumf %232, %233 : vector<8x256xf32>
    %235 = arith.truncf %234 : vector<8x256xf32> to vector<8x256xbf16>
    %c0_169 = arith.constant 0 : index
    %c0_170 = arith.constant 0 : index
    %c0_171 = arith.constant 0 : index
    %236 = vector.load %arg18[%c0_169, %c0_170, %c0_171] : memref<1x256x64xbf16, #tpu.memory_space<vmem>>, vector<1x256x64xbf16>
    %237 = vector.shape_cast %236 : vector<1x256x64xbf16> to vector<256x64xbf16>
    %cst_172 = arith.constant dense<0.000000e+00> : vector<8x64xf32>
    %238 = tpu.matmul %235, %237, %cst_172 {dimension_numbers = #tpu.dot_dimension_numbers<[1], [0], [0], [1], [0, 0, 1, 1], [], []>} : vector<8x256xbf16>, vector<256x64xbf16>, vector<8x64xf32> -> vector<8x64xf32>
    %c0_173 = arith.constant 0 : index
    %c0_174 = arith.constant 0 : index
    %c0_175 = arith.constant 0 : index
    %239 = vector.load %arg19[%c0_173, %c0_174, %c0_175] : memref<1x1x64xf32, #tpu.memory_space<vmem>>, vector<1x1x64xf32>
    %240 = vector.shape_cast %239 : vector<1x1x64xf32> to vector<1x64xf32>
    %241 = vector.broadcast %240 : vector<1x64xf32> to vector<8x64xf32>
    %242 = arith.addf %238, %241 : vector<8x64xf32>
    %243 = arith.addf %224, %242 : vector<8x64xf32>
    %c0_176 = arith.constant 0 : index
    %c0_177 = arith.constant 0 : index
    %c0_178 = arith.constant 0 : index
    %244 = vector.load %arg20[%c0_176, %c0_177, %c0_178] : memref<1x1x64xf32, #tpu.memory_space<vmem>>, vector<1x1x64xf32>
    %245 = vector.shape_cast %244 : vector<1x1x64xf32> to vector<1x64xf32>
    %c0_179 = arith.constant 0 : index
    %c0_180 = arith.constant 0 : index
    %c0_181 = arith.constant 0 : index
    %246 = vector.load %arg21[%c0_179, %c0_180, %c0_181] : memref<1x1x64xf32, #tpu.memory_space<vmem>>, vector<1x1x64xf32>
    %247 = vector.shape_cast %246 : vector<1x1x64xf32> to vector<1x64xf32>
    %cst_182 = arith.constant dense<0.000000e+00> : vector<8xf32>
    %248 = vector.multi_reduction <add>, %243, %cst_182 [1] : vector<8x64xf32> to vector<8xf32>
    %249 = vector.shape_cast %248 : vector<8xf32> to vector<8x1xf32>
    %cst_183 = arith.constant 6.400000e+01 : f32
    %250 = vector.broadcast %cst_183 : f32 to vector<8x1xf32>
    %251 = arith.divf %249, %250 : vector<8x1xf32>
    %252 = vector.broadcast %251 : vector<8x1xf32> to vector<8x64xf32>
    %253 = arith.subf %243, %252 : vector<8x64xf32>
    %254 = arith.mulf %253, %253 : vector<8x64xf32>
    %cst_184 = arith.constant dense<0.000000e+00> : vector<8xf32>
    %255 = vector.multi_reduction <add>, %254, %cst_184 [1] : vector<8x64xf32> to vector<8xf32>
    %256 = vector.shape_cast %255 : vector<8xf32> to vector<8x1xf32>
    %cst_185 = arith.constant 6.400000e+01 : f32
    %257 = vector.broadcast %cst_185 : f32 to vector<8x1xf32>
    %258 = arith.divf %256, %257 : vector<8x1xf32>
    %259 = vector.broadcast %251 : vector<8x1xf32> to vector<8x64xf32>
    %260 = arith.subf %243, %259 : vector<8x64xf32>
    %cst_186 = arith.constant 9.99999974E-6 : f32
    %261 = vector.broadcast %cst_186 : f32 to vector<8x1xf32>
    %262 = arith.addf %258, %261 : vector<8x1xf32>
    %263 = math.rsqrt %262 : vector<8x1xf32>
    %264 = vector.broadcast %263 : vector<8x1xf32> to vector<8x64xf32>
    %265 = arith.mulf %260, %264 : vector<8x64xf32>
    %266 = vector.broadcast %245 : vector<1x64xf32> to vector<8x64xf32>
    %267 = arith.mulf %265, %266 : vector<8x64xf32>
    %268 = vector.broadcast %247 : vector<1x64xf32> to vector<8x64xf32>
    %269 = arith.addf %267, %268 : vector<8x64xf32>
    %c0_187 = arith.constant 0 : index
    %c0_188 = arith.constant 0 : index
    %270 = vector.load %arg27[%c0_187, %c0_188] : memref<8x64xf32, #tpu.memory_space<vmem>>, vector<8x64xf32>
    tpu.vector_store %arg27[%c0_187, %c0_188], %269 {strides = array<i32>} : memref<8x64xf32, #tpu.memory_space<vmem>>, vector<8x64xf32>,
    %c1_i32 = arith.constant 1 : i32
    %271 = arith.cmpi eq, %arg1, %c1_i32 : i32
    %272 = arith.extui %271 : i1 to i32
    %c0_i32_189 = arith.constant 0 : i32
    %273 = arith.cmpi ne, %272, %c0_i32_189 : i32
    scf.if %273 {
      %c0_190 = arith.constant 0 : index
      %c0_191 = arith.constant 0 : index
      %274 = vector.load %arg27[%c0_190, %c0_191] : memref<8x64xf32, #tpu.memory_space<vmem>>, vector<8x64xf32>
      %275 = vector.shape_cast %274 : vector<8x64xf32> to vector<1x8x64xf32>
      %c0_192 = arith.constant 0 : index
      %c0_193 = arith.constant 0 : index
      %c0_194 = arith.constant 0 : index
      %276 = vector.load %arg24[%c0_192, %c0_193, %c0_194] : memref<1x8x64xf32, #tpu.memory_space<vmem>>, vector<1x8x64xf32>
      tpu.vector_store %arg24[%c0_192, %c0_193, %c0_194], %275 {strides = array<i32>} : memref<1x8x64xf32, #tpu.memory_space<vmem>>, vector<1x8x64xf32>,
      %cst_195 = arith.constant dense<0.000000e+00> : vector<1x64xf32>
      %277 = vector.multi_reduction <add>, %275, %cst_195 [1] : vector<1x8x64xf32> to vector<1x64xf32>
      %cst_196 = arith.constant 8.000000e+00 : f32
      %278 = vector.broadcast %cst_196 : f32 to vector<1x64xf32>
      %279 = arith.divf %277, %278 : vector<1x64xf32>
      %280 = vector.shape_cast %279 : vector<1x64xf32> to vector<1x1x64xf32>
      %c0_197 = arith.constant 0 : index
      %c0_198 = arith.constant 0 : index
      %c0_199 = arith.constant 0 : index
      %281 = vector.load %arg25[%c0_197, %c0_198, %c0_199] : memref<1x1x64xf32, #tpu.memory_space<vmem>>, vector<1x1x64xf32>
      tpu.vector_store %arg25[%c0_197, %c0_198, %c0_199], %280 {strides = array<i32>} : memref<1x1x64xf32, #tpu.memory_space<vmem>>, vector<1x1x64xf32>,
      %c0_200 = arith.constant 0 : index
      %c0_201 = arith.constant 0 : index
      %282 = vector.load %arg22[%c0_200, %c0_201] : memref<64x16xf32, #tpu.memory_space<vmem>>, vector<64x16xf32>
      %cst_202 = arith.constant dense<0.000000e+00> : vector<1x16xf32>
      %283 = tpu.matmul %279, %282, %cst_202 {dimension_numbers = #tpu.dot_dimension_numbers<[1], [0], [0], [1], [0, 0, 1, 1], [], []>} : vector<1x64xf32>, vector<64x16xf32>, vector<1x16xf32> -> vector<1x16xf32>
      %c0_203 = arith.constant 0 : index
      %c0_204 = arith.constant 0 : index
      %284 = vector.load %arg23[%c0_203, %c0_204] : memref<1x16xf32, #tpu.memory_space<vmem>>, vector<1x16xf32>
      %285 = arith.addf %283, %284 : vector<1x16xf32>
      %286 = vector.extract_strided_slice %285 {offsets = [0, 0], sizes = [1, 7], strides = [1, 1]} : vector<1x16xf32> to vector<1x7xf32>
      %cst_205 = arith.constant dense<0xFF800000> : vector<1xf32>
      %287 = vector.multi_reduction <maximumf>, %286, %cst_205 [1] : vector<1x7xf32> to vector<1xf32>
      %288 = vector.shape_cast %287 : vector<1xf32> to vector<1x1xf32>
      %289 = vector.broadcast %288 : vector<1x1xf32> to vector<1x7xf32>
      %290 = arith.subf %286, %289 : vector<1x7xf32>
      %291 = math.exp %290 : vector<1x7xf32>
      %cst_206 = arith.constant dense<0.000000e+00> : vector<1xf32>
      %292 = vector.multi_reduction <add>, %291, %cst_206 [1] : vector<1x7xf32> to vector<1xf32>
      %293 = vector.shape_cast %292 : vector<1xf32> to vector<1x1xf32>
      %294 = vector.broadcast %293 : vector<1x1xf32> to vector<1x7xf32>
      %295 = arith.divf %291, %294 : vector<1x7xf32>
      %296 = vector.extract_strided_slice %285 {offsets = [0, 7], sizes = [1, 7], strides = [1, 1]} : vector<1x16xf32> to vector<1x7xf32>
      %cst_207 = arith.constant 0.000000e+00 : f32
      %297 = vector.broadcast %cst_207 : f32 to vector<1x7xf32>
      %298 = arith.subf %297, %296 : vector<1x7xf32>
      %299 = math.exp %298 : vector<1x7xf32>
      %cst_208 = arith.constant 1.000000e+00 : f32
      %300 = vector.broadcast %cst_208 : f32 to vector<1x7xf32>
      %301 = arith.addf %300, %299 : vector<1x7xf32>
      %cst_209 = arith.constant 1.000000e+00 : f32
      %302 = vector.broadcast %cst_209 : f32 to vector<1x7xf32>
      %303 = arith.divf %302, %301 : vector<1x7xf32>
      %304 = vector.extract_strided_slice %285 {offsets = [0, 14], sizes = [1, 1], strides = [1, 1]} : vector<1x16xf32> to vector<1x1xf32>
      %cst_210 = arith.constant 0.000000e+00 : f32
      %305 = vector.broadcast %cst_210 : f32 to vector<1x1xf32>
      %306 = arith.subf %305, %304 : vector<1x1xf32>
      %307 = math.exp %306 : vector<1x1xf32>
      %cst_211 = arith.constant 1.000000e+00 : f32
      %308 = vector.broadcast %cst_211 : f32 to vector<1x1xf32>
      %309 = arith.addf %308, %307 : vector<1x1xf32>
      %cst_212 = arith.constant 1.000000e+00 : f32
      %310 = vector.broadcast %cst_212 : f32 to vector<1x1xf32>
      %311 = arith.divf %310, %309 : vector<1x1xf32>
      %cst_213 = arith.constant 0.000000e+00 : f32
      %312 = vector.broadcast %cst_213 : f32 to vector<1x1xf32>
      %313 = tpu.concatenate %295, %303, %311, %312 in 1 : vector<1x7xf32>, vector<1x7xf32>, vector<1x1xf32>, vector<1x1xf32> -> vector<1x16xf32>
      %314 = vector.shape_cast %313 : vector<1x16xf32> to vector<1x1x16xf32>
      %c0_214 = arith.constant 0 : index
      %c0_215 = arith.constant 0 : index
      %c0_216 = arith.constant 0 : index
      %315 = vector.load %arg26[%c0_214, %c0_215, %c0_216] : memref<1x1x16xf32, #tpu.memory_space<vmem>>, vector<1x1x16xf32>
      tpu.vector_store %arg26[%c0_214, %c0_215, %c0_216], %314 {strides = array<i32>} : memref<1x1x16xf32, #tpu.memory_space<vmem>>, vector<1x1x16xf32>,
    } else {
    }
    return
  }
  func.func @transform_0(%arg0: i32, %arg1: i32) -> (i32, i32, i32) {
    %c0_i32 = arith.constant 0 : i32
    %c0_i32_0 = arith.constant 0 : i32
    %c0_i32_1 = arith.constant 0 : i32
    return %arg0, %c0_i32, %c0_i32_0 : i32, i32, i32
  }
  func.func @transform_1(%arg0: i32, %arg1: i32) -> (i32, i32) {
    %c0_i32 = arith.constant 0 : i32
    %c0_i32_0 = arith.constant 0 : i32
    %c0_i32_1 = arith.constant 0 : i32
    return %c0_i32, %c0_i32_0 : i32, i32
  }
  func.func @transform_2(%arg0: i32, %arg1: i32) -> (i32, i32) {
    %c0_i32 = arith.constant 0 : i32
    %c0_i32_0 = arith.constant 0 : i32
    %c0_i32_1 = arith.constant 0 : i32
    return %c0_i32, %c0_i32_0 : i32, i32
  }
  func.func @transform_3(%arg0: i32, %arg1: i32) -> (i32, i32) {
    %c0_i32 = arith.constant 0 : i32
    %c0_i32_0 = arith.constant 0 : i32
    %c0_i32_1 = arith.constant 0 : i32
    return %c0_i32, %c0_i32_0 : i32, i32
  }
  func.func @transform_4(%arg0: i32, %arg1: i32) -> (i32, i32, i32, i32) {
    %c0_i32 = arith.constant 0 : i32
    %c0_i32_0 = arith.constant 0 : i32
    %c0_i32_1 = arith.constant 0 : i32
    %c0_i32_2 = arith.constant 0 : i32
    return %arg1, %c0_i32, %c0_i32_0, %c0_i32_1 : i32, i32, i32, i32
  }
  func.func @transform_5(%arg0: i32, %arg1: i32) -> (i32, i32, i32, i32) {
    %c0_i32 = arith.constant 0 : i32
    %c0_i32_0 = arith.constant 0 : i32
    %c0_i32_1 = arith.constant 0 : i32
    %c0_i32_2 = arith.constant 0 : i32
    return %arg1, %c0_i32, %c0_i32_0, %c0_i32_1 : i32, i32, i32, i32
  }
  func.func @transform_6(%arg0: i32, %arg1: i32) -> (i32, i32, i32, i32) {
    %c0_i32 = arith.constant 0 : i32
    %c0_i32_0 = arith.constant 0 : i32
    %c0_i32_1 = arith.constant 0 : i32
    %c0_i32_2 = arith.constant 0 : i32
    return %arg1, %c0_i32, %c0_i32_0, %c0_i32_1 : i32, i32, i32, i32
  }
  func.func @transform_7(%arg0: i32, %arg1: i32) -> (i32, i32, i32, i32) {
    %c0_i32 = arith.constant 0 : i32
    %c0_i32_0 = arith.constant 0 : i32
    %c0_i32_1 = arith.constant 0 : i32
    %c0_i32_2 = arith.constant 0 : i32
    return %arg1, %c0_i32, %c0_i32_0, %c0_i32_1 : i32, i32, i32, i32
  }
  func.func @transform_8(%arg0: i32, %arg1: i32) -> (i32, i32, i32, i32) {
    %c0_i32 = arith.constant 0 : i32
    %c0_i32_0 = arith.constant 0 : i32
    %c0_i32_1 = arith.constant 0 : i32
    %c0_i32_2 = arith.constant 0 : i32
    return %arg1, %c0_i32, %c0_i32_0, %c0_i32_1 : i32, i32, i32, i32
  }
  func.func @transform_9(%arg0: i32, %arg1: i32) -> (i32, i32, i32, i32) {
    %c0_i32 = arith.constant 0 : i32
    %c0_i32_0 = arith.constant 0 : i32
    %c0_i32_1 = arith.constant 0 : i32
    %c0_i32_2 = arith.constant 0 : i32
    return %arg1, %c0_i32, %c0_i32_0, %c0_i32_1 : i32, i32, i32, i32
  }
  func.func @transform_10(%arg0: i32, %arg1: i32) -> (i32, i32, i32, i32) {
    %c0_i32 = arith.constant 0 : i32
    %c0_i32_0 = arith.constant 0 : i32
    %c0_i32_1 = arith.constant 0 : i32
    %c0_i32_2 = arith.constant 0 : i32
    return %arg1, %c0_i32, %c0_i32_0, %c0_i32_1 : i32, i32, i32, i32
  }
  func.func @transform_11(%arg0: i32, %arg1: i32) -> (i32, i32, i32) {
    %c0_i32 = arith.constant 0 : i32
    %c0_i32_0 = arith.constant 0 : i32
    %c0_i32_1 = arith.constant 0 : i32
    return %arg1, %c0_i32, %c0_i32_0 : i32, i32, i32
  }
  func.func @transform_12(%arg0: i32, %arg1: i32) -> (i32, i32, i32) {
    %c0_i32 = arith.constant 0 : i32
    %c0_i32_0 = arith.constant 0 : i32
    %c0_i32_1 = arith.constant 0 : i32
    return %arg1, %c0_i32, %c0_i32_0 : i32, i32, i32
  }
  func.func @transform_13(%arg0: i32, %arg1: i32) -> (i32, i32, i32) {
    %c0_i32 = arith.constant 0 : i32
    %c0_i32_0 = arith.constant 0 : i32
    %c0_i32_1 = arith.constant 0 : i32
    return %arg1, %c0_i32, %c0_i32_0 : i32, i32, i32
  }
  func.func @transform_14(%arg0: i32, %arg1: i32) -> (i32, i32, i32) {
    %c0_i32 = arith.constant 0 : i32
    %c0_i32_0 = arith.constant 0 : i32
    %c0_i32_1 = arith.constant 0 : i32
    return %arg1, %c0_i32, %c0_i32_0 : i32, i32, i32
  }
  func.func @transform_15(%arg0: i32, %arg1: i32) -> (i32, i32, i32) {
    %c0_i32 = arith.constant 0 : i32
    %c0_i32_0 = arith.constant 0 : i32
    %c0_i32_1 = arith.constant 0 : i32
    return %arg1, %c0_i32, %c0_i32_0 : i32, i32, i32
  }
  func.func @transform_16(%arg0: i32, %arg1: i32) -> (i32, i32, i32) {
    %c0_i32 = arith.constant 0 : i32
    %c0_i32_0 = arith.constant 0 : i32
    %c0_i32_1 = arith.constant 0 : i32
    return %arg1, %c0_i32, %c0_i32_0 : i32, i32, i32
  }
  func.func @transform_17(%arg0: i32, %arg1: i32) -> (i32, i32, i32) {
    %c0_i32 = arith.constant 0 : i32
    %c0_i32_0 = arith.constant 0 : i32
    %c0_i32_1 = arith.constant 0 : i32
    return %arg1, %c0_i32, %c0_i32_0 : i32, i32, i32
  }
  func.func @transform_18(%arg0: i32, %arg1: i32) -> (i32, i32, i32) {
    %c0_i32 = arith.constant 0 : i32
    %c0_i32_0 = arith.constant 0 : i32
    %c0_i32_1 = arith.constant 0 : i32
    return %arg1, %c0_i32, %c0_i32_0 : i32, i32, i32
  }
  func.func @transform_19(%arg0: i32, %arg1: i32) -> (i32, i32, i32) {
    %c0_i32 = arith.constant 0 : i32
    %c0_i32_0 = arith.constant 0 : i32
    %c0_i32_1 = arith.constant 0 : i32
    return %arg1, %c0_i32, %c0_i32_0 : i32, i32, i32
  }
  func.func @transform_20(%arg0: i32, %arg1: i32) -> (i32, i32) {
    %c0_i32 = arith.constant 0 : i32
    %c0_i32_0 = arith.constant 0 : i32
    %c0_i32_1 = arith.constant 0 : i32
    return %c0_i32, %c0_i32_0 : i32, i32
  }
  func.func @transform_21(%arg0: i32, %arg1: i32) -> (i32, i32) {
    %c0_i32 = arith.constant 0 : i32
    %c0_i32_0 = arith.constant 0 : i32
    %c0_i32_1 = arith.constant 0 : i32
    return %c0_i32, %c0_i32_0 : i32, i32
  }
  func.func @transform_22(%arg0: i32, %arg1: i32) -> (i32, i32, i32) {
    %c0_i32 = arith.constant 0 : i32
    %c0_i32_0 = arith.constant 0 : i32
    %c0_i32_1 = arith.constant 0 : i32
    return %arg0, %c0_i32, %c0_i32_0 : i32, i32, i32
  }
  func.func @transform_23(%arg0: i32, %arg1: i32) -> (i32, i32, i32) {
    %c0_i32 = arith.constant 0 : i32
    %c0_i32_0 = arith.constant 0 : i32
    %c0_i32_1 = arith.constant 0 : i32
    return %arg0, %c0_i32, %c0_i32_0 : i32, i32, i32
  }
  func.func @transform_24(%arg0: i32, %arg1: i32) -> (i32, i32, i32) {
    %c0_i32 = arith.constant 0 : i32
    %c0_i32_0 = arith.constant 0 : i32
    %c0_i32_1 = arith.constant 0 : i32
    return %arg0, %c0_i32, %c0_i32_0 : i32, i32, i32
  }
}

</mosaic_0001>

<llo_original>
// kernel: tpu_custom_call.1
$region0: #{tpu_custom_call.1}
  #allocation0 [shape = 'u32[]', space=smem, size = 0x4, offset = 0x4, fixed_abs, tag = 'smem constant byte address 0x4 - core index']
  #allocation1 [shape = 'u32[144,128]{1,0:T(1,128)}', space=vmem, size = 0x12000, scoped, tag = 'internal scratch']
  #allocation2 [shape = 'f32[8,64]{1,0:T(8,128)}', space=vmem, size = 0x1000, scoped, tag = 'scratch operand']
  %s0 = inlined_call_operand.vmem [shape: f32[2,8,32], index: 0, kind: input, shape index: {}]
  %s1 = inlined_call_operand.vmem [shape: bf16[32,64], index: 1, kind: input, shape index: {}]
  %s2 = inlined_call_operand.vmem [shape: f32[1,64], index: 2, kind: input, shape index: {}]
  %s3 = inlined_call_operand.vmem [shape: f32[8,64], index: 3, kind: input, shape index: {}]
  %s4 = inlined_call_operand.vmem [shape: bf16[2,4,64,16], index: 4, kind: input, shape index: {}]
  %s5 = inlined_call_operand.vmem [shape: bf16[2,4,64,16], index: 5, kind: input, shape index: {}]
  %s6 = inlined_call_operand.vmem [shape: bf16[2,4,64,16], index: 6, kind: input, shape index: {}]
  %s7 = inlined_call_operand.vmem [shape: f32[2,4,1,16], index: 7, kind: input, shape index: {}]
  %s8 = inlined_call_operand.vmem [shape: f32[2,4,1,16], index: 8, kind: input, shape index: {}]
  %s9 = inlined_call_operand.vmem [shape: f32[2,4,1,16], index: 9, kind: input, shape index: {}]
  %s10 = inlined_call_operand.vmem [shape: bf16[2,4,16,64], index: 10, kind: input, shape index: {}]
  %s11 = inlined_call_operand.vmem [shape: f32[2,1,64], index: 11, kind: input, shape index: {}]
  %s12 = inlined_call_operand.vmem [shape: f32[2,1,64], index: 12, kind: input, shape index: {}]
  %s13 = inlined_call_operand.vmem [shape: f32[2,1,64], index: 13, kind: input, shape index: {}]
  %s14 = inlined_call_operand.vmem [shape: bf16[2,64,256], index: 14, kind: input, shape index: {}]
  %s15 = inlined_call_operand.vmem [shape: f32[2,1,256], index: 15, kind: input, shape index: {}]
  %s16 = inlined_call_operand.vmem [shape: bf16[2,256,64], index: 16, kind: input, shape index: {}]
  %s17 = inlined_call_operand.vmem [shape: f32[2,1,64], index: 17, kind: input, shape index: {}]
  %s18 = inlined_call_operand.vmem [shape: f32[2,1,64], index: 18, kind: input, shape index: {}]
  %s19 = inlined_call_operand.vmem [shape: f32[2,1,64], index: 19, kind: input, shape index: {}]
  %s20 = inlined_call_operand.vmem [shape: f32[64,16], index: 20, kind: input, shape index: {}]
  %s21 = inlined_call_operand.vmem [shape: f32[1,16], index: 21, kind: input, shape index: {}]
  %s22 = inlined_call_operand.hbm [shape: f32[2,8,64], index: 22, kind: output, shape index: {0}]
  %s23 = inlined_call_operand.hbm [shape: f32[2,1,64], index: 23, kind: output, shape index: {1}]
  %s24 = inlined_call_operand.hbm [shape: f32[2,1,16], index: 24, kind: output, shape index: {2}]
  %25 = xla_tuple %s22, %s23, %s24
  %s26 = sld [smem:[#allocation0]]
  $region145: #{tpu_custom_call.1} parent=0
    _
  %s28 = ssub.s32 1, %s26
  %s29 = scalar_select 0, %s28, %s26
  $region1: #{tpu_custom_call.1} parent=0
    #allocation3 [shape = 'u8[8192]{0}', space=vmem, size = 0x2000, scoped, tag = 'output window, operand 0']
    #allocation4 [shape = 's32[2]{0}', space=sflag, size = 0x8, scoped, tag = 'scoped memory for tpu_custom_call.1']
    #allocation5 [shape = 'u8[1024]{0}', space=vmem, size = 0x400, scoped, tag = 'output window, operand 1']
    #allocation6 [shape = 's32[2]{0}', space=sflag, size = 0x8, scoped, tag = 'scoped memory for tpu_custom_call.1']
    #allocation7 [shape = 'u8[1024]{0}', space=vmem, size = 0x400, scoped, tag = 'output window, operand 2']
    %30 = vsyncpa [#allocation4], 0
    %s31 = scalar_lea.sflag [#allocation4], 1
    %32 = vsyncpa %s31, 0
    %33 = vsyncpa [#allocation6], 0
    %s34 = scalar_lea.sflag [#allocation6], 1
    %35 = vsyncpa %s34, 0
    loop: start=0, step=1, limit=6
    $region2: #{tpu_custom_call.1} parent=1 // loop_pre_header
      _
    $region3: #{tpu_custom_call.1} parent=1 // loop_header
      %s37 = sphi 0, %s41
      %p38 = scmp.ge.s32.totalorder %s37, 6
      %s44 = sphi 0, %s56
      %s45 = sphi 0, %s52
      %s46 = sphi 0, %s44
      %s47 = sphi 0, %s45
      %s48 = sphi 0, %s46
      %s49 = sphi 0, %s47
      %s59 = sphi 0, %s61
      %s62 = sphi 0, %s59
      %s63 = sphi 0, %s62
      %s79 = sphi 0, %s63
      %s83 = sphi 0, %s83
      %s85 = sphi 0, %s83
      %s86 = sphi 0, %s85
      %s100 = sphi 0, %s86
      %s104 = sphi 0, %s104
      %s106 = sphi 0, %s104
      %s107 = sphi 0, %s106
      %s121 = sphi 0, %s107
      %s125 = sphi 0, %s125
      %s127 = sphi 0, %s125
      %s128 = sphi 0, %s127
      %s142 = sphi 0, %s128
      %s148 = sphi 0, %s150
      %s151 = sphi 0, %s148
      %s152 = sphi 0, %s151
      %s168 = sphi 0, %s152
      %s174 = sphi 0, %s176
      %s177 = sphi 0, %s174
      %s178 = sphi 0, %s177
      %s194 = sphi 0, %s178
      %s200 = sphi 0, %s202
      %s203 = sphi 0, %s200
      %s204 = sphi 0, %s203
      %s220 = sphi 0, %s204
      %s226 = sphi 0, %s228
      %s229 = sphi 0, %s226
      %s230 = sphi 0, %s229
      %s246 = sphi 0, %s230
      %s252 = sphi 0, %s254
      %s255 = sphi 0, %s252
      %s256 = sphi 0, %s255
      %s272 = sphi 0, %s256
      %s278 = sphi 0, %s280
      %s281 = sphi 0, %s278
      %s282 = sphi 0, %s281
      %s298 = sphi 0, %s282
      %s304 = sphi 0, %s306
      %s307 = sphi 0, %s304
      %s308 = sphi 0, %s307
      %s324 = sphi 0, %s308
      %s330 = sphi 0, %s332
      %s333 = sphi 0, %s330
      %s334 = sphi 0, %s333
      %s350 = sphi 0, %s334
      %s356 = sphi 0, %s358
      %s359 = sphi 0, %s356
      %s360 = sphi 0, %s359
      %s376 = sphi 0, %s360
      %s382 = sphi 0, %s384
      %s385 = sphi 0, %s382
      %s386 = sphi 0, %s385
      %s402 = sphi 0, %s386
      %s408 = sphi 0, %s410
      %s411 = sphi 0, %s408
      %s412 = sphi 0, %s411
      %s428 = sphi 0, %s412
      %s434 = sphi 0, %s436
      %s437 = sphi 0, %s434
      %s438 = sphi 0, %s437
      %s454 = sphi 0, %s438
      %s460 = sphi 0, %s462
      %s463 = sphi 0, %s460
      %s464 = sphi 0, %s463
      %s480 = sphi 0, %s464
      %s486 = sphi 0, %s488
      %s489 = sphi 0, %s486
      %s490 = sphi 0, %s489
      %s506 = sphi 0, %s490
      %s512 = sphi 0, %s514
      %s515 = sphi 0, %s512
      %s516 = sphi 0, %s515
      %s532 = sphi 0, %s516
      %s538 = sphi 0, %s540
      %s541 = sphi 0, %s538
      %s542 = sphi 0, %s541
      %s558 = sphi 0, %s542
      %s562 = sphi 0, %s562
      %s564 = sphi 0, %s562
      %s565 = sphi 0, %s564
      %s579 = sphi 0, %s565
      %s583 = sphi 0, %s583
      %s585 = sphi 0, %s583
      %s586 = sphi 0, %s585
      %s600 = sphi 0, %s586
      %s606 = sphi 0, %s608
      %s609 = sphi 0, %s606
      %s610 = sphi 0, %s609
      %s626 = sphi 0, %s610
      %s632 = sphi 0, %s634
      %s635 = sphi 0, %s632
      %s636 = sphi 0, %s635
      %s652 = sphi 0, %s636
      %s658 = sphi 0, %s660
      %s661 = sphi 0, %s658
      %s662 = sphi 0, %s661
      %s678 = sphi 0, %s662
    $region4: #{tpu_custom_call.1} parent=1 // loop_header_branch
      %40 = sbr.rel (%p38) target = $region8
    $region5: #{tpu_custom_call.1} parent=1 // loop_body
      %s42 = ssub.s32 %s37, 1
      %s43 = ssub.s32 %s37, 2
      %s50 = sadd.s32 1, %s45
      %p51 = scmp.ge.s32.totalorder %s50, 2
      %s52 = scalar_select %p51, 0, %s50
      %s53 = sadd.s32 1, %s44
      %s54 = scalar_select %p51, %s53, %s44
      %p55 = scmp.ge.s32.totalorder %s54, 2
      %s56 = scalar_select %p55, 0, %s54
      %s57 = ssub.s32 %s44, %s56
      %p58 = scmp.eq.s32.totalorder %s57, 0
      %s60 = sadd.s32 %s59, 1
      %s61 = scalar_select %p58, %s59, %s60
      %p64 = pneg %p58
      %p65 = scmp.eq.s32.totalorder %s37, 3
      %p66 = por %p64, %p65
      %p67 = scmp.ne.s32.totalorder %s59, %s62
      %p68 = scmp.eq.s32.totalorder %s37, 0
      %p69 = por %p67, %p68
      %p70 = scmp.ne.s32.totalorder %s59, %s62
      %p71 = scmp.eq.s32.totalorder %s42, 3
      %p72 = por %p70, %p71
      %p73 = scmp.ne.s32.totalorder %s62, %s63
      %p74 = scmp.eq.s32.totalorder %s42, 0
      %p75 = por %p73, %p74
      %p76 = scmp.ne.s32.totalorder %s62, %s63
      %p77 = scmp.eq.s32.totalorder %s43, 3
      %p78 = por %p76, %p77
      %p80 = scmp.ne.s32.totalorder %s63, %s79
      %p81 = scmp.eq.s32.totalorder %s43, 0
      %p82 = por %p80, %p81
      %s84 = sadd.s32 %s83, 1
      %p87 = scmp.eq.s32.totalorder %s37, 3
      %p88 = scmp.ne.s32.totalorder %s83, %s85
      %p89 = scmp.eq.s32.totalorder %s37, 0
      %p90 = por %p88, %p89
      %p91 = scmp.ne.s32.totalorder %s83, %s85
      %p92 = scmp.eq.s32.totalorder %s42, 3
      %p93 = por %p91, %p92
      %p94 = scmp.ne.s32.totalorder %s85, %s86
      %p95 = scmp.eq.s32.totalorder %s42, 0
      %p96 = por %p94, %p95
      %p97 = scmp.ne.s32.totalorder %s85, %s86
      %p98 = scmp.eq.s32.totalorder %s43, 3
      %p99 = por %p97, %p98
      %p101 = scmp.ne.s32.totalorder %s86, %s100
      %p102 = scmp.eq.s32.totalorder %s43, 0
      %p103 = por %p101, %p102
      %s105 = sadd.s32 %s104, 1
      %p108 = scmp.eq.s32.totalorder %s37, 3
      %p109 = scmp.ne.s32.totalorder %s104, %s106
      %p110 = scmp.eq.s32.totalorder %s37, 0
      %p111 = por %p109, %p110
      %p112 = scmp.ne.s32.totalorder %s104, %s106
      %p113 = scmp.eq.s32.totalorder %s42, 3
      %p114 = por %p112, %p113
      %p115 = scmp.ne.s32.totalorder %s106, %s107
      %p116 = scmp.eq.s32.totalorder %s42, 0
      %p117 = por %p115, %p116
      %p118 = scmp.ne.s32.totalorder %s106, %s107
      %p119 = scmp.eq.s32.totalorder %s43, 3
      %p120 = por %p118, %p119
      %p122 = scmp.ne.s32.totalorder %s107, %s121
      %p123 = scmp.eq.s32.totalorder %s43, 0
      %p124 = por %p122, %p123
      %s126 = sadd.s32 %s125, 1
      %p129 = scmp.eq.s32.totalorder %s37, 3
      %p130 = scmp.ne.s32.totalorder %s125, %s127
      %p131 = scmp.eq.s32.totalorder %s37, 0
      %p132 = por %p130, %p131
      %p133 = scmp.ne.s32.totalorder %s125, %s127
      %p134 = scmp.eq.s32.totalorder %s42, 3
      %p135 = por %p133, %p134
      %p136 = scmp.ne.s32.totalorder %s127, %s128
      %p137 = scmp.eq.s32.totalorder %s42, 0
      %p138 = por %p136, %p137
      %p139 = scmp.ne.s32.totalorder %s127, %s128
      %p140 = scmp.eq.s32.totalorder %s43, 3
      %p141 = por %p139, %p140
      %p143 = scmp.ne.s32.totalorder %s128, %s142
      %p144 = scmp.eq.s32.totalorder %s43, 0
      %p145 = por %p143, %p144
      %s146 = ssub.s32 %s45, %s52
      %p147 = scmp.eq.s32.totalorder %s146, 0
      %s149 = sadd.s32 %s148, 1
      %s150 = scalar_select %p147, %s148, %s149
      %p153 = pneg %p147
      %p154 = scmp.eq.s32.totalorder %s37, 3
      %p155 = por %p153, %p154
      %p156 = scmp.ne.s32.totalorder %s148, %s151
      %p157 = scmp.eq.s32.totalorder %s37, 0
      %p158 = por %p156, %p157
      %p159 = scmp.ne.s32.totalorder %s148, %s151
      %p160 = scmp.eq.s32.totalorder %s42, 3
      %p161 = por %p159, %p160
      %p162 = scmp.ne.s32.totalorder %s151, %s152
      %p163 = scmp.eq.s32.totalorder %s42, 0
      %p164 = por %p162, %p163
      %p165 = scmp.ne.s32.totalorder %s151, %s152
      %p166 = scmp.eq.s32.totalorder %s43, 3
      %p167 = por %p165, %p166
      %p169 = scmp.ne.s32.totalorder %s152, %s168
      %p170 = scmp.eq.s32.totalorder %s43, 0
      %p171 = por %p169, %p170
      %s172 = ssub.s32 %s45, %s52
      %p173 = scmp.eq.s32.totalorder %s172, 0
      %s175 = sadd.s32 %s174, 1
      %s176 = scalar_select %p173, %s174, %s175
      %p179 = pneg %p173
      %p180 = scmp.eq.s32.totalorder %s37, 3
      %p181 = por %p179, %p180
      %p182 = scmp.ne.s32.totalorder %s174, %s177
      %p183 = scmp.eq.s32.totalorder %s37, 0
      %p184 = por %p182, %p183
      %p185 = scmp.ne.s32.totalorder %s174, %s177
      %p186 = scmp.eq.s32.totalorder %s42, 3
      %p187 = por %p185, %p186
      %p188 = scmp.ne.s32.totalorder %s177, %s178
      %p189 = scmp.eq.s32.totalorder %s42, 0
      %p190 = por %p188, %p189
      %p191 = scmp.ne.s32.totalorder %s177, %s178
      %p192 = scmp.eq.s32.totalorder %s43, 3
      %p193 = por %p191, %p192
      %p195 = scmp.ne.s32.totalorder %s178, %s194
      %p196 = scmp.eq.s32.totalorder %s43, 0
      %p197 = por %p195, %p196
      %s198 = ssub.s32 %s45, %s52
      %p199 = scmp.eq.s32.totalorder %s198, 0
      %s201 = sadd.s32 %s200, 1
      %s202 = scalar_select %p199, %s200, %s201
      %p205 = pneg %p199
      %p206 = scmp.eq.s32.totalorder %s37, 3
      %p207 = por %p205, %p206
      %p208 = scmp.ne.s32.totalorder %s200, %s203
      %p209 = scmp.eq.s32.totalorder %s37, 0
      %p210 = por %p208, %p209
      %p211 = scmp.ne.s32.totalorder %s200, %s203
      %p212 = scmp.eq.s32.totalorder %s42, 3
      %p213 = por %p211, %p212
      %p214 = scmp.ne.s32.totalorder %s203, %s204
      %p215 = scmp.eq.s32.totalorder %s42, 0
      %p216 = por %p214, %p215
      %p217 = scmp.ne.s32.totalorder %s203, %s204
      %p218 = scmp.eq.s32.totalorder %s43, 3
      %p219 = por %p217, %p218
      %p221 = scmp.ne.s32.totalorder %s204, %s220
      %p222 = scmp.eq.s32.totalorder %s43, 0
      %p223 = por %p221, %p222
      %s224 = ssub.s32 %s45, %s52
      %p225 = scmp.eq.s32.totalorder %s224, 0
      %s227 = sadd.s32 %s226, 1
      %s228 = scalar_select %p225, %s226, %s227
      %p231 = pneg %p225
      %p232 = scmp.eq.s32.totalorder %s37, 3
      %p233 = por %p231, %p232
      %p234 = scmp.ne.s32.totalorder %s226, %s229
      %p235 = scmp.eq.s32.totalorder %s37, 0
      %p236 = por %p234, %p235
      %p237 = scmp.ne.s32.totalorder %s226, %s229
      %p238 = scmp.eq.s32.totalorder %s42, 3
      %p239 = por %p237, %p238
      %p240 = scmp.ne.s32.totalorder %s229, %s230
      %p241 = scmp.eq.s32.totalorder %s42, 0
      %p242 = por %p240, %p241
      %p243 = scmp.ne.s32.totalorder %s229, %s230
      %p244 = scmp.eq.s32.totalorder %s43, 3
      %p245 = por %p243, %p244
      %p247 = scmp.ne.s32.totalorder %s230, %s246
      %p248 = scmp.eq.s32.totalorder %s43, 0
      %p249 = por %p247, %p248
      %s250 = ssub.s32 %s45, %s52
      %p251 = scmp.eq.s32.totalorder %s250, 0
      %s253 = sadd.s32 %s252, 1
      %s254 = scalar_select %p251, %s252, %s253
      %p257 = pneg %p251
      %p258 = scmp.eq.s32.totalorder %s37, 3
      %p259 = por %p257, %p258
      %p260 = scmp.ne.s32.totalorder %s252, %s255
      %p261 = scmp.eq.s32.totalorder %s37, 0
      %p262 = por %p260, %p261
      %p263 = scmp.ne.s32.totalorder %s252, %s255
      %p264 = scmp.eq.s32.totalorder %s42, 3
      %p265 = por %p263, %p264
      %p266 = scmp.ne.s32.totalorder %s255, %s256
      %p267 = scmp.eq.s32.totalorder %s42, 0
      %p268 = por %p266, %p267
      %p269 = scmp.ne.s32.totalorder %s255, %s256
      %p270 = scmp.eq.s32.totalorder %s43, 3
      %p271 = por %p269, %p270
      %p273 = scmp.ne.s32.totalorder %s256, %s272
      %p274 = scmp.eq.s32.totalorder %s43, 0
      %p275 = por %p273, %p274
      %s276 = ssub.s32 %s45, %s52
      %p277 = scmp.eq.s32.totalorder %s276, 0
      %s279 = sadd.s32 %s278, 1
      %s280 = scalar_select %p277, %s278, %s279
      %p283 = pneg %p277
      %p284 = scmp.eq.s32.totalorder %s37, 3
      %p285 = por %p283, %p284
      %p286 = scmp.ne.s32.totalorder %s278, %s281
      %p287 = scmp.eq.s32.totalorder %s37, 0
      %p288 = por %p286, %p287
      %p289 = scmp.ne.s32.totalorder %s278, %s281
      %p290 = scmp.eq.s32.totalorder %s42, 3
      %p291 = por %p289, %p290
      %p292 = scmp.ne.s32.totalorder %s281, %s282
      %p293 = scmp.eq.s32.totalorder %s42, 0
      %p294 = por %p292, %p293
      %p295 = scmp.ne.s32.totalorder %s281, %s282
      %p296 = scmp.eq.s32.totalorder %s43, 3
      %p297 = por %p295, %p296
      %p299 = scmp.ne.s32.totalorder %s282, %s298
      %p300 = scmp.eq.s32.totalorder %s43, 0
      %p301 = por %p299, %p300
      %s302 = ssub.s32 %s45, %s52
      %p303 = scmp.eq.s32.totalorder %s302, 0
      %s305 = sadd.s32 %s304, 1
      %s306 = scalar_select %p303, %s304, %s305
      %p309 = pneg %p303
      %p310 = scmp.eq.s32.totalorder %s37, 3
      %p311 = por %p309, %p310
      %p312 = scmp.ne.s32.totalorder %s304, %s307
      %p313 = scmp.eq.s32.totalorder %s37, 0
      %p314 = por %p312, %p313
      %p315 = scmp.ne.s32.totalorder %s304, %s307
      %p316 = scmp.eq.s32.totalorder %s42, 3
      %p317 = por %p315, %p316
      %p318 = scmp.ne.s32.totalorder %s307, %s308
      %p319 = scmp.eq.s32.totalorder %s42, 0
      %p320 = por %p318, %p319
      %p321 = scmp.ne.s32.totalorder %s307, %s308
      %p322 = scmp.eq.s32.totalorder %s43, 3
      %p323 = por %p321, %p322
      %p325 = scmp.ne.s32.totalorder %s308, %s324
      %p326 = scmp.eq.s32.totalorder %s43, 0
      %p327 = por %p325, %p326
      %s328 = ssub.s32 %s45, %s52
      %p329 = scmp.eq.s32.totalorder %s328, 0
      %s331 = sadd.s32 %s330, 1
      %s332 = scalar_select %p329, %s330, %s331
      %p335 = pneg %p329
      %p336 = scmp.eq.s32.totalorder %s37, 3
      %p337 = por %p335, %p336
      %p338 = scmp.ne.s32.totalorder %s330, %s333
      %p339 = scmp.eq.s32.totalorder %s37, 0
      %p340 = por %p338, %p339
      %p341 = scmp.ne.s32.totalorder %s330, %s333
      %p342 = scmp.eq.s32.totalorder %s42, 3
      %p343 = por %p341, %p342
      %p344 = scmp.ne.s32.totalorder %s333, %s334
      %p345 = scmp.eq.s32.totalorder %s42, 0
      %p346 = por %p344, %p345
      %p347 = scmp.ne.s32.totalorder %s333, %s334
      %p348 = scmp.eq.s32.totalorder %s43, 3
      %p349 = por %p347, %p348
      %p351 = scmp.ne.s32.totalorder %s334, %s350
      %p352 = scmp.eq.s32.totalorder %s43, 0
      %p353 = por %p351, %p352
      %s354 = ssub.s32 %s45, %s52
      %p355 = scmp.eq.s32.totalorder %s354, 0
      %s357 = sadd.s32 %s356, 1
      %s358 = scalar_select %p355, %s356, %s357
      %p361 = pneg %p355
      %p362 = scmp.eq.s32.totalorder %s37, 3
      %p363 = por %p361, %p362
      %p364 = scmp.ne.s32.totalorder %s356, %s359
      %p365 = scmp.eq.s32.totalorder %s37, 0
      %p366 = por %p364, %p365
      %p367 = scmp.ne.s32.totalorder %s356, %s359
      %p368 = scmp.eq.s32.totalorder %s42, 3
      %p369 = por %p367, %p368
      %p370 = scmp.ne.s32.totalorder %s359, %s360
      %p371 = scmp.eq.s32.totalorder %s42, 0
      %p372 = por %p370, %p371
      %p373 = scmp.ne.s32.totalorder %s359, %s360
      %p374 = scmp.eq.s32.totalorder %s43, 3
      %p375 = por %p373, %p374
      %p377 = scmp.ne.s32.totalorder %s360, %s376
      %p378 = scmp.eq.s32.totalorder %s43, 0
      %p379 = por %p377, %p378
      %s380 = ssub.s32 %s45, %s52
      %p381 = scmp.eq.s32.totalorder %s380, 0
      %s383 = sadd.s32 %s382, 1
      %s384 = scalar_select %p381, %s382, %s383
      %p387 = pneg %p381
      %p388 = scmp.eq.s32.totalorder %s37, 3
      %p389 = por %p387, %p388
      %p390 = scmp.ne.s32.totalorder %s382, %s385
      %p391 = scmp.eq.s32.totalorder %s37, 0
      %p392 = por %p390, %p391
      %p393 = scmp.ne.s32.totalorder %s382, %s385
      %p394 = scmp.eq.s32.totalorder %s42, 3
      %p395 = por %p393, %p394
      %p396 = scmp.ne.s32.totalorder %s385, %s386
      %p397 = scmp.eq.s32.totalorder %s42, 0
      %p398 = por %p396, %p397
      %p399 = scmp.ne.s32.totalorder %s385, %s386
      %p400 = scmp.eq.s32.totalorder %s43, 3
      %p401 = por %p399, %p400
      %p403 = scmp.ne.s32.totalorder %s386, %s402
      %p404 = scmp.eq.s32.totalorder %s43, 0
      %p405 = por %p403, %p404
      %s406 = ssub.s32 %s45, %s52
      %p407 = scmp.eq.s32.totalorder %s406, 0
      %s409 = sadd.s32 %s408, 1
      %s410 = scalar_select %p407, %s408, %s409
      %p413 = pneg %p407
      %p414 = scmp.eq.s32.totalorder %s37, 3
      %p415 = por %p413, %p414
      %p416 = scmp.ne.s32.totalorder %s408, %s411
      %p417 = scmp.eq.s32.totalorder %s37, 0
      %p418 = por %p416, %p417
      %p419 = scmp.ne.s32.totalorder %s408, %s411
      %p420 = scmp.eq.s32.totalorder %s42, 3
      %p421 = por %p419, %p420
      %p422 = scmp.ne.s32.totalorder %s411, %s412
      %p423 = scmp.eq.s32.totalorder %s42, 0
      %p424 = por %p422, %p423
      %p425 = scmp.ne.s32.totalorder %s411, %s412
      %p426 = scmp.eq.s32.totalorder %s43, 3
      %p427 = por %p425, %p426
      %p429 = scmp.ne.s32.totalorder %s412, %s428
      %p430 = scmp.eq.s32.totalorder %s43, 0
      %p431 = por %p429, %p430
      %s432 = ssub.s32 %s45, %s52
      %p433 = scmp.eq.s32.totalorder %s432, 0
      %s435 = sadd.s32 %s434, 1
      %s436 = scalar_select %p433, %s434, %s435
      %p439 = pneg %p433
      %p440 = scmp.eq.s32.totalorder %s37, 3
      %p441 = por %p439, %p440
      %p442 = scmp.ne.s32.totalorder %s434, %s437
      %p443 = scmp.eq.s32.totalorder %s37, 0
      %p444 = por %p442, %p443
      %p445 = scmp.ne.s32.totalorder %s434, %s437
      %p446 = scmp.eq.s32.totalorder %s42, 3
      %p447 = por %p445, %p446
      %p448 = scmp.ne.s32.totalorder %s437, %s438
      %p449 = scmp.eq.s32.totalorder %s42, 0
      %p450 = por %p448, %p449
      %p451 = scmp.ne.s32.totalorder %s437, %s438
      %p452 = scmp.eq.s32.totalorder %s43, 3
      %p453 = por %p451, %p452
      %p455 = scmp.ne.s32.totalorder %s438, %s454
      %p456 = scmp.eq.s32.totalorder %s43, 0
      %p457 = por %p455, %p456
      %s458 = ssub.s32 %s45, %s52
      %p459 = scmp.eq.s32.totalorder %s458, 0
      %s461 = sadd.s32 %s460, 1
      %s462 = scalar_select %p459, %s460, %s461
      %p465 = pneg %p459
      %p466 = scmp.eq.s32.totalorder %s37, 3
      %p467 = por %p465, %p466
      %p468 = scmp.ne.s32.totalorder %s460, %s463
      %p469 = scmp.eq.s32.totalorder %s37, 0
      %p470 = por %p468, %p469
      %p471 = scmp.ne.s32.totalorder %s460, %s463
      %p472 = scmp.eq.s32.totalorder %s42, 3
      %p473 = por %p471, %p472
      %p474 = scmp.ne.s32.totalorder %s463, %s464
      %p475 = scmp.eq.s32.totalorder %s42, 0
      %p476 = por %p474, %p475
      %p477 = scmp.ne.s32.totalorder %s463, %s464
      %p478 = scmp.eq.s32.totalorder %s43, 3
      %p479 = por %p477, %p478
      %p481 = scmp.ne.s32.totalorder %s464, %s480
      %p482 = scmp.eq.s32.totalorder %s43, 0
      %p483 = por %p481, %p482
      %s484 = ssub.s32 %s45, %s52
      %p485 = scmp.eq.s32.totalorder %s484, 0
      %s487 = sadd.s32 %s486, 1
      %s488 = scalar_select %p485, %s486, %s487
      %p491 = pneg %p485
      %p492 = scmp.eq.s32.totalorder %s37, 3
      %p493 = por %p491, %p492
      %p494 = scmp.ne.s32.totalorder %s486, %s489
      %p495 = scmp.eq.s32.totalorder %s37, 0
      %p496 = por %p494, %p495
      %p497 = scmp.ne.s32.totalorder %s486, %s489
      %p498 = scmp.eq.s32.totalorder %s42, 3
      %p499 = por %p497, %p498
      %p500 = scmp.ne.s32.totalorder %s489, %s490
      %p501 = scmp.eq.s32.totalorder %s42, 0
      %p502 = por %p500, %p501
      %p503 = scmp.ne.s32.totalorder %s489, %s490
      %p504 = scmp.eq.s32.totalorder %s43, 3
      %p505 = por %p503, %p504
      %p507 = scmp.ne.s32.totalorder %s490, %s506
      %p508 = scmp.eq.s32.totalorder %s43, 0
      %p509 = por %p507, %p508
      %s510 = ssub.s32 %s45, %s52
      %p511 = scmp.eq.s32.totalorder %s510, 0
      %s513 = sadd.s32 %s512, 1
      %s514 = scalar_select %p511, %s512, %s513
      %p517 = pneg %p511
      %p518 = scmp.eq.s32.totalorder %s37, 3
      %p519 = por %p517, %p518
      %p520 = scmp.ne.s32.totalorder %s512, %s515
      %p521 = scmp.eq.s32.totalorder %s37, 0
      %p522 = por %p520, %p521
      %p523 = scmp.ne.s32.totalorder %s512, %s515
      %p524 = scmp.eq.s32.totalorder %s42, 3
      %p525 = por %p523, %p524
      %p526 = scmp.ne.s32.totalorder %s515, %s516
      %p527 = scmp.eq.s32.totalorder %s42, 0
      %p528 = por %p526, %p527
      %p529 = scmp.ne.s32.totalorder %s515, %s516
      %p530 = scmp.eq.s32.totalorder %s43, 3
      %p531 = por %p529, %p530
      %p533 = scmp.ne.s32.totalorder %s516, %s532
      %p534 = scmp.eq.s32.totalorder %s43, 0
      %p535 = por %p533, %p534
      %s536 = ssub.s32 %s45, %s52
      %p537 = scmp.eq.s32.totalorder %s536, 0
      %s539 = sadd.s32 %s538, 1
      %s540 = scalar_select %p537, %s538, %s539
      %p543 = pneg %p537
      %p544 = scmp.eq.s32.totalorder %s37, 3
      %p545 = por %p543, %p544
      %p546 = scmp.ne.s32.totalorder %s538, %s541
      %p547 = scmp.eq.s32.totalorder %s37, 0
      %p548 = por %p546, %p547
      %p549 = scmp.ne.s32.totalorder %s538, %s541
      %p550 = scmp.eq.s32.totalorder %s42, 3
      %p551 = por %p549, %p550
      %p552 = scmp.ne.s32.totalorder %s541, %s542
      %p553 = scmp.eq.s32.totalorder %s42, 0
      %p554 = por %p552, %p553
      %p555 = scmp.ne.s32.totalorder %s541, %s542
      %p556 = scmp.eq.s32.totalorder %s43, 3
      %p557 = por %p555, %p556
      %p559 = scmp.ne.s32.totalorder %s542, %s558
      %p560 = scmp.eq.s32.totalorder %s43, 0
      %p561 = por %p559, %p560
      %s563 = sadd.s32 %s562, 1
      %p566 = scmp.eq.s32.totalorder %s37, 3
      %p567 = scmp.ne.s32.totalorder %s562, %s564
      %p568 = scmp.eq.s32.totalorder %s37, 0
      %p569 = por %p567, %p568
      %p570 = scmp.ne.s32.totalorder %s562, %s564
      %p571 = scmp.eq.s32.totalorder %s42, 3
      %p572 = por %p570, %p571
      %p573 = scmp.ne.s32.totalorder %s564, %s565
      %p574 = scmp.eq.s32.totalorder %s42, 0
      %p575 = por %p573, %p574
      %p576 = scmp.ne.s32.totalorder %s564, %s565
      %p577 = scmp.eq.s32.totalorder %s43, 3
      %p578 = por %p576, %p577
      %p580 = scmp.ne.s32.totalorder %s565, %s579
      %p581 = scmp.eq.s32.totalorder %s43, 0
      %p582 = por %p580, %p581
      %s584 = sadd.s32 %s583, 1
      %p587 = scmp.eq.s32.totalorder %s37, 3
      %p588 = scmp.ne.s32.totalorder %s583, %s585
      %p589 = scmp.eq.s32.totalorder %s37, 0
      %p590 = por %p588, %p589
      %p591 = scmp.ne.s32.totalorder %s583, %s585
      %p592 = scmp.eq.s32.totalorder %s42, 3
      %p593 = por %p591, %p592
      %p594 = scmp.ne.s32.totalorder %s585, %s586
      %p595 = scmp.eq.s32.totalorder %s42, 0
      %p596 = por %p594, %p595
      %p597 = scmp.ne.s32.totalorder %s585, %s586
      %p598 = scmp.eq.s32.totalorder %s43, 3
      %p599 = por %p597, %p598
      %p601 = scmp.ne.s32.totalorder %s586, %s600
      %p602 = scmp.eq.s32.totalorder %s43, 0
      %p603 = por %p601, %p602
      %s604 = ssub.s32 %s44, %s56
      %p605 = scmp.eq.s32.totalorder %s604, 0
      %s607 = sadd.s32 %s606, 1
      %s608 = scalar_select %p605, %s606, %s607
      %p611 = pneg %p605
      %p612 = scmp.eq.s32.totalorder %s37, 3
      %p613 = por %p611, %p612
      %p614 = scmp.ne.s32.totalorder %s606, %s609
      %p615 = scmp.eq.s32.totalorder %s37, 0
      %p616 = por %p614, %p615
      %p617 = scmp.ne.s32.totalorder %s606, %s609
      %p618 = scmp.eq.s32.totalorder %s42, 3
      %p619 = por %p617, %p618
      %p620 = scmp.ne.s32.totalorder %s609, %s610
      %p621 = scmp.eq.s32.totalorder %s42, 0
      %p622 = por %p620, %p621
      %p623 = scmp.ne.s32.totalorder %s609, %s610
      %p624 = scmp.eq.s32.totalorder %s43, 3
      %p625 = por %p623, %p624
      %p627 = scmp.ne.s32.totalorder %s610, %s626
      %p628 = scmp.eq.s32.totalorder %s43, 0
      %p629 = por %p627, %p628
      %s630 = ssub.s32 %s44, %s56
      %p631 = scmp.eq.s32.totalorder %s630, 0
      %s633 = sadd.s32 %s632, 1
      %s634 = scalar_select %p631, %s632, %s633
      %p637 = pneg %p631
      %p638 = scmp.eq.s32.totalorder %s37, 3
      %p639 = por %p637, %p638
      %p640 = scmp.ne.s32.totalorder %s632, %s635
      %p641 = scmp.eq.s32.totalorder %s37, 0
      %p642 = por %p640, %p641
      %p643 = scmp.ne.s32.totalorder %s632, %s635
      %p644 = scmp.eq.s32.totalorder %s42, 3
      %p645 = por %p643, %p644
      %p646 = scmp.ne.s32.totalorder %s635, %s636
      %p647 = scmp.eq.s32.totalorder %s42, 0
      %p648 = por %p646, %p647
      %p649 = scmp.ne.s32.totalorder %s635, %s636
      %p650 = scmp.eq.s32.totalorder %s43, 3
      %p651 = por %p649, %p650
      %p653 = scmp.ne.s32.totalorder %s636, %s652
      %p654 = scmp.eq.s32.totalorder %s43, 0
      %p655 = por %p653, %p654
      %s656 = ssub.s32 %s44, %s56
      %p657 = scmp.eq.s32.totalorder %s656, 0
      %s659 = sadd.s32 %s658, 1
      %s660 = scalar_select %p657, %s658, %s659
      %p663 = pneg %p657
      %p664 = scmp.eq.s32.totalorder %s37, 3
      %p665 = por %p663, %p664
      %p666 = scmp.ne.s32.totalorder %s658, %s661
      %p667 = scmp.eq.s32.totalorder %s37, 0
      %p668 = por %p666, %p667
      %p669 = scmp.ne.s32.totalorder %s658, %s661
      %p670 = scmp.eq.s32.totalorder %s42, 3
      %p671 = por %p669, %p670
      %p672 = scmp.ne.s32.totalorder %s661, %s662
      %p673 = scmp.eq.s32.totalorder %s42, 0
      %p674 = por %p672, %p673
      %p675 = scmp.ne.s32.totalorder %s661, %s662
      %p676 = scmp.eq.s32.totalorder %s43, 3
      %p677 = por %p675, %p676
      %p679 = scmp.ne.s32.totalorder %s662, %s678
      %p680 = scmp.eq.s32.totalorder %s43, 0
      %p681 = por %p679, %p680
      %p682 = scmp.le.s32.totalorder 1, %s37
      %p683 = scmp.lt.s32.totalorder %s37, 5
      %p684 = pnand %p682, %p683
      %p685 = pneg %p684
      // Predicated region
      $region9: #{tpu_custom_call.1} parent=5 // pred_check
        _
      $region10: #{tpu_custom_call.1} parent=5 // pred_check_branch
        %687 = sbr.rel (%p684) target = $region12
      $region11: #{tpu_custom_call.1} parent=5 // pred_region
        %s688 = ssub.s32 %s37, 1
        // Predicated region
        $region13: #{tpu_custom_call.1} parent=11 // pred_check
          %p689 = pneg %p96
        $region14: #{tpu_custom_call.1} parent=11 // pred_check_branch
          %691 = sbr.rel (%p689) target = $region16
        $region15: #{tpu_custom_call.1} parent=11 // pred_region
          _
        $region16: #{tpu_custom_call.1} parent=11 // pred_fallthru
          _
        // Predicated region
        $region17: #{tpu_custom_call.1} parent=11 // pred_check
          %p692 = pneg %p117
        $region18: #{tpu_custom_call.1} parent=11 // pred_check_branch
          %694 = sbr.rel (%p692) target = $region20
        $region19: #{tpu_custom_call.1} parent=11 // pred_region
          _
        $region20: #{tpu_custom_call.1} parent=11 // pred_fallthru
          _
        // Predicated region
        $region21: #{tpu_custom_call.1} parent=11 // pred_check
          %p695 = pneg %p138
        $region22: #{tpu_custom_call.1} parent=11 // pred_check_branch
          %697 = sbr.rel (%p695) target = $region24
        $region23: #{tpu_custom_call.1} parent=11 // pred_region
          _
        $region24: #{tpu_custom_call.1} parent=11 // pred_fallthru
          _
        // Predicated region
        $region25: #{tpu_custom_call.1} parent=11 // pred_check
          %p698 = pneg %p575
        $region26: #{tpu_custom_call.1} parent=11 // pred_check_branch
          %700 = sbr.rel (%p698) target = $region28
        $region27: #{tpu_custom_call.1} parent=11 // pred_region
          _
        $region28: #{tpu_custom_call.1} parent=11 // pred_fallthru
          _
        // Predicated region
        $region29: #{tpu_custom_call.1} parent=11 // pred_check
          %p701 = pneg %p596
        $region30: #{tpu_custom_call.1} parent=11 // pred_check_branch
          %703 = sbr.rel (%p701) target = $region32
        $region31: #{tpu_custom_call.1} parent=11 // pred_region
          _
        $region32: #{tpu_custom_call.1} parent=11 // pred_fallthru
          _
      $region12: #{tpu_custom_call.1} parent=5 // pred_fallthru
        _
      %p704 = scmp.lt.s32.totalorder %s37, 4
      // Predicated region
      $region33: #{tpu_custom_call.1} parent=5 // pred_check
        %p705 = pneg %p704
      $region34: #{tpu_custom_call.1} parent=5 // pred_check_branch
        %707 = sbr.rel (%p705) target = $region36
      $region35: #{tpu_custom_call.1} parent=5 // pred_region
        // Predicated region
        $region37: #{tpu_custom_call.1} parent=35 // pred_check
          %p708 = pneg %p69
        $region38: #{tpu_custom_call.1} parent=35 // pred_check_branch
          %710 = sbr.rel (%p708) target = $region40
        $region39: #{tpu_custom_call.1} parent=35 // pred_region
          %p711 = scmp.lt.s32.totalorder %s44, 1
          %s712 = scalar_select %p711, %s44, 1
          %s713 = smul.addr %s712, 8
          %s714 = scalar_lea.vmem %s0, %s713
        $region40: #{tpu_custom_call.1} parent=35 // pred_fallthru
          _
        // Predicated region
        $region41: #{tpu_custom_call.1} parent=35 // pred_check
          %p715 = pneg %p158
        $region42: #{tpu_custom_call.1} parent=35 // pred_check_branch
          %717 = sbr.rel (%p715) target = $region44
        $region43: #{tpu_custom_call.1} parent=35 // pred_region
          %p718 = scmp.lt.s32.totalorder %s45, 1
          %s719 = scalar_select %p718, %s45, 1
          %s720 = smul.addr %s719, 32
          %s721 = smul.addr %s720, 4
          %s722 = scalar_lea.vmem %s4, %s721
        $region44: #{tpu_custom_call.1} parent=35 // pred_fallthru
          _
        // Predicated region
        $region45: #{tpu_custom_call.1} parent=35 // pred_check
          %p723 = pneg %p184
        $region46: #{tpu_custom_call.1} parent=35 // pred_check_branch
          %725 = sbr.rel (%p723) target = $region48
        $region47: #{tpu_custom_call.1} parent=35 // pred_region
          %p726 = scmp.lt.s32.totalorder %s45, 1
          %s727 = scalar_select %p726, %s45, 1
          %s728 = smul.addr %s727, 32
          %s729 = smul.addr %s728, 4
          %s730 = scalar_lea.vmem %s5, %s729
        $region48: #{tpu_custom_call.1} parent=35 // pred_fallthru
          _
        // Predicated region
        $region49: #{tpu_custom_call.1} parent=35 // pred_check
          %p731 = pneg %p210
        $region50: #{tpu_custom_call.1} parent=35 // pred_check_branch
          %733 = sbr.rel (%p731) target = $region52
        $region51: #{tpu_custom_call.1} parent=35 // pred_region
          %p734 = scmp.lt.s32.totalorder %s45, 1
          %s735 = scalar_select %p734, %s45, 1
          %s736 = smul.addr %s735, 32
          %s737 = smul.addr %s736, 4
          %s738 = scalar_lea.vmem %s6, %s737
        $region52: #{tpu_custom_call.1} parent=35 // pred_fallthru
          _
        // Predicated region
        $region53: #{tpu_custom_call.1} parent=35 // pred_check
          %p739 = pneg %p236
        $region54: #{tpu_custom_call.1} parent=35 // pred_check_branch
          %741 = sbr.rel (%p739) target = $region56
        $region55: #{tpu_custom_call.1} parent=35 // pred_region
          %p742 = scmp.lt.s32.totalorder %s45, 1
          %s743 = scalar_select %p742, %s45, 1
          %s744 = smul.addr %s743, 4
          %s745 = scalar_lea.vmem %s7, %s744
        $region56: #{tpu_custom_call.1} parent=35 // pred_fallthru
          _
        // Predicated region
        $region57: #{tpu_custom_call.1} parent=35 // pred_check
          %p746 = pneg %p262
        $region58: #{tpu_custom_call.1} parent=35 // pred_check_branch
          %748 = sbr.rel (%p746) target = $region60
        $region59: #{tpu_custom_call.1} parent=35 // pred_region
          %p749 = scmp.lt.s32.totalorder %s45, 1
          %s750 = scalar_select %p749, %s45, 1
          %s751 = smul.addr %s750, 4
          %s752 = scalar_lea.vmem %s8, %s751
        $region60: #{tpu_custom_call.1} parent=35 // pred_fallthru
          _
        // Predicated region
        $region61: #{tpu_custom_call.1} parent=35 // pred_check
          %p753 = pneg %p288
        $region62: #{tpu_custom_call.1} parent=35 // pred_check_branch
          %755 = sbr.rel (%p753) target = $region64
        $region63: #{tpu_custom_call.1} parent=35 // pred_region
          %p756 = scmp.lt.s32.totalorder %s45, 1
          %s757 = scalar_select %p756, %s45, 1
          %s758 = smul.addr %s757, 4
          %s759 = scalar_lea.vmem %s9, %s758
        $region64: #{tpu_custom_call.1} parent=35 // pred_fallthru
          _
        // Predicated region
        $region65: #{tpu_custom_call.1} parent=35 // pred_check
          %p760 = pneg %p314
        $region66: #{tpu_custom_call.1} parent=35 // pred_check_branch
          %762 = sbr.rel (%p760) target = $region68
        $region67: #{tpu_custom_call.1} parent=35 // pred_region
          %p763 = scmp.lt.s32.totalorder %s45, 1
          %s764 = scalar_select %p763, %s45, 1
          %s765 = smul.addr %s764, 8
          %s766 = smul.addr %s765, 4
          %s767 = scalar_lea.vmem %s10, %s766
        $region68: #{tpu_custom_call.1} parent=35 // pred_fallthru
          _
        // Predicated region
        $region69: #{tpu_custom_call.1} parent=35 // pred_check
          %p768 = pneg %p340
        $region70: #{tpu_custom_call.1} parent=35 // pred_check_branch
          %770 = sbr.rel (%p768) target = $region72
        $region71: #{tpu_custom_call.1} parent=35 // pred_region
          %p771 = scmp.lt.s32.totalorder %s45, 1
          %s772 = scalar_select %p771, %s45, 1
          %s773 = scalar_lea.vmem %s11, %s772
        $region72: #{tpu_custom_call.1} parent=35 // pred_fallthru
          _
        // Predicated region
        $region73: #{tpu_custom_call.1} parent=35 // pred_check
          %p774 = pneg %p366
        $region74: #{tpu_custom_call.1} parent=35 // pred_check_branch
          %776 = sbr.rel (%p774) target = $region76
        $region75: #{tpu_custom_call.1} parent=35 // pred_region
          %p777 = scmp.lt.s32.totalorder %s45, 1
          %s778 = scalar_select %p777, %s45, 1
          %s779 = scalar_lea.vmem %s12, %s778
        $region76: #{tpu_custom_call.1} parent=35 // pred_fallthru
          _
        // Predicated region
        $region77: #{tpu_custom_call.1} parent=35 // pred_check
          %p780 = pneg %p392
        $region78: #{tpu_custom_call.1} parent=35 // pred_check_branch
          %782 = sbr.rel (%p780) target = $region80
        $region79: #{tpu_custom_call.1} parent=35 // pred_region
          %p783 = scmp.lt.s32.totalorder %s45, 1
          %s784 = scalar_select %p783, %s45, 1
          %s785 = scalar_lea.vmem %s13, %s784
        $region80: #{tpu_custom_call.1} parent=35 // pred_fallthru
          _
        // Predicated region
        $region81: #{tpu_custom_call.1} parent=35 // pred_check
          %p786 = pneg %p418
        $region82: #{tpu_custom_call.1} parent=35 // pred_check_branch
          %788 = sbr.rel (%p786) target = $region84
        $region83: #{tpu_custom_call.1} parent=35 // pred_region
          %p789 = scmp.lt.s32.totalorder %s45, 1
          %s790 = scalar_select %p789, %s45, 1
          %s791 = smul.addr %s790, 16
          %s792 = smul.addr %s791, 4
          %s793 = scalar_lea.vmem %s14, %s792
        $region84: #{tpu_custom_call.1} parent=35 // pred_fallthru
          _
        // Predicated region
        $region85: #{tpu_custom_call.1} parent=35 // pred_check
          %p794 = pneg %p444
        $region86: #{tpu_custom_call.1} parent=35 // pred_check_branch
          %796 = sbr.rel (%p794) target = $region88
        $region87: #{tpu_custom_call.1} parent=35 // pred_region
          %p797 = scmp.lt.s32.totalorder %s45, 1
          %s798 = scalar_select %p797, %s45, 1
          %s799 = smul.addr %s798, 2
          %s800 = scalar_lea.vmem %s15, %s799
        $region88: #{tpu_custom_call.1} parent=35 // pred_fallthru
          _
        // Predicated region
        $region89: #{tpu_custom_call.1} parent=35 // pred_check
          %p801 = pneg %p470
        $region90: #{tpu_custom_call.1} parent=35 // pred_check_branch
          %803 = sbr.rel (%p801) target = $region92
        $region91: #{tpu_custom_call.1} parent=35 // pred_region
          %p804 = scmp.lt.s32.totalorder %s45, 1
          %s805 = scalar_select %p804, %s45, 1
          %s806 = smul.addr %s805, 32
          %s807 = smul.addr %s806, 4
          %s808 = scalar_lea.vmem %s16, %s807
        $region92: #{tpu_custom_call.1} parent=35 // pred_fallthru
          _
        // Predicated region
        $region93: #{tpu_custom_call.1} parent=35 // pred_check
          %p809 = pneg %p496
        $region94: #{tpu_custom_call.1} parent=35 // pred_check_branch
          %811 = sbr.rel (%p809) target = $region96
        $region95: #{tpu_custom_call.1} parent=35 // pred_region
          %p812 = scmp.lt.s32.totalorder %s45, 1
          %s813 = scalar_select %p812, %s45, 1
          %s814 = scalar_lea.vmem %s17, %s813
        $region96: #{tpu_custom_call.1} parent=35 // pred_fallthru
          _
        // Predicated region
        $region97: #{tpu_custom_call.1} parent=35 // pred_check
          %p815 = pneg %p522
        $region98: #{tpu_custom_call.1} parent=35 // pred_check_branch
          %817 = sbr.rel (%p815) target = $region100
        $region99: #{tpu_custom_call.1} parent=35 // pred_region
          %p818 = scmp.lt.s32.totalorder %s45, 1
          %s819 = scalar_select %p818, %s45, 1
          %s820 = scalar_lea.vmem %s18, %s819
        $region100: #{tpu_custom_call.1} parent=35 // pred_fallthru
          _
        // Predicated region
        $region101: #{tpu_custom_call.1} parent=35 // pred_check
          %p821 = pneg %p548
        $region102: #{tpu_custom_call.1} parent=35 // pred_check_branch
          %823 = sbr.rel (%p821) target = $region104
        $region103: #{tpu_custom_call.1} parent=35 // pred_region
          %p824 = scmp.lt.s32.totalorder %s45, 1
          %s825 = scalar_select %p824, %s45, 1
          %s826 = scalar_lea.vmem %s19, %s825
        $region104: #{tpu_custom_call.1} parent=35 // pred_fallthru
          _
      $region36: #{tpu_custom_call.1} parent=5 // pred_fallthru
        _
      %p827 = scmp.le.s32.totalorder 1, %s37
      %p828 = scmp.lt.s32.totalorder %s37, 5
      %p829 = pnand %p827, %p828
      %p830 = pneg %p829
      // Predicated region
      $region105: #{tpu_custom_call.1} parent=5 // pred_check
        _
      $region106: #{tpu_custom_call.1} parent=5 // pred_check_branch
        %832 = sbr.rel (%p829) target = $region108
      $region107: #{tpu_custom_call.1} parent=5 // pred_region
        %s833 = ssub.s32 %s37, 1
        %p834 = scmp.lt.s32.totalorder %s46, 1
        %s835 = scalar_select %p834, %s46, 1
        %s836 = smul.addr %s835, 8
        %s837 = scalar_lea.vmem %s0, %s836
        %p838 = pneg %p75
        %p839 = pneg %p72
        %p840 = pneg %p96
        %p841 = pneg %p93
        %p842 = pneg %p117
        %p843 = pneg %p114
        %p844 = pneg %p138
        %p845 = pneg %p135
        %p846 = scmp.lt.s32.totalorder %s47, 1
        %s847 = scalar_select %p846, %s47, 1
        %s848 = smul.addr %s847, 32
        %s849 = smul.addr %s848, 4
        %s850 = scalar_lea.vmem %s4, %s849
        %p851 = pneg %p164
        %p852 = pneg %p161
        %p853 = scmp.lt.s32.totalorder %s47, 1
        %s854 = scalar_select %p853, %s47, 1
        %s855 = smul.addr %s854, 32
        %s856 = smul.addr %s855, 4
        %s857 = scalar_lea.vmem %s5, %s856
        %p858 = pneg %p190
        %p859 = pneg %p187
        %p860 = scmp.lt.s32.totalorder %s47, 1
        %s861 = scalar_select %p860, %s47, 1
        %s862 = smul.addr %s861, 32
        %s863 = smul.addr %s862, 4
        %s864 = scalar_lea.vmem %s6, %s863
        %p865 = pneg %p216
        %p866 = pneg %p213
        %p867 = scmp.lt.s32.totalorder %s47, 1
        %s868 = scalar_select %p867, %s47, 1
        %s869 = smul.addr %s868, 4
        %s870 = scalar_lea.vmem %s7, %s869
        %p871 = pneg %p242
        %p872 = pneg %p239
        %p873 = scmp.lt.s32.totalorder %s47, 1
        %s874 = scalar_select %p873, %s47, 1
        %s875 = smul.addr %s874, 4
        %s876 = scalar_lea.vmem %s8, %s875
        %p877 = pneg %p268
        %p878 = pneg %p265
        %p879 = scmp.lt.s32.totalorder %s47, 1
        %s880 = scalar_select %p879, %s47, 1
        %s881 = smul.addr %s880, 4
        %s882 = scalar_lea.vmem %s9, %s881
        %p883 = pneg %p294
        %p884 = pneg %p291
        %p885 = scmp.lt.s32.totalorder %s47, 1
        %s886 = scalar_select %p885, %s47, 1
        %s887 = smul.addr %s886, 8
        %s888 = smul.addr %s887, 4
        %s889 = scalar_lea.vmem %s10, %s888
        %p890 = pneg %p320
        %p891 = pneg %p317
        %p892 = scmp.lt.s32.totalorder %s47, 1
        %s893 = scalar_select %p892, %s47, 1
        %s894 = scalar_lea.vmem %s11, %s893
        %p895 = pneg %p346
        %p896 = pneg %p343
        %p897 = scmp.lt.s32.totalorder %s47, 1
        %s898 = scalar_select %p897, %s47, 1
        %s899 = scalar_lea.vmem %s12, %s898
        %p900 = pneg %p372
        %p901 = pneg %p369
        %p902 = scmp.lt.s32.totalorder %s47, 1
        %s903 = scalar_select %p902, %s47, 1
        %s904 = scalar_lea.vmem %s13, %s903
        %p905 = pneg %p398
        %p906 = pneg %p395
        %p907 = scmp.lt.s32.totalorder %s47, 1
        %s908 = scalar_select %p907, %s47, 1
        %s909 = smul.addr %s908, 16
        %s910 = smul.addr %s909, 4
        %s911 = scalar_lea.vmem %s14, %s910
        %p912 = pneg %p424
        %p913 = pneg %p421
        %p914 = scmp.lt.s32.totalorder %s47, 1
        %s915 = scalar_select %p914, %s47, 1
        %s916 = smul.addr %s915, 2
        %s917 = scalar_lea.vmem %s15, %s916
        %p918 = pneg %p450
        %p919 = pneg %p447
        %p920 = scmp.lt.s32.totalorder %s47, 1
        %s921 = scalar_select %p920, %s47, 1
        %s922 = smul.addr %s921, 32
        %s923 = smul.addr %s922, 4
        %s924 = scalar_lea.vmem %s16, %s923
        %p925 = pneg %p476
        %p926 = pneg %p473
        %p927 = scmp.lt.s32.totalorder %s47, 1
        %s928 = scalar_select %p927, %s47, 1
        %s929 = scalar_lea.vmem %s17, %s928
        %p930 = pneg %p502
        %p931 = pneg %p499
        %p932 = scmp.lt.s32.totalorder %s47, 1
        %s933 = scalar_select %p932, %s47, 1
        %s934 = scalar_lea.vmem %s18, %s933
        %p935 = pneg %p528
        %p936 = pneg %p525
        %p937 = scmp.lt.s32.totalorder %s47, 1
        %s938 = scalar_select %p937, %s47, 1
        %s939 = scalar_lea.vmem %s19, %s938
        %p940 = pneg %p554
        %p941 = pneg %p551
        %p942 = pneg %p575
        %p943 = pneg %p572
        %p944 = pneg %p596
        %p945 = pneg %p593
        %p946 = pneg %p622
        %p947 = pneg %p619
        %s948 = sand.u32 %s609, 1
        %s949 = scalar_lea.sflag [#allocation4], %s948
        %s950 = sand.u32 %s609, 1
        %s951 = smul.addr %s950, 8
        %s952 = scalar_lea.vmem [#allocation3], %s951
        %p953 = pneg %p648
        %p954 = pneg %p645
        %s955 = sand.u32 %s42, 1
        %s956 = scalar_lea.sflag [#allocation6], %s955
        %s957 = sand.u32 %s635, 1
        %s958 = scalar_lea.vmem [#allocation5], %s957
        %p959 = pneg %p674
        %p960 = pneg %p671
        %s961 = sand.u32 %s42, 1
        %s962 = scalar_lea.sflag [#allocation6], %s961
        %s963 = sand.u32 %s661, 1
        %s964 = scalar_lea.vmem [#allocation7], %s963
        %p965 = scmp.lt.s32.totalorder %s46, 1
        %s966 = scalar_select %p965, %s46, 1
        %s967 = smul.addr %s966, 8
        %s968 = scalar_lea.vmem %s0, %s967
        %p969 = scmp.lt.s32.totalorder %s47, 1
        %s970 = scalar_select %p969, %s47, 1
        %s971 = smul.addr %s970, 32
        %s972 = smul.addr %s971, 4
        %s973 = scalar_lea.vmem %s4, %s972
        %p974 = scmp.lt.s32.totalorder %s47, 1
        %s975 = scalar_select %p974, %s47, 1
        %s976 = smul.addr %s975, 32
        %s977 = smul.addr %s976, 4
        %s978 = scalar_lea.vmem %s5, %s977
        %p979 = scmp.lt.s32.totalorder %s47, 1
        %s980 = scalar_select %p979, %s47, 1
        %s981 = smul.addr %s980, 32
        %s982 = smul.addr %s981, 4
        %s983 = scalar_lea.vmem %s6, %s982
        %p984 = scmp.lt.s32.totalorder %s47, 1
        %s985 = scalar_select %p984, %s47, 1
        %s986 = smul.addr %s985, 4
        %s987 = scalar_lea.vmem %s7, %s986
        %p988 = scmp.lt.s32.totalorder %s47, 1
        %s989 = scalar_select %p988, %s47, 1
        %s990 = smul.addr %s989, 4
        %s991 = scalar_lea.vmem %s8, %s990
        %p992 = scmp.lt.s32.totalorder %s47, 1
        %s993 = scalar_select %p992, %s47, 1
        %s994 = smul.addr %s993, 4
        %s995 = scalar_lea.vmem %s9, %s994
        %p996 = scmp.lt.s32.totalorder %s47, 1
        %s997 = scalar_select %p996, %s47, 1
        %s998 = smul.addr %s997, 8
        %s999 = smul.addr %s998, 4
        %s1000 = scalar_lea.vmem %s10, %s999
        %p1001 = scmp.lt.s32.totalorder %s47, 1
        %s1002 = scalar_select %p1001, %s47, 1
        %s1003 = scalar_lea.vmem %s11, %s1002
        %p1004 = scmp.lt.s32.totalorder %s47, 1
        %s1005 = scalar_select %p1004, %s47, 1
        %s1006 = scalar_lea.vmem %s12, %s1005
        %p1007 = scmp.lt.s32.totalorder %s47, 1
        %s1008 = scalar_select %p1007, %s47, 1
        %s1009 = scalar_lea.vmem %s13, %s1008
        %p1010 = scmp.lt.s32.totalorder %s47, 1
        %s1011 = scalar_select %p1010, %s47, 1
        %s1012 = smul.addr %s1011, 16
        %s1013 = smul.addr %s1012, 4
        %s1014 = scalar_lea.vmem %s14, %s1013
        %p1015 = scmp.lt.s32.totalorder %s47, 1
        %s1016 = scalar_select %p1015, %s47, 1
        %s1017 = smul.addr %s1016, 2
        %s1018 = scalar_lea.vmem %s15, %s1017
        %p1019 = scmp.lt.s32.totalorder %s47, 1
        %s1020 = scalar_select %p1019, %s47, 1
        %s1021 = smul.addr %s1020, 32
        %s1022 = smul.addr %s1021, 4
        %s1023 = scalar_lea.vmem %s16, %s1022
        %p1024 = scmp.lt.s32.totalorder %s47, 1
        %s1025 = scalar_select %p1024, %s47, 1
        %s1026 = scalar_lea.vmem %s17, %s1025
        %p1027 = scmp.lt.s32.totalorder %s47, 1
        %s1028 = scalar_select %p1027, %s47, 1
        %s1029 = scalar_lea.vmem %s18, %s1028
        %p1030 = scmp.lt.s32.totalorder %s47, 1
        %s1031 = scalar_select %p1030, %s47, 1
        %s1032 = scalar_lea.vmem %s19, %s1031
        %p1034 = scmp.eq.s32.totalorder %s47, 0
        // Predicated region
        $region109: #{tpu_custom_call.1} parent=107 // pred_check
          %p1035 = pneg %p1034
        $region110: #{tpu_custom_call.1} parent=107 // pred_check_branch
          %1037 = sbr.rel (%p1035) target = $region112
        $region111: #{tpu_custom_call.1} parent=107 // pred_region
          %v1038 = vld [vmem:[%s968] sm:$0xff]
          %v1039 = vpack.c.bf16 %v1038, %v1038
          %v1040 = vld [vmem:[%s1] sm:$0xf]
          %v1041 = vld [vmem:[%s1 + $0x4] sm:$0xf]
          %v1042 = vld [vmem:[%s1 + $0x8] sm:$0xf]
          %v1043 = vld [vmem:[%s1 + $0xc] sm:$0xf]
          %v1044 = vld [vmem:[%s2] sm:$0x1]
          %v1046 = vlaneseq
          %v1047 = vshrl.u32 %v1046, 7
          %v1048 = vsub.s32 0, %v1047
          %v1049 = vrot.slane %v1044, %v1048
          %v1055 = vunpack.c.l.b16 %v1040
          %v1056 = vunpack.c.l.b16 %v1041
          %v1057 = vunpack.c.l.b16 %v1042
          %v1058 = vunpack.c.l.b16 %v1043
          %v1059 = vpack.c.b16 %v1056, %v1055
          %v1060 = vpack.c.b16 %v1058, %v1057
          %vm1063 = vcmask 261120
          %v1065 = vsel %vm1063, %v1039, 0
          %1067 = vmatprep.subr.bf16.mxu0 0
          %1068 = vmatpush1.bf16.msra.mxu0 %v1059
          %1069 = vmatprep.subr.bf16.mxu0 0
          %1070 = vmatpush1.bf16.msra.mxu0 %v1060
          %1071 = vmatprep.subr.bf16.mxu0 0
          %1072 = vmatpush1.bf16.msra.mxu0 0
          %1073 = vmatprep.subr.bf16.mxu0 0
          %1074 = vmatpush1.bf16.msra.mxu0 0
          %1075 = vmatprep.subr.bf16.mxu0 0
          %1076 = vmatpush1.bf16.msra.mxu0 0
          %1077 = vmatprep.subr.bf16.mxu0 0
          %1078 = vmatpush1.bf16.msra.mxu0 0
          %1079 = vmatprep.subr.bf16.mxu0 0
          %1080 = vmatpush1.bf16.msra.mxu0 0
          %1081 = vmatprep.subr.bf16.mxu0 0
          %1082 = vmatpush1.bf16.msra.mxu0 0
          %1083 = vmatprep.subr.bf16.mxu0 0
          %1084 = vmatpush1.bf16.msra.mxu0 0
          %1085 = vmatprep.subr.bf16.mxu0 0
          %1086 = vmatpush1.bf16.msra.mxu0 0
          %1087 = vmatprep.subr.bf16.mxu0 0
          %1088 = vmatpush1.bf16.msra.mxu0 0
          %1089 = vmatprep.subr.bf16.mxu0 0
          %1090 = vmatpush1.bf16.msra.mxu0 0
          %1091 = vmatprep.subr.bf16.mxu0 0
          %1092 = vmatpush1.bf16.msra.mxu0 0
          %1093 = vmatprep.subr.bf16.mxu0 0
          %1094 = vmatpush1.bf16.msra.mxu0 0
          %1095 = vmatprep.subr.bf16.mxu0 0
          %1096 = vmatpush1.bf16.msra.mxu0 0
          %1097 = vmatprep.subr.bf16.mxu0 0
          %1098 = vmatpush1.bf16.msra.mxu0 0
          %1099 = vmatprep.mubr.bf16.mxu0 0
          %1100 = vmatmul.mubr.bf16.gmra.mrb[0].mxu0 %v1065
          %v1101 = vpop.f32.mrb[0].mxu0
          %v1102 = vadd.f32 %v1049, %v1101
          %v1103 = vpop.f32.mrb[0].mxu0
          %v1104 = vpop.f32.mrb[0].mxu0
          %v1105 = vpop.f32.mrb[0].mxu0
          %1106 = vdwg.mxu0
          %v1107 = vld [vmem:[%s3] sm:$0xff]
          %v1108 = vadd.f32 %v1102, %v1107
          %vm1109 = vcmask 523264
          %1110 = vst.msk [vmem:[#allocation2] sm:$0xff] %vm1109, %v1108
        $region112: #{tpu_custom_call.1} parent=107 // pred_fallthru
          _
        %v1111 = vld [vmem:[#allocation2] sm:$0xff]
        %v1112 = vpack.c.bf16 %v1111, %v1111
        %v1113 = vld [vmem:[%s973] sm:$0xf]
        %v1114 = vld [vmem:[%s973 + $0x4] sm:$0xf]
        %v1115 = vld [vmem:[%s973 + $0x8] sm:$0xf]
        %v1116 = vld [vmem:[%s973 + $0xc] sm:$0xf]
        %v1117 = vld [vmem:[%s973 + $0x10] sm:$0xf]
        %v1118 = vld [vmem:[%s973 + $0x14] sm:$0xf]
        %v1119 = vld [vmem:[%s973 + $0x18] sm:$0xf]
        %v1120 = vld [vmem:[%s973 + $0x1c] sm:$0xf]
        %v1121 = vld [vmem:[%s987] sm:$0x1]
        %v1123 = vlaneseq
        %v1124 = vshrl.u32 %v1123, 7
        %v1125 = vsub.s32 0, %v1124
        %v1126 = vrot.slane %v1121, %v1125
        %v1136 = vunpack.c.l.b16 %v1113
        %v1137 = vunpack.c.l.b16 %v1114
        %v1138 = vunpack.c.l.b16 %v1115
        %v1139 = vunpack.c.l.b16 %v1116
        %v1140 = vunpack.c.l.b16 %v1117
        %v1141 = vunpack.c.l.b16 %v1118
        %v1142 = vunpack.c.l.b16 %v1119
        %v1143 = vunpack.c.l.b16 %v1120
        %v1144 = vpack.c.b16 %v1137, %v1136
        %v1145 = vpack.c.b16 %v1139, %v1138
        %v1146 = vpack.c.b16 %v1141, %v1140
        %v1147 = vpack.c.b16 %v1143, %v1142
        %vm1152 = vcmask 523264
        %v1154 = vsel %vm1152, %v1112, 0
        %1156 = vmatprep.subr.bf16.mxu0 0
        %1157 = vmatpush1.bf16.msra.mxu0 %v1144
        %1158 = vmatprep.subr.bf16.mxu0 0
        %1159 = vmatpush1.bf16.msra.mxu0 %v1145
        %1160 = vmatprep.subr.bf16.mxu0 0
        %1161 = vmatpush1.bf16.msra.mxu0 %v1146
        %1162 = vmatprep.subr.bf16.mxu0 0
        %1163 = vmatpush1.bf16.msra.mxu0 %v1147
        %1164 = vmatprep.subr.bf16.mxu0 0
        %1165 = vmatpush1.bf16.msra.mxu0 0
        %1166 = vmatprep.subr.bf16.mxu0 0
        %1167 = vmatpush1.bf16.msra.mxu0 0
        %1168 = vmatprep.subr.bf16.mxu0 0
        %1169 = vmatpush1.bf16.msra.mxu0 0
        %1170 = vmatprep.subr.bf16.mxu0 0
        %1171 = vmatpush1.bf16.msra.mxu0 0
        %1172 = vmatprep.subr.bf16.mxu0 0
        %1173 = vmatpush1.bf16.msra.mxu0 0
        %1174 = vmatprep.subr.bf16.mxu0 0
        %1175 = vmatpush1.bf16.msra.mxu0 0
        %1176 = vmatprep.subr.bf16.mxu0 0
        %1177 = vmatpush1.bf16.msra.mxu0 0
        %1178 = vmatprep.subr.bf16.mxu0 0
        %1179 = vmatpush1.bf16.msra.mxu0 0
        %1180 = vmatprep.subr.bf16.mxu0 0
        %1181 = vmatpush1.bf16.msra.mxu0 0
        %1182 = vmatprep.subr.bf16.mxu0 0
        %1183 = vmatpush1.bf16.msra.mxu0 0
        %1184 = vmatprep.subr.bf16.mxu0 0
        %1185 = vmatpush1.bf16.msra.mxu0 0
        %1186 = vmatprep.subr.bf16.mxu0 0
        %1187 = vmatpush1.bf16.msra.mxu0 0
        %1188 = vmatprep.mubr.bf16.mxu0 0
        %1189 = vmatmul.mubr.bf16.gmra.mrb[0].mxu0 %v1154
        %v1190 = vpop.f32.mrb[0].mxu0
        %v1191 = vadd.f32 %v1126, %v1190
        %v1192 = vpop.f32.mrb[0].mxu0
        %v1193 = vpop.f32.mrb[0].mxu0
        %v1194 = vpop.f32.mrb[0].mxu0
        %1195 = vdwg.mxu0
        %v1196 = vld [vmem:[%s978] sm:$0xf]
        %v1197 = vld [vmem:[%s978 + $0x4] sm:$0xf]
        %v1198 = vld [vmem:[%s978 + $0x8] sm:$0xf]
        %v1199 = vld [vmem:[%s978 + $0xc] sm:$0xf]
        %v1200 = vld [vmem:[%s978 + $0x10] sm:$0xf]
        %v1201 = vld [vmem:[%s978 + $0x14] sm:$0xf]
        %v1202 = vld [vmem:[%s978 + $0x18] sm:$0xf]
        %v1203 = vld [vmem:[%s978 + $0x1c] sm:$0xf]
        %v1204 = vld [vmem:[%s991] sm:$0x1]
        %v1206 = vlaneseq
        %v1207 = vshrl.u32 %v1206, 7
        %v1208 = vsub.s32 0, %v1207
        %v1209 = vrot.slane %v1204, %v1208
        %v1219 = vunpack.c.l.b16 %v1196
        %v1220 = vunpack.c.l.b16 %v1197
        %v1221 = vunpack.c.l.b16 %v1198
        %v1222 = vunpack.c.l.b16 %v1199
        %v1223 = vunpack.c.l.b16 %v1200
        %v1224 = vunpack.c.l.b16 %v1201
        %v1225 = vunpack.c.l.b16 %v1202
        %v1226 = vunpack.c.l.b16 %v1203
        %v1227 = vpack.c.b16 %v1220, %v1219
        %v1228 = vpack.c.b16 %v1222, %v1221
        %v1229 = vpack.c.b16 %v1224, %v1223
        %v1230 = vpack.c.b16 %v1226, %v1225
        %1235 = vmatprep.subr.bf16.mxu0 0
        %1236 = vmatpush1.bf16.msra.mxu0 %v1227
        %1237 = vmatprep.subr.bf16.mxu0 0
        %1238 = vmatpush1.bf16.msra.mxu0 %v1228
        %1239 = vmatprep.subr.bf16.mxu0 0
        %1240 = vmatpush1.bf16.msra.mxu0 %v1229
        %1241 = vmatprep.subr.bf16.mxu0 0
        %1242 = vmatpush1.bf16.msra.mxu0 %v1230
        %1243 = vmatprep.subr.bf16.mxu0 0
        %1244 = vmatpush1.bf16.msra.mxu0 0
        %1245 = vmatprep.subr.bf16.mxu0 0
        %1246 = vmatpush1.bf16.msra.mxu0 0
        %1247 = vmatprep.subr.bf16.mxu0 0
        %1248 = vmatpush1.bf16.msra.mxu0 0
        %1249 = vmatprep.subr.bf16.mxu0 0
        %1250 = vmatpush1.bf16.msra.mxu0 0
        %1251 = vmatprep.subr.bf16.mxu0 0
        %1252 = vmatpush1.bf16.msra.mxu0 0
        %1253 = vmatprep.subr.bf16.mxu0 0
        %1254 = vmatpush1.bf16.msra.mxu0 0
        %1255 = vmatprep.subr.bf16.mxu0 0
        %1256 = vmatpush1.bf16.msra.mxu0 0
        %1257 = vmatprep.subr.bf16.mxu0 0
        %1258 = vmatpush1.bf16.msra.mxu0 0
        %1259 = vmatprep.subr.bf16.mxu0 0
        %1260 = vmatpush1.bf16.msra.mxu0 0
        %1261 = vmatprep.subr.bf16.mxu0 0
        %1262 = vmatpush1.bf16.msra.mxu0 0
        %1263 = vmatprep.subr.bf16.mxu0 0
        %1264 = vmatpush1.bf16.msra.mxu0 0
        %1265 = vmatprep.subr.bf16.mxu0 0
        %1266 = vmatpush1.bf16.msra.mxu0 0
        %1267 = vmatprep.mubr.bf16.mxu0 0
        %1268 = vmatmul.mubr.bf16.gmra.mrb[0].mxu0 %v1154
        %v1269 = vpop.f32.mrb[0].mxu0
        %v1270 = vadd.f32 %v1209, %v1269
        %v1271 = vpop.f32.mrb[0].mxu0
        %v1272 = vpop.f32.mrb[0].mxu0
        %v1273 = vpop.f32.mrb[0].mxu0
        %1274 = vdwg.mxu0
        %v1275 = vld [vmem:[%s983] sm:$0xf]
        %v1276 = vld [vmem:[%s983 + $0x4] sm:$0xf]
        %v1277 = vld [vmem:[%s983 + $0x8] sm:$0xf]
        %v1278 = vld [vmem:[%s983 + $0xc] sm:$0xf]
        %v1279 = vld [vmem:[%s983 + $0x10] sm:$0xf]
        %v1280 = vld [vmem:[%s983 + $0x14] sm:$0xf]
        %v1281 = vld [vmem:[%s983 + $0x18] sm:$0xf]
        %v1282 = vld [vmem:[%s983 + $0x1c] sm:$0xf]
        %v1283 = vld [vmem:[%s995] sm:$0x1]
        %v1285 = vlaneseq
        %v1286 = vshrl.u32 %v1285, 7
        %v1287 = vsub.s32 0, %v1286
        %v1288 = vrot.slane %v1283, %v1287
        %v1298 = vunpack.c.l.b16 %v1275
        %v1299 = vunpack.c.l.b16 %v1276
        %v1300 = vunpack.c.l.b16 %v1277
        %v1301 = vunpack.c.l.b16 %v1278
        %v1302 = vunpack.c.l.b16 %v1279
        %v1303 = vunpack.c.l.b16 %v1280
        %v1304 = vunpack.c.l.b16 %v1281
        %v1305 = vunpack.c.l.b16 %v1282
        %v1306 = vpack.c.b16 %v1299, %v1298
        %v1307 = vpack.c.b16 %v1301, %v1300
        %v1308 = vpack.c.b16 %v1303, %v1302
        %v1309 = vpack.c.b16 %v1305, %v1304
        %1314 = vmatprep.subr.bf16.mxu0 0
        %1315 = vmatpush1.bf16.msra.mxu0 %v1306
        %1316 = vmatprep.subr.bf16.mxu0 0
        %1317 = vmatpush1.bf16.msra.mxu0 %v1307
        %1318 = vmatprep.subr.bf16.mxu0 0
        %1319 = vmatpush1.bf16.msra.mxu0 %v1308
        %1320 = vmatprep.subr.bf16.mxu0 0
        %1321 = vmatpush1.bf16.msra.mxu0 %v1309
        %1322 = vmatprep.subr.bf16.mxu0 0
        %1323 = vmatpush1.bf16.msra.mxu0 0
        %1324 = vmatprep.subr.bf16.mxu0 0
        %1325 = vmatpush1.bf16.msra.mxu0 0
        %1326 = vmatprep.subr.bf16.mxu0 0
        %1327 = vmatpush1.bf16.msra.mxu0 0
        %1328 = vmatprep.subr.bf16.mxu0 0
        %1329 = vmatpush1.bf16.msra.mxu0 0
        %1330 = vmatprep.subr.bf16.mxu0 0
        %1331 = vmatpush1.bf16.msra.mxu0 0
        %1332 = vmatprep.subr.bf16.mxu0 0
        %1333 = vmatpush1.bf16.msra.mxu0 0
        %1334 = vmatprep.subr.bf16.mxu0 0
        %1335 = vmatpush1.bf16.msra.mxu0 0
        %1336 = vmatprep.subr.bf16.mxu0 0
        %1337 = vmatpush1.bf16.msra.mxu0 0
        %1338 = vmatprep.subr.bf16.mxu0 0
        %1339 = vmatpush1.bf16.msra.mxu0 0
        %1340 = vmatprep.subr.bf16.mxu0 0
        %1341 = vmatpush1.bf16.msra.mxu0 0
        %1342 = vmatprep.subr.bf16.mxu0 0
        %1343 = vmatpush1.bf16.msra.mxu0 0
        %1344 = vmatprep.subr.bf16.mxu0 0
        %1345 = vmatpush1.bf16.msra.mxu0 0
        %1346 = vmatprep.mubr.bf16.mxu0 0
        %1347 = vmatmul.mubr.bf16.gmra.mrb[0].mxu0 %v1154
        %v1348 = vpop.f32.mrb[0].mxu0
        %v1349 = vadd.f32 %v1288, %v1348
        %v1350 = vpop.f32.mrb[0].mxu0
        %v1351 = vpop.f32.mrb[0].mxu0
        %v1352 = vpop.f32.mrb[0].mxu0
        %1353 = vdwg.mxu0
        %v1354 = vpack.c.bf16 %v1191, %v1191
        %v1355 = vpack.c.bf16 %v1270, %v1270
        %v1356 = vpack.c.bf16 %v1349, %v1349
        %vm1357 = vcmask 130048
        %v1359 = vsel %vm1357, %v1354, 0
        %v1362 = vsel %vm1357, %v1355, 0
        %1364 = vmatprep.subr.bf16.mxu0 0
        %1365 = vmatpush1.bf16.xpose.msra.mxu0 %v1362
        %1366 = vmatprep.subr.bf16.mxu0 0
        %1367 = vmatpush1.bf16.xpose.msra.mxu0 0
        %1368 = vmatprep.subr.bf16.mxu0 0
        %1369 = vmatpush1.bf16.xpose.msra.mxu0 0
        %1370 = vmatprep.subr.bf16.mxu0 0
        %1371 = vmatpush1.bf16.xpose.msra.mxu0 0
        %1372 = vmatprep.subr.bf16.mxu0 0
        %1373 = vmatpush1.bf16.xpose.msra.mxu0 0
        %1374 = vmatprep.subr.bf16.mxu0 0
        %1375 = vmatpush1.bf16.xpose.msra.mxu0 0
        %1376 = vmatprep.subr.bf16.mxu0 0
        %1377 = vmatpush1.bf16.xpose.msra.mxu0 0
        %1378 = vmatprep.subr.bf16.mxu0 0
        %1379 = vmatpush1.bf16.xpose.msra.mxu0 0
        %1380 = vmatprep.subr.bf16.mxu0 0
        %1381 = vmatpush1.bf16.xpose.msra.mxu0 0
        %1382 = vmatprep.subr.bf16.mxu0 0
        %1383 = vmatpush1.bf16.xpose.msra.mxu0 0
        %1384 = vmatprep.subr.bf16.mxu0 0
        %1385 = vmatpush1.bf16.xpose.msra.mxu0 0
        %1386 = vmatprep.subr.bf16.mxu0 0
        %1387 = vmatpush1.bf16.xpose.msra.mxu0 0
        %1388 = vmatprep.subr.bf16.mxu0 0
        %1389 = vmatpush1.bf16.xpose.msra.mxu0 0
        %1390 = vmatprep.subr.bf16.mxu0 0
        %1391 = vmatpush1.bf16.xpose.msra.mxu0 0
        %1392 = vmatprep.subr.bf16.mxu0 0
        %1393 = vmatpush1.bf16.xpose.msra.mxu0 0
        %1394 = vmatprep.subr.bf16.mxu0 0
        %1395 = vmatpush1.bf16.xpose.msra.mxu0 0
        %1396 = vmatprep.mubr.bf16.mxu0 0
        %1397 = vmatmul.mubr.bf16.gmra.mrb[0].mxu0 %v1359
        %v1398 = vpop.f32.mrb[0].mxu0
        %v1399 = vadd.f32 0.0, %v1398
        %v1400 = vpop.f32.mrb[0].mxu0
        %v1401 = vpop.f32.mrb[0].mxu0
        %v1402 = vpop.f32.mrb[0].mxu0
        %1403 = vdwg.mxu0
        %v1404 = vmul.f32 %v1399, 0.25
        %vm1405 = vcmask 64512
        %v1406 = vsel %vm1405, %v1404, -inf
        %1407 = vmax.xlane.f32.xlu0 %v1406
        %v1408 = vpop.xlane.xlu0 %1407
        %v1409 = vsub.f32 %v1404, %v1408
        %v1410 = vmul.f32 %v1409, 1.442695
        %v1411 = vpow.pop %v1410
        %v1412 = vsel %vm1405, %v1411, 0.0
        %1413 = vadd.xlane.f32.xlu0 %v1412
        %v1414 = vpop.xlane.xlu0 %1413
        %v1415 = vrcp.pop %v1414
        %v1416 = vmul.f32 %v1411, %v1415
        %v1417 = vpack.c.bf16 %v1416, %v1416
        %v1419 = vsel %vm1405, %v1417, 0
        %vm1421 = vcmask 1043456
        %v1423 = vsel %vm1421, %v1356, 0
        %1425 = vmatprep.subr.bf16.mxu0 0
        %1426 = vmatpush1.bf16.msra.mxu0 %v1423
        %1427 = vmatprep.subr.bf16.mxu0 0
        %1428 = vmatpush1.bf16.msra.mxu0 0
        %1429 = vmatprep.subr.bf16.mxu0 0
        %1430 = vmatpush1.bf16.msra.mxu0 0
        %1431 = vmatprep.subr.bf16.mxu0 0
        %1432 = vmatpush1.bf16.msra.mxu0 0
        %1433 = vmatprep.subr.bf16.mxu0 0
        %1434 = vmatpush1.bf16.msra.mxu0 0
        %1435 = vmatprep.subr.bf16.mxu0 0
        %1436 = vmatpush1.bf16.msra.mxu0 0
        %1437 = vmatprep.subr.bf16.mxu0 0
        %1438 = vmatpush1.bf16.msra.mxu0 0
        %1439 = vmatprep.subr.bf16.mxu0 0
        %1440 = vmatpush1.bf16.msra.mxu0 0
        %1441 = vmatprep.subr.bf16.mxu0 0
        %1442 = vmatpush1.bf16.msra.mxu0 0
        %1443 = vmatprep.subr.bf16.mxu0 0
        %1444 = vmatpush1.bf16.msra.mxu0 0
        %1445 = vmatprep.subr.bf16.mxu0 0
        %1446 = vmatpush1.bf16.msra.mxu0 0
        %1447 = vmatprep.subr.bf16.mxu0 0
        %1448 = vmatpush1.bf16.msra.mxu0 0
        %1449 = vmatprep.subr.bf16.mxu0 0
        %1450 = vmatpush1.bf16.msra.mxu0 0
        %1451 = vmatprep.subr.bf16.mxu0 0
        %1452 = vmatpush1.bf16.msra.mxu0 0
        %1453 = vmatprep.subr.bf16.mxu0 0
        %1454 = vmatpush1.bf16.msra.mxu0 0
        %1455 = vmatprep.subr.bf16.mxu0 0
        %1456 = vmatpush1.bf16.msra.mxu0 0
        %1457 = vmatprep.mubr.bf16.mxu0 0
        %1458 = vmatmul.mubr.bf16.gmra.mrb[0].mxu0 %v1419
        %v1459 = vpop.f32.mrb[0].mxu0
        %v1460 = vadd.f32 0.0, %v1459
        %v1461 = vpop.f32.mrb[0].mxu0
        %v1462 = vpop.f32.mrb[0].mxu0
        %v1463 = vpop.f32.mrb[0].mxu0
        %1464 = vdwg.mxu0
        %v1465 = vpack.c.bf16 %v1460, %v1460
        %v1466 = vld [vmem:[%s1000] sm:$0xf]
        %v1467 = vld [vmem:[%s1000 + $0x4] sm:$0xf]
        %s1468 = scalar_lea.vmem %s973, 32
        %v1469 = vld [vmem:[%s1468] sm:$0xf]
        %v1470 = vld [vmem:[%s1468 + $0x4] sm:$0xf]
        %v1471 = vld [vmem:[%s1468 + $0x8] sm:$0xf]
        %v1472 = vld [vmem:[%s1468 + $0xc] sm:$0xf]
        %v1473 = vld [vmem:[%s1468 + $0x10] sm:$0xf]
        %v1474 = vld [vmem:[%s1468 + $0x14] sm:$0xf]
        %v1475 = vld [vmem:[%s1468 + $0x18] sm:$0xf]
        %v1476 = vld [vmem:[%s1468 + $0x1c] sm:$0xf]
        %s1477 = scalar_lea.vmem %s987, 1
        %v1478 = vld [vmem:[%s1477] sm:$0x1]
        %v1480 = vlaneseq
        %v1481 = vshrl.u32 %v1480, 7
        %v1482 = vsub.s32 0, %v1481
        %v1483 = vrot.slane %v1478, %v1482
        %v1493 = vunpack.c.l.b16 %v1469
        %v1494 = vunpack.c.l.b16 %v1470
        %v1495 = vunpack.c.l.b16 %v1471
        %v1496 = vunpack.c.l.b16 %v1472
        %v1497 = vunpack.c.l.b16 %v1473
        %v1498 = vunpack.c.l.b16 %v1474
        %v1499 = vunpack.c.l.b16 %v1475
        %v1500 = vunpack.c.l.b16 %v1476
        %v1501 = vpack.c.b16 %v1494, %v1493
        %v1502 = vpack.c.b16 %v1496, %v1495
        %v1503 = vpack.c.b16 %v1498, %v1497
        %v1504 = vpack.c.b16 %v1500, %v1499
        %1509 = vmatprep.subr.bf16.mxu0 0
        %1510 = vmatpush1.bf16.msra.mxu0 %v1501
        %1511 = vmatprep.subr.bf16.mxu0 0
        %1512 = vmatpush1.bf16.msra.mxu0 %v1502
        %1513 = vmatprep.subr.bf16.mxu0 0
        %1514 = vmatpush1.bf16.msra.mxu0 %v1503
        %1515 = vmatprep.subr.bf16.mxu0 0
        %1516 = vmatpush1.bf16.msra.mxu0 %v1504
        %1517 = vmatprep.subr.bf16.mxu0 0
        %1518 = vmatpush1.bf16.msra.mxu0 0
        %1519 = vmatprep.subr.bf16.mxu0 0
        %1520 = vmatpush1.bf16.msra.mxu0 0
        %1521 = vmatprep.subr.bf16.mxu0 0
        %1522 = vmatpush1.bf16.msra.mxu0 0
        %1523 = vmatprep.subr.bf16.mxu0 0
        %1524 = vmatpush1.bf16.msra.mxu0 0
        %1525 = vmatprep.subr.bf16.mxu0 0
        %1526 = vmatpush1.bf16.msra.mxu0 0
        %1527 = vmatprep.subr.bf16.mxu0 0
        %1528 = vmatpush1.bf16.msra.mxu0 0
        %1529 = vmatprep.subr.bf16.mxu0 0
        %1530 = vmatpush1.bf16.msra.mxu0 0
        %1531 = vmatprep.subr.bf16.mxu0 0
        %1532 = vmatpush1.bf16.msra.mxu0 0
        %1533 = vmatprep.subr.bf16.mxu0 0
        %1534 = vmatpush1.bf16.msra.mxu0 0
        %1535 = vmatprep.subr.bf16.mxu0 0
        %1536 = vmatpush1.bf16.msra.mxu0 0
        %1537 = vmatprep.subr.bf16.mxu0 0
        %1538 = vmatpush1.bf16.msra.mxu0 0
        %1539 = vmatprep.subr.bf16.mxu0 0
        %1540 = vmatpush1.bf16.msra.mxu0 0
        %1541 = vmatprep.mubr.bf16.mxu0 0
        %1542 = vmatmul.mubr.bf16.gmra.mrb[0].mxu0 %v1154
        %v1543 = vpop.f32.mrb[0].mxu0
        %v1544 = vadd.f32 %v1483, %v1543
        %v1545 = vpop.f32.mrb[0].mxu0
        %v1546 = vpop.f32.mrb[0].mxu0
        %v1547 = vpop.f32.mrb[0].mxu0
        %1548 = vdwg.mxu0
        %s1549 = scalar_lea.vmem %s978, 32
        %v1550 = vld [vmem:[%s1549] sm:$0xf]
        %v1551 = vld [vmem:[%s1549 + $0x4] sm:$0xf]
        %v1552 = vld [vmem:[%s1549 + $0x8] sm:$0xf]
        %v1553 = vld [vmem:[%s1549 + $0xc] sm:$0xf]
        %v1554 = vld [vmem:[%s1549 + $0x10] sm:$0xf]
        %v1555 = vld [vmem:[%s1549 + $0x14] sm:$0xf]
        %v1556 = vld [vmem:[%s1549 + $0x18] sm:$0xf]
        %v1557 = vld [vmem:[%s1549 + $0x1c] sm:$0xf]
        %s1558 = scalar_lea.vmem %s991, 1
        %v1559 = vld [vmem:[%s1558] sm:$0x1]
        %v1561 = vlaneseq
        %v1562 = vshrl.u32 %v1561, 7
        %v1563 = vsub.s32 0, %v1562
        %v1564 = vrot.slane %v1559, %v1563
        %v1574 = vunpack.c.l.b16 %v1550
        %v1575 = vunpack.c.l.b16 %v1551
        %v1576 = vunpack.c.l.b16 %v1552
        %v1577 = vunpack.c.l.b16 %v1553
        %v1578 = vunpack.c.l.b16 %v1554
        %v1579 = vunpack.c.l.b16 %v1555
        %v1580 = vunpack.c.l.b16 %v1556
        %v1581 = vunpack.c.l.b16 %v1557
        %v1582 = vpack.c.b16 %v1575, %v1574
        %v1583 = vpack.c.b16 %v1577, %v1576
        %v1584 = vpack.c.b16 %v1579, %v1578
        %v1585 = vpack.c.b16 %v1581, %v1580
        %1590 = vmatprep.subr.bf16.mxu0 0
        %1591 = vmatpush1.bf16.msra.mxu0 %v1582
        %1592 = vmatprep.subr.bf16.mxu0 0
        %1593 = vmatpush1.bf16.msra.mxu0 %v1583
        %1594 = vmatprep.subr.bf16.mxu0 0
        %1595 = vmatpush1.bf16.msra.mxu0 %v1584
        %1596 = vmatprep.subr.bf16.mxu0 0
        %1597 = vmatpush1.bf16.msra.mxu0 %v1585
        %1598 = vmatprep.subr.bf16.mxu0 0
        %1599 = vmatpush1.bf16.msra.mxu0 0
        %1600 = vmatprep.subr.bf16.mxu0 0
        %1601 = vmatpush1.bf16.msra.mxu0 0
        %1602 = vmatprep.subr.bf16.mxu0 0
        %1603 = vmatpush1.bf16.msra.mxu0 0
        %1604 = vmatprep.subr.bf16.mxu0 0
        %1605 = vmatpush1.bf16.msra.mxu0 0
        %1606 = vmatprep.subr.bf16.mxu0 0
        %1607 = vmatpush1.bf16.msra.mxu0 0
        %1608 = vmatprep.subr.bf16.mxu0 0
        %1609 = vmatpush1.bf16.msra.mxu0 0
        %1610 = vmatprep.subr.bf16.mxu0 0
        %1611 = vmatpush1.bf16.msra.mxu0 0
        %1612 = vmatprep.subr.bf16.mxu0 0
        %1613 = vmatpush1.bf16.msra.mxu0 0
        %1614 = vmatprep.subr.bf16.mxu0 0
        %1615 = vmatpush1.bf16.msra.mxu0 0
        %1616 = vmatprep.subr.bf16.mxu0 0
        %1617 = vmatpush1.bf16.msra.mxu0 0
        %1618 = vmatprep.subr.bf16.mxu0 0
        %1619 = vmatpush1.bf16.msra.mxu0 0
        %1620 = vmatprep.subr.bf16.mxu0 0
        %1621 = vmatpush1.bf16.msra.mxu0 0
        %1622 = vmatprep.mubr.bf16.mxu0 0
        %1623 = vmatmul.mubr.bf16.gmra.mrb[0].mxu0 %v1154
        %v1624 = vpop.f32.mrb[0].mxu0
        %v1625 = vadd.f32 %v1564, %v1624
        %v1626 = vpop.f32.mrb[0].mxu0
        %v1627 = vpop.f32.mrb[0].mxu0
        %v1628 = vpop.f32.mrb[0].mxu0
        %1629 = vdwg.mxu0
        %s1630 = scalar_lea.vmem %s983, 32
        %v1631 = vld [vmem:[%s1630] sm:$0xf]
        %v1632 = vld [vmem:[%s1630 + $0x4] sm:$0xf]
        %v1633 = vld [vmem:[%s1630 + $0x8] sm:$0xf]
        %v1634 = vld [vmem:[%s1630 + $0xc] sm:$0xf]
        %v1635 = vld [vmem:[%s1630 + $0x10] sm:$0xf]
        %v1636 = vld [vmem:[%s1630 + $0x14] sm:$0xf]
        %v1637 = vld [vmem:[%s1630 + $0x18] sm:$0xf]
        %v1638 = vld [vmem:[%s1630 + $0x1c] sm:$0xf]
        %s1639 = scalar_lea.vmem %s995, 1
        %v1640 = vld [vmem:[%s1639] sm:$0x1]
        %v1642 = vlaneseq
        %v1643 = vshrl.u32 %v1642, 7
        %v1644 = vsub.s32 0, %v1643
        %v1645 = vrot.slane %v1640, %v1644
        %v1655 = vunpack.c.l.b16 %v1631
        %v1656 = vunpack.c.l.b16 %v1632
        %v1657 = vunpack.c.l.b16 %v1633
        %v1658 = vunpack.c.l.b16 %v1634
        %v1659 = vunpack.c.l.b16 %v1635
        %v1660 = vunpack.c.l.b16 %v1636
        %v1661 = vunpack.c.l.b16 %v1637
        %v1662 = vunpack.c.l.b16 %v1638
        %v1663 = vpack.c.b16 %v1656, %v1655
        %v1664 = vpack.c.b16 %v1658, %v1657
        %v1665 = vpack.c.b16 %v1660, %v1659
        %v1666 = vpack.c.b16 %v1662, %v1661
        %1671 = vmatprep.subr.bf16.mxu0 0
        %1672 = vmatpush1.bf16.msra.mxu0 %v1663
        %1673 = vmatprep.subr.bf16.mxu0 0
        %1674 = vmatpush1.bf16.msra.mxu0 %v1664
        %1675 = vmatprep.subr.bf16.mxu0 0
        %1676 = vmatpush1.bf16.msra.mxu0 %v1665
        %1677 = vmatprep.subr.bf16.mxu0 0
        %1678 = vmatpush1.bf16.msra.mxu0 %v1666
        %1679 = vmatprep.subr.bf16.mxu0 0
        %1680 = vmatpush1.bf16.msra.mxu0 0
        %1681 = vmatprep.subr.bf16.mxu0 0
        %1682 = vmatpush1.bf16.msra.mxu0 0
        %1683 = vmatprep.subr.bf16.mxu0 0
        %1684 = vmatpush1.bf16.msra.mxu0 0
        %1685 = vmatprep.subr.bf16.mxu0 0
        %1686 = vmatpush1.bf16.msra.mxu0 0
        %1687 = vmatprep.subr.bf16.mxu0 0
        %1688 = vmatpush1.bf16.msra.mxu0 0
        %1689 = vmatprep.subr.bf16.mxu0 0
        %1690 = vmatpush1.bf16.msra.mxu0 0
        %1691 = vmatprep.subr.bf16.mxu0 0
        %1692 = vmatpush1.bf16.msra.mxu0 0
        %1693 = vmatprep.subr.bf16.mxu0 0
        %1694 = vmatpush1.bf16.msra.mxu0 0
        %1695 = vmatprep.subr.bf16.mxu0 0
        %1696 = vmatpush1.bf16.msra.mxu0 0
        %1697 = vmatprep.subr.bf16.mxu0 0
        %1698 = vmatpush1.bf16.msra.mxu0 0
        %1699 = vmatprep.subr.bf16.mxu0 0
        %1700 = vmatpush1.bf16.msra.mxu0 0
        %1701 = vmatprep.subr.bf16.mxu0 0
        %1702 = vmatpush1.bf16.msra.mxu0 0
        %1703 = vmatprep.mubr.bf16.mxu0 0
        %1704 = vmatmul.mubr.bf16.gmra.mrb[0].mxu0 %v1154
        %v1705 = vpop.f32.mrb[0].mxu0
        %v1706 = vadd.f32 %v1645, %v1705
        %v1707 = vpop.f32.mrb[0].mxu0
        %v1708 = vpop.f32.mrb[0].mxu0
        %v1709 = vpop.f32.mrb[0].mxu0
        %1710 = vdwg.mxu0
        %v1711 = vpack.c.bf16 %v1544, %v1544
        %v1712 = vpack.c.bf16 %v1625, %v1625
        %v1713 = vpack.c.bf16 %v1706, %v1706
        %v1715 = vsel %vm1357, %v1711, 0
        %v1718 = vsel %vm1357, %v1712, 0
        %1720 = vmatprep.subr.bf16.mxu0 0
        %1721 = vmatpush1.bf16.xpose.msra.mxu0 %v1718
        %1722 = vmatprep.subr.bf16.mxu0 0
        %1723 = vmatpush1.bf16.xpose.msra.mxu0 0
        %1724 = vmatprep.subr.bf16.mxu0 0
        %1725 = vmatpush1.bf16.xpose.msra.mxu0 0
        %1726 = vmatprep.subr.bf16.mxu0 0
        %1727 = vmatpush1.bf16.xpose.msra.mxu0 0
        %1728 = vmatprep.subr.bf16.mxu0 0
        %1729 = vmatpush1.bf16.xpose.msra.mxu0 0
        %1730 = vmatprep.subr.bf16.mxu0 0
        %1731 = vmatpush1.bf16.xpose.msra.mxu0 0
        %1732 = vmatprep.subr.bf16.mxu0 0
        %1733 = vmatpush1.bf16.xpose.msra.mxu0 0
        %1734 = vmatprep.subr.bf16.mxu0 0
        %1735 = vmatpush1.bf16.xpose.msra.mxu0 0
        %1736 = vmatprep.subr.bf16.mxu0 0
        %1737 = vmatpush1.bf16.xpose.msra.mxu0 0
        %1738 = vmatprep.subr.bf16.mxu0 0
        %1739 = vmatpush1.bf16.xpose.msra.mxu0 0
        %1740 = vmatprep.subr.bf16.mxu0 0
        %1741 = vmatpush1.bf16.xpose.msra.mxu0 0
        %1742 = vmatprep.subr.bf16.mxu0 0
        %1743 = vmatpush1.bf16.xpose.msra.mxu0 0
        %1744 = vmatprep.subr.bf16.mxu0 0
        %1745 = vmatpush1.bf16.xpose.msra.mxu0 0
        %1746 = vmatprep.subr.bf16.mxu0 0
        %1747 = vmatpush1.bf16.xpose.msra.mxu0 0
        %1748 = vmatprep.subr.bf16.mxu0 0
        %1749 = vmatpush1.bf16.xpose.msra.mxu0 0
        %1750 = vmatprep.subr.bf16.mxu0 0
        %1751 = vmatpush1.bf16.xpose.msra.mxu0 0
        %1752 = vmatprep.mubr.bf16.mxu0 0
        %1753 = vmatmul.mubr.bf16.gmra.mrb[0].mxu0 %v1715
        %v1754 = vpop.f32.mrb[0].mxu0
        %v1755 = vadd.f32 0.0, %v1754
        %v1756 = vpop.f32.mrb[0].mxu0
        %v1757 = vpop.f32.mrb[0].mxu0
        %v1758 = vpop.f32.mrb[0].mxu0
        %1759 = vdwg.mxu0
        %v1760 = vmul.f32 %v1755, 0.25
        %v1761 = vsel %vm1405, %v1760, -inf
        %1762 = vmax.xlane.f32.xlu0 %v1761
        %v1763 = vpop.xlane.xlu0 %1762
        %v1764 = vsub.f32 %v1760, %v1763
        %v1765 = vmul.f32 %v1764, 1.442695
        %v1766 = vpow.pop %v1765
        %v1767 = vsel %vm1405, %v1766, 0.0
        %1768 = vadd.xlane.f32.xlu0 %v1767
        %v1769 = vpop.xlane.xlu0 %1768
        %v1770 = vrcp.pop %v1769
        %v1771 = vmul.f32 %v1766, %v1770
        %v1772 = vpack.c.bf16 %v1771, %v1771
        %v1774 = vsel %vm1405, %v1772, 0
        %v1777 = vsel %vm1421, %v1713, 0
        %1779 = vmatprep.subr.bf16.mxu0 0
        %1780 = vmatpush1.bf16.msra.mxu0 %v1777
        %1781 = vmatprep.subr.bf16.mxu0 0
        %1782 = vmatpush1.bf16.msra.mxu0 0
        %1783 = vmatprep.subr.bf16.mxu0 0
        %1784 = vmatpush1.bf16.msra.mxu0 0
        %1785 = vmatprep.subr.bf16.mxu0 0
        %1786 = vmatpush1.bf16.msra.mxu0 0
        %1787 = vmatprep.subr.bf16.mxu0 0
        %1788 = vmatpush1.bf16.msra.mxu0 0
        %1789 = vmatprep.subr.bf16.mxu0 0
        %1790 = vmatpush1.bf16.msra.mxu0 0
        %1791 = vmatprep.subr.bf16.mxu0 0
        %1792 = vmatpush1.bf16.msra.mxu0 0
        %1793 = vmatprep.subr.bf16.mxu0 0
        %1794 = vmatpush1.bf16.msra.mxu0 0
        %1795 = vmatprep.subr.bf16.mxu0 0
        %1796 = vmatpush1.bf16.msra.mxu0 0
        %1797 = vmatprep.subr.bf16.mxu0 0
        %1798 = vmatpush1.bf16.msra.mxu0 0
        %1799 = vmatprep.subr.bf16.mxu0 0
        %1800 = vmatpush1.bf16.msra.mxu0 0
        %1801 = vmatprep.subr.bf16.mxu0 0
        %1802 = vmatpush1.bf16.msra.mxu0 0
        %1803 = vmatprep.subr.bf16.mxu0 0
        %1804 = vmatpush1.bf16.msra.mxu0 0
        %1805 = vmatprep.subr.bf16.mxu0 0
        %1806 = vmatpush1.bf16.msra.mxu0 0
        %1807 = vmatprep.subr.bf16.mxu0 0
        %1808 = vmatpush1.bf16.msra.mxu0 0
        %1809 = vmatprep.subr.bf16.mxu0 0
        %1810 = vmatpush1.bf16.msra.mxu0 0
        %1811 = vmatprep.mubr.bf16.mxu0 0
        %1812 = vmatmul.mubr.bf16.gmra.mrb[0].mxu0 %v1774
        %v1813 = vpop.f32.mrb[0].mxu0
        %v1814 = vadd.f32 0.0, %v1813
        %v1815 = vpop.f32.mrb[0].mxu0
        %v1816 = vpop.f32.mrb[0].mxu0
        %v1817 = vpop.f32.mrb[0].mxu0
        %1818 = vdwg.mxu0
        %v1819 = vpack.c.bf16 %v1814, %v1814
        %s1820 = scalar_lea.vmem %s1000, 8
        %v1821 = vld [vmem:[%s1820] sm:$0xf]
        %v1822 = vld [vmem:[%s1820 + $0x4] sm:$0xf]
        %v1825 = vunpack.c.l.b16 %v1821
        %v1826 = vunpack.c.l.b16 %v1822
        %v1827 = vpack.c.b16 %v1826, %v1825
        %v1830 = vsel %vm1357, %v1819, 0
        %1832 = vmatprep.subr.bf16.mxu0 0
        %1833 = vmatpush1.bf16.msra.mxu0 %v1827
        %1834 = vmatprep.subr.bf16.mxu0 0
        %1835 = vmatpush1.bf16.msra.mxu0 0
        %1836 = vmatprep.subr.bf16.mxu0 0
        %1837 = vmatpush1.bf16.msra.mxu0 0
        %1838 = vmatprep.subr.bf16.mxu0 0
        %1839 = vmatpush1.bf16.msra.mxu0 0
        %1840 = vmatprep.subr.bf16.mxu0 0
        %1841 = vmatpush1.bf16.msra.mxu0 0
        %1842 = vmatprep.subr.bf16.mxu0 0
        %1843 = vmatpush1.bf16.msra.mxu0 0
        %1844 = vmatprep.subr.bf16.mxu0 0
        %1845 = vmatpush1.bf16.msra.mxu0 0
        %1846 = vmatprep.subr.bf16.mxu0 0
        %1847 = vmatpush1.bf16.msra.mxu0 0
        %1848 = vmatprep.subr.bf16.mxu0 0
        %1849 = vmatpush1.bf16.msra.mxu0 0
        %1850 = vmatprep.subr.bf16.mxu0 0
        %1851 = vmatpush1.bf16.msra.mxu0 0
        %1852 = vmatprep.subr.bf16.mxu0 0
        %1853 = vmatpush1.bf16.msra.mxu0 0
        %1854 = vmatprep.subr.bf16.mxu0 0
        %1855 = vmatpush1.bf16.msra.mxu0 0
        %1856 = vmatprep.subr.bf16.mxu0 0
        %1857 = vmatpush1.bf16.msra.mxu0 0
        %1858 = vmatprep.subr.bf16.mxu0 0
        %1859 = vmatpush1.bf16.msra.mxu0 0
        %1860 = vmatprep.subr.bf16.mxu0 0
        %1861 = vmatpush1.bf16.msra.mxu0 0
        %1862 = vmatprep.subr.bf16.mxu0 0
        %1863 = vmatpush1.bf16.msra.mxu0 0
        %1864 = vmatprep.mubr.bf16.mxu0 0
        %1865 = vmatmul.mubr.bf16.gmra.mrb[0].mxu0 %v1830
        %v1866 = vpop.f32.mrb[0].mxu0
        %v1867 = vadd.f32 0.0, %v1866
        %v1868 = vpop.f32.mrb[0].mxu0
        %v1869 = vpop.f32.mrb[0].mxu0
        %v1870 = vpop.f32.mrb[0].mxu0
        %1871 = vdwg.mxu0
        %v1874 = vunpack.c.l.b16 %v1466
        %v1875 = vunpack.c.l.b16 %v1467
        %v1876 = vpack.c.b16 %v1875, %v1874
        %v1879 = vsel %vm1357, %v1465, 0
        %1881 = vmatprep.subr.bf16.mxu0 0
        %1882 = vmatpush1.bf16.msra.mxu0 %v1876
        %1883 = vmatprep.subr.bf16.mxu0 0
        %1884 = vmatpush1.bf16.msra.mxu0 0
        %1885 = vmatprep.subr.bf16.mxu0 0
        %1886 = vmatpush1.bf16.msra.mxu0 0
        %1887 = vmatprep.subr.bf16.mxu0 0
        %1888 = vmatpush1.bf16.msra.mxu0 0
        %1889 = vmatprep.subr.bf16.mxu0 0
        %1890 = vmatpush1.bf16.msra.mxu0 0
        %1891 = vmatprep.subr.bf16.mxu0 0
        %1892 = vmatpush1.bf16.msra.mxu0 0
        %1893 = vmatprep.subr.bf16.mxu0 0
        %1894 = vmatpush1.bf16.msra.mxu0 0
        %1895 = vmatprep.subr.bf16.mxu0 0
        %1896 = vmatpush1.bf16.msra.mxu0 0
        %1897 = vmatprep.subr.bf16.mxu0 0
        %1898 = vmatpush1.bf16.msra.mxu0 0
        %1899 = vmatprep.subr.bf16.mxu0 0
        %1900 = vmatpush1.bf16.msra.mxu0 0
        %1901 = vmatprep.subr.bf16.mxu0 0
        %1902 = vmatpush1.bf16.msra.mxu0 0
        %1903 = vmatprep.subr.bf16.mxu0 0
        %1904 = vmatpush1.bf16.msra.mxu0 0
        %1905 = vmatprep.subr.bf16.mxu0 0
        %1906 = vmatpush1.bf16.msra.mxu0 0
        %1907 = vmatprep.subr.bf16.mxu0 0
        %1908 = vmatpush1.bf16.msra.mxu0 0
        %1909 = vmatprep.subr.bf16.mxu0 0
        %1910 = vmatpush1.bf16.msra.mxu0 0
        %1911 = vmatprep.subr.bf16.mxu0 0
        %1912 = vmatpush1.bf16.msra.mxu0 0
        %1913 = vmatprep.mubr.bf16.mxu0 0
        %1914 = vmatmul.mubr.bf16.gmra.mrb[0].mxu0 %v1879
        %v1915 = vpop.f32.mrb[0].mxu0
        %v1916 = vadd.f32 %v1867, %v1915
        %v1917 = vpop.f32.mrb[0].mxu0
        %v1918 = vpop.f32.mrb[0].mxu0
        %v1919 = vpop.f32.mrb[0].mxu0
        %1920 = vdwg.mxu0
        %s1921 = scalar_lea.vmem %s973, 64
        %v1922 = vld [vmem:[%s1921] sm:$0xf]
        %v1923 = vld [vmem:[%s1921 + $0x4] sm:$0xf]
        %v1924 = vld [vmem:[%s1921 + $0x8] sm:$0xf]
        %v1925 = vld [vmem:[%s1921 + $0xc] sm:$0xf]
        %v1926 = vld [vmem:[%s1921 + $0x10] sm:$0xf]
        %v1927 = vld [vmem:[%s1921 + $0x14] sm:$0xf]
        %v1928 = vld [vmem:[%s1921 + $0x18] sm:$0xf]
        %v1929 = vld [vmem:[%s1921 + $0x1c] sm:$0xf]
        %s1930 = scalar_lea.vmem %s987, 2
        %v1931 = vld [vmem:[%s1930] sm:$0x1]
        %v1933 = vlaneseq
        %v1934 = vshrl.u32 %v1933, 7
        %v1935 = vsub.s32 0, %v1934
        %v1936 = vrot.slane %v1931, %v1935
        %v1946 = vunpack.c.l.b16 %v1922
        %v1947 = vunpack.c.l.b16 %v1923
        %v1948 = vunpack.c.l.b16 %v1924
        %v1949 = vunpack.c.l.b16 %v1925
        %v1950 = vunpack.c.l.b16 %v1926
        %v1951 = vunpack.c.l.b16 %v1927
        %v1952 = vunpack.c.l.b16 %v1928
        %v1953 = vunpack.c.l.b16 %v1929
        %v1954 = vpack.c.b16 %v1947, %v1946
        %v1955 = vpack.c.b16 %v1949, %v1948
        %v1956 = vpack.c.b16 %v1951, %v1950
        %v1957 = vpack.c.b16 %v1953, %v1952
        %1962 = vmatprep.subr.bf16.mxu0 0
        %1963 = vmatpush1.bf16.msra.mxu0 %v1954
        %1964 = vmatprep.subr.bf16.mxu0 0
        %1965 = vmatpush1.bf16.msra.mxu0 %v1955
        %1966 = vmatprep.subr.bf16.mxu0 0
        %1967 = vmatpush1.bf16.msra.mxu0 %v1956
        %1968 = vmatprep.subr.bf16.mxu0 0
        %1969 = vmatpush1.bf16.msra.mxu0 %v1957
        %1970 = vmatprep.subr.bf16.mxu0 0
        %1971 = vmatpush1.bf16.msra.mxu0 0
        %1972 = vmatprep.subr.bf16.mxu0 0
        %1973 = vmatpush1.bf16.msra.mxu0 0
        %1974 = vmatprep.subr.bf16.mxu0 0
        %1975 = vmatpush1.bf16.msra.mxu0 0
        %1976 = vmatprep.subr.bf16.mxu0 0
        %1977 = vmatpush1.bf16.msra.mxu0 0
        %1978 = vmatprep.subr.bf16.mxu0 0
        %1979 = vmatpush1.bf16.msra.mxu0 0
        %1980 = vmatprep.subr.bf16.mxu0 0
        %1981 = vmatpush1.bf16.msra.mxu0 0
        %1982 = vmatprep.subr.bf16.mxu0 0
        %1983 = vmatpush1.bf16.msra.mxu0 0
        %1984 = vmatprep.subr.bf16.mxu0 0
        %1985 = vmatpush1.bf16.msra.mxu0 0
        %1986 = vmatprep.subr.bf16.mxu0 0
        %1987 = vmatpush1.bf16.msra.mxu0 0
        %1988 = vmatprep.subr.bf16.mxu0 0
        %1989 = vmatpush1.bf16.msra.mxu0 0
        %1990 = vmatprep.subr.bf16.mxu0 0
        %1991 = vmatpush1.bf16.msra.mxu0 0
        %1992 = vmatprep.subr.bf16.mxu0 0
        %1993 = vmatpush1.bf16.msra.mxu0 0
        %1994 = vmatprep.mubr.bf16.mxu0 0
        %1995 = vmatmul.mubr.bf16.gmra.mrb[0].mxu0 %v1154
        %v1996 = vpop.f32.mrb[0].mxu0
        %v1997 = vadd.f32 %v1936, %v1996
        %v1998 = vpop.f32.mrb[0].mxu0
        %v1999 = vpop.f32.mrb[0].mxu0
        %v2000 = vpop.f32.mrb[0].mxu0
        %2001 = vdwg.mxu0
        %s2002 = scalar_lea.vmem %s978, 64
        %v2003 = vld [vmem:[%s2002] sm:$0xf]
        %v2004 = vld [vmem:[%s2002 + $0x4] sm:$0xf]
        %v2005 = vld [vmem:[%s2002 + $0x8] sm:$0xf]
        %v2006 = vld [vmem:[%s2002 + $0xc] sm:$0xf]
        %v2007 = vld [vmem:[%s2002 + $0x10] sm:$0xf]
        %v2008 = vld [vmem:[%s2002 + $0x14] sm:$0xf]
        %v2009 = vld [vmem:[%s2002 + $0x18] sm:$0xf]
        %v2010 = vld [vmem:[%s2002 + $0x1c] sm:$0xf]
        %s2011 = scalar_lea.vmem %s991, 2
        %v2012 = vld [vmem:[%s2011] sm:$0x1]
        %v2014 = vlaneseq
        %v2015 = vshrl.u32 %v2014, 7
        %v2016 = vsub.s32 0, %v2015
        %v2017 = vrot.slane %v2012, %v2016
        %v2027 = vunpack.c.l.b16 %v2003
        %v2028 = vunpack.c.l.b16 %v2004
        %v2029 = vunpack.c.l.b16 %v2005
        %v2030 = vunpack.c.l.b16 %v2006
        %v2031 = vunpack.c.l.b16 %v2007
        %v2032 = vunpack.c.l.b16 %v2008
        %v2033 = vunpack.c.l.b16 %v2009
        %v2034 = vunpack.c.l.b16 %v2010
        %v2035 = vpack.c.b16 %v2028, %v2027
        %v2036 = vpack.c.b16 %v2030, %v2029
        %v2037 = vpack.c.b16 %v2032, %v2031
        %v2038 = vpack.c.b16 %v2034, %v2033
        %2043 = vmatprep.subr.bf16.mxu0 0
        %2044 = vmatpush1.bf16.msra.mxu0 %v2035
        %2045 = vmatprep.subr.bf16.mxu0 0
        %2046 = vmatpush1.bf16.msra.mxu0 %v2036
        %2047 = vmatprep.subr.bf16.mxu0 0
        %2048 = vmatpush1.bf16.msra.mxu0 %v2037
        %2049 = vmatprep.subr.bf16.mxu0 0
        %2050 = vmatpush1.bf16.msra.mxu0 %v2038
        %2051 = vmatprep.subr.bf16.mxu0 0
        %2052 = vmatpush1.bf16.msra.mxu0 0
        %2053 = vmatprep.subr.bf16.mxu0 0
        %2054 = vmatpush1.bf16.msra.mxu0 0
        %2055 = vmatprep.subr.bf16.mxu0 0
        %2056 = vmatpush1.bf16.msra.mxu0 0
        %2057 = vmatprep.subr.bf16.mxu0 0
        %2058 = vmatpush1.bf16.msra.mxu0 0
        %2059 = vmatprep.subr.bf16.mxu0 0
        %2060 = vmatpush1.bf16.msra.mxu0 0
        %2061 = vmatprep.subr.bf16.mxu0 0
        %2062 = vmatpush1.bf16.msra.mxu0 0
        %2063 = vmatprep.subr.bf16.mxu0 0
        %2064 = vmatpush1.bf16.msra.mxu0 0
        %2065 = vmatprep.subr.bf16.mxu0 0
        %2066 = vmatpush1.bf16.msra.mxu0 0
        %2067 = vmatprep.subr.bf16.mxu0 0
        %2068 = vmatpush1.bf16.msra.mxu0 0
        %2069 = vmatprep.subr.bf16.mxu0 0
        %2070 = vmatpush1.bf16.msra.mxu0 0
        %2071 = vmatprep.subr.bf16.mxu0 0
        %2072 = vmatpush1.bf16.msra.mxu0 0
        %2073 = vmatprep.subr.bf16.mxu0 0
        %2074 = vmatpush1.bf16.msra.mxu0 0
        %2075 = vmatprep.mubr.bf16.mxu0 0
        %2076 = vmatmul.mubr.bf16.gmra.mrb[0].mxu0 %v1154
        %v2077 = vpop.f32.mrb[0].mxu0
        %v2078 = vadd.f32 %v2017, %v2077
        %v2079 = vpop.f32.mrb[0].mxu0
        %v2080 = vpop.f32.mrb[0].mxu0
        %v2081 = vpop.f32.mrb[0].mxu0
        %2082 = vdwg.mxu0
        %s2083 = scalar_lea.vmem %s983, 64
        %v2084 = vld [vmem:[%s2083] sm:$0xf]
        %v2085 = vld [vmem:[%s2083 + $0x4] sm:$0xf]
        %v2086 = vld [vmem:[%s2083 + $0x8] sm:$0xf]
        %v2087 = vld [vmem:[%s2083 + $0xc] sm:$0xf]
        %v2088 = vld [vmem:[%s2083 + $0x10] sm:$0xf]
        %v2089 = vld [vmem:[%s2083 + $0x14] sm:$0xf]
        %v2090 = vld [vmem:[%s2083 + $0x18] sm:$0xf]
        %v2091 = vld [vmem:[%s2083 + $0x1c] sm:$0xf]
        %s2092 = scalar_lea.vmem %s995, 2
        %v2093 = vld [vmem:[%s2092] sm:$0x1]
        %v2095 = vlaneseq
        %v2096 = vshrl.u32 %v2095, 7
        %v2097 = vsub.s32 0, %v2096
        %v2098 = vrot.slane %v2093, %v2097
        %v2108 = vunpack.c.l.b16 %v2084
        %v2109 = vunpack.c.l.b16 %v2085
        %v2110 = vunpack.c.l.b16 %v2086
        %v2111 = vunpack.c.l.b16 %v2087
        %v2112 = vunpack.c.l.b16 %v2088
        %v2113 = vunpack.c.l.b16 %v2089
        %v2114 = vunpack.c.l.b16 %v2090
        %v2115 = vunpack.c.l.b16 %v2091
        %v2116 = vpack.c.b16 %v2109, %v2108
        %v2117 = vpack.c.b16 %v2111, %v2110
        %v2118 = vpack.c.b16 %v2113, %v2112
        %v2119 = vpack.c.b16 %v2115, %v2114
        %2124 = vmatprep.subr.bf16.mxu0 0
        %2125 = vmatpush1.bf16.msra.mxu0 %v2116
        %2126 = vmatprep.subr.bf16.mxu0 0
        %2127 = vmatpush1.bf16.msra.mxu0 %v2117
        %2128 = vmatprep.subr.bf16.mxu0 0
        %2129 = vmatpush1.bf16.msra.mxu0 %v2118
        %2130 = vmatprep.subr.bf16.mxu0 0
        %2131 = vmatpush1.bf16.msra.mxu0 %v2119
        %2132 = vmatprep.subr.bf16.mxu0 0
        %2133 = vmatpush1.bf16.msra.mxu0 0
        %2134 = vmatprep.subr.bf16.mxu0 0
        %2135 = vmatpush1.bf16.msra.mxu0 0
        %2136 = vmatprep.subr.bf16.mxu0 0
        %2137 = vmatpush1.bf16.msra.mxu0 0
        %2138 = vmatprep.subr.bf16.mxu0 0
        %2139 = vmatpush1.bf16.msra.mxu0 0
        %2140 = vmatprep.subr.bf16.mxu0 0
        %2141 = vmatpush1.bf16.msra.mxu0 0
        %2142 = vmatprep.subr.bf16.mxu0 0
        %2143 = vmatpush1.bf16.msra.mxu0 0
        %2144 = vmatprep.subr.bf16.mxu0 0
        %2145 = vmatpush1.bf16.msra.mxu0 0
        %2146 = vmatprep.subr.bf16.mxu0 0
        %2147 = vmatpush1.bf16.msra.mxu0 0
        %2148 = vmatprep.subr.bf16.mxu0 0
        %2149 = vmatpush1.bf16.msra.mxu0 0
        %2150 = vmatprep.subr.bf16.mxu0 0
        %2151 = vmatpush1.bf16.msra.mxu0 0
        %2152 = vmatprep.subr.bf16.mxu0 0
        %2153 = vmatpush1.bf16.msra.mxu0 0
        %2154 = vmatprep.subr.bf16.mxu0 0
        %2155 = vmatpush1.bf16.msra.mxu0 0
        %2156 = vmatprep.mubr.bf16.mxu0 0
        %2157 = vmatmul.mubr.bf16.gmra.mrb[0].mxu0 %v1154
        %v2158 = vpop.f32.mrb[0].mxu0
        %v2159 = vadd.f32 %v2098, %v2158
        %v2160 = vpop.f32.mrb[0].mxu0
        %v2161 = vpop.f32.mrb[0].mxu0
        %v2162 = vpop.f32.mrb[0].mxu0
        %2163 = vdwg.mxu0
        %v2164 = vpack.c.bf16 %v1997, %v1997
        %v2165 = vpack.c.bf16 %v2078, %v2078
        %v2166 = vpack.c.bf16 %v2159, %v2159
        %v2168 = vsel %vm1357, %v2164, 0
        %v2171 = vsel %vm1357, %v2165, 0
        %2173 = vmatprep.subr.bf16.mxu0 0
        %2174 = vmatpush1.bf16.xpose.msra.mxu0 %v2171
        %2175 = vmatprep.subr.bf16.mxu0 0
        %2176 = vmatpush1.bf16.xpose.msra.mxu0 0
        %2177 = vmatprep.subr.bf16.mxu0 0
        %2178 = vmatpush1.bf16.xpose.msra.mxu0 0
        %2179 = vmatprep.subr.bf16.mxu0 0
        %2180 = vmatpush1.bf16.xpose.msra.mxu0 0
        %2181 = vmatprep.subr.bf16.mxu0 0
        %2182 = vmatpush1.bf16.xpose.msra.mxu0 0
        %2183 = vmatprep.subr.bf16.mxu0 0
        %2184 = vmatpush1.bf16.xpose.msra.mxu0 0
        %2185 = vmatprep.subr.bf16.mxu0 0
        %2186 = vmatpush1.bf16.xpose.msra.mxu0 0
        %2187 = vmatprep.subr.bf16.mxu0 0
        %2188 = vmatpush1.bf16.xpose.msra.mxu0 0
        %2189 = vmatprep.subr.bf16.mxu0 0
        %2190 = vmatpush1.bf16.xpose.msra.mxu0 0
        %2191 = vmatprep.subr.bf16.mxu0 0
        %2192 = vmatpush1.bf16.xpose.msra.mxu0 0
        %2193 = vmatprep.subr.bf16.mxu0 0
        %2194 = vmatpush1.bf16.xpose.msra.mxu0 0
        %2195 = vmatprep.subr.bf16.mxu0 0
        %2196 = vmatpush1.bf16.xpose.msra.mxu0 0
        %2197 = vmatprep.subr.bf16.mxu0 0
        %2198 = vmatpush1.bf16.xpose.msra.mxu0 0
        %2199 = vmatprep.subr.bf16.mxu0 0
        %2200 = vmatpush1.bf16.xpose.msra.mxu0 0
        %2201 = vmatprep.subr.bf16.mxu0 0
        %2202 = vmatpush1.bf16.xpose.msra.mxu0 0
        %2203 = vmatprep.subr.bf16.mxu0 0
        %2204 = vmatpush1.bf16.xpose.msra.mxu0 0
        %2205 = vmatprep.mubr.bf16.mxu0 0
        %2206 = vmatmul.mubr.bf16.gmra.mrb[0].mxu0 %v2168
        %v2207 = vpop.f32.mrb[0].mxu0
        %v2208 = vadd.f32 0.0, %v2207
        %v2209 = vpop.f32.mrb[0].mxu0
        %v2210 = vpop.f32.mrb[0].mxu0
        %v2211 = vpop.f32.mrb[0].mxu0
        %2212 = vdwg.mxu0
        %v2213 = vmul.f32 %v2208, 0.25
        %v2214 = vsel %vm1405, %v2213, -inf
        %2215 = vmax.xlane.f32.xlu0 %v2214
        %v2216 = vpop.xlane.xlu0 %2215
        %v2217 = vsub.f32 %v2213, %v2216
        %v2218 = vmul.f32 %v2217, 1.442695
        %v2219 = vpow.pop %v2218
        %v2220 = vsel %vm1405, %v2219, 0.0
        %2221 = vadd.xlane.f32.xlu0 %v2220
        %v2222 = vpop.xlane.xlu0 %2221
        %v2223 = vrcp.pop %v2222
        %v2224 = vmul.f32 %v2219, %v2223
        %v2225 = vpack.c.bf16 %v2224, %v2224
        %v2227 = vsel %vm1405, %v2225, 0
        %v2230 = vsel %vm1421, %v2166, 0
        %2232 = vmatprep.subr.bf16.mxu0 0
        %2233 = vmatpush1.bf16.msra.mxu0 %v2230
        %2234 = vmatprep.subr.bf16.mxu0 0
        %2235 = vmatpush1.bf16.msra.mxu0 0
        %2236 = vmatprep.subr.bf16.mxu0 0
        %2237 = vmatpush1.bf16.msra.mxu0 0
        %2238 = vmatprep.subr.bf16.mxu0 0
        %2239 = vmatpush1.bf16.msra.mxu0 0
        %2240 = vmatprep.subr.bf16.mxu0 0
        %2241 = vmatpush1.bf16.msra.mxu0 0
        %2242 = vmatprep.subr.bf16.mxu0 0
        %2243 = vmatpush1.bf16.msra.mxu0 0
        %2244 = vmatprep.subr.bf16.mxu0 0
        %2245 = vmatpush1.bf16.msra.mxu0 0
        %2246 = vmatprep.subr.bf16.mxu0 0
        %2247 = vmatpush1.bf16.msra.mxu0 0
        %2248 = vmatprep.subr.bf16.mxu0 0
        %2249 = vmatpush1.bf16.msra.mxu0 0
        %2250 = vmatprep.subr.bf16.mxu0 0
        %2251 = vmatpush1.bf16.msra.mxu0 0
        %2252 = vmatprep.subr.bf16.mxu0 0
        %2253 = vmatpush1.bf16.msra.mxu0 0
        %2254 = vmatprep.subr.bf16.mxu0 0
        %2255 = vmatpush1.bf16.msra.mxu0 0
        %2256 = vmatprep.subr.bf16.mxu0 0
        %2257 = vmatpush1.bf16.msra.mxu0 0
        %2258 = vmatprep.subr.bf16.mxu0 0
        %2259 = vmatpush1.bf16.msra.mxu0 0
        %2260 = vmatprep.subr.bf16.mxu0 0
        %2261 = vmatpush1.bf16.msra.mxu0 0
        %2262 = vmatprep.subr.bf16.mxu0 0
        %2263 = vmatpush1.bf16.msra.mxu0 0
        %2264 = vmatprep.mubr.bf16.mxu0 0
        %2265 = vmatmul.mubr.bf16.gmra.mrb[0].mxu0 %v2227
        %v2266 = vpop.f32.mrb[0].mxu0
        %v2267 = vadd.f32 0.0, %v2266
        %v2268 = vpop.f32.mrb[0].mxu0
        %v2269 = vpop.f32.mrb[0].mxu0
        %v2270 = vpop.f32.mrb[0].mxu0
        %2271 = vdwg.mxu0
        %v2272 = vpack.c.bf16 %v2267, %v2267
        %s2273 = scalar_lea.vmem %s1000, 16
        %v2274 = vld [vmem:[%s2273] sm:$0xf]
        %v2275 = vld [vmem:[%s2273 + $0x4] sm:$0xf]
        %v2278 = vunpack.c.l.b16 %v2274
        %v2279 = vunpack.c.l.b16 %v2275
        %v2280 = vpack.c.b16 %v2279, %v2278
        %v2283 = vsel %vm1357, %v2272, 0
        %2285 = vmatprep.subr.bf16.mxu0 0
        %2286 = vmatpush1.bf16.msra.mxu0 %v2280
        %2287 = vmatprep.subr.bf16.mxu0 0
        %2288 = vmatpush1.bf16.msra.mxu0 0
        %2289 = vmatprep.subr.bf16.mxu0 0
        %2290 = vmatpush1.bf16.msra.mxu0 0
        %2291 = vmatprep.subr.bf16.mxu0 0
        %2292 = vmatpush1.bf16.msra.mxu0 0
        %2293 = vmatprep.subr.bf16.mxu0 0
        %2294 = vmatpush1.bf16.msra.mxu0 0
        %2295 = vmatprep.subr.bf16.mxu0 0
        %2296 = vmatpush1.bf16.msra.mxu0 0
        %2297 = vmatprep.subr.bf16.mxu0 0
        %2298 = vmatpush1.bf16.msra.mxu0 0
        %2299 = vmatprep.subr.bf16.mxu0 0
        %2300 = vmatpush1.bf16.msra.mxu0 0
        %2301 = vmatprep.subr.bf16.mxu0 0
        %2302 = vmatpush1.bf16.msra.mxu0 0
        %2303 = vmatprep.subr.bf16.mxu0 0
        %2304 = vmatpush1.bf16.msra.mxu0 0
        %2305 = vmatprep.subr.bf16.mxu0 0
        %2306 = vmatpush1.bf16.msra.mxu0 0
        %2307 = vmatprep.subr.bf16.mxu0 0
        %2308 = vmatpush1.bf16.msra.mxu0 0
        %2309 = vmatprep.subr.bf16.mxu0 0
        %2310 = vmatpush1.bf16.msra.mxu0 0
        %2311 = vmatprep.subr.bf16.mxu0 0
        %2312 = vmatpush1.bf16.msra.mxu0 0
        %2313 = vmatprep.subr.bf16.mxu0 0
        %2314 = vmatpush1.bf16.msra.mxu0 0
        %2315 = vmatprep.subr.bf16.mxu0 0
        %2316 = vmatpush1.bf16.msra.mxu0 0
        %2317 = vmatprep.mubr.bf16.mxu0 0
        %2318 = vmatmul.mubr.bf16.gmra.mrb[0].mxu0 %v2283
        %v2319 = vpop.f32.mrb[0].mxu0
        %v2320 = vadd.f32 0.0, %v2319
        %v2321 = vpop.f32.mrb[0].mxu0
        %v2322 = vpop.f32.mrb[0].mxu0
        %v2323 = vpop.f32.mrb[0].mxu0
        %2324 = vdwg.mxu0
        %v2325 = vadd.f32 %v1916, %v2320
        %s2326 = scalar_lea.vmem %s973, 96
        %v2327 = vld [vmem:[%s2326] sm:$0xf]
        %v2328 = vld [vmem:[%s2326 + $0x4] sm:$0xf]
        %v2329 = vld [vmem:[%s2326 + $0x8] sm:$0xf]
        %v2330 = vld [vmem:[%s2326 + $0xc] sm:$0xf]
        %v2331 = vld [vmem:[%s2326 + $0x10] sm:$0xf]
        %v2332 = vld [vmem:[%s2326 + $0x14] sm:$0xf]
        %v2333 = vld [vmem:[%s2326 + $0x18] sm:$0xf]
        %v2334 = vld [vmem:[%s2326 + $0x1c] sm:$0xf]
        %s2335 = scalar_lea.vmem %s987, 3
        %v2336 = vld [vmem:[%s2335] sm:$0x1]
        %v2338 = vlaneseq
        %v2339 = vshrl.u32 %v2338, 7
        %v2340 = vsub.s32 0, %v2339
        %v2341 = vrot.slane %v2336, %v2340
        %v2351 = vunpack.c.l.b16 %v2327
        %v2352 = vunpack.c.l.b16 %v2328
        %v2353 = vunpack.c.l.b16 %v2329
        %v2354 = vunpack.c.l.b16 %v2330
        %v2355 = vunpack.c.l.b16 %v2331
        %v2356 = vunpack.c.l.b16 %v2332
        %v2357 = vunpack.c.l.b16 %v2333
        %v2358 = vunpack.c.l.b16 %v2334
        %v2359 = vpack.c.b16 %v2352, %v2351
        %v2360 = vpack.c.b16 %v2354, %v2353
        %v2361 = vpack.c.b16 %v2356, %v2355
        %v2362 = vpack.c.b16 %v2358, %v2357
        %2367 = vmatprep.subr.bf16.mxu0 0
        %2368 = vmatpush1.bf16.msra.mxu0 %v2359
        %2369 = vmatprep.subr.bf16.mxu0 0
        %2370 = vmatpush1.bf16.msra.mxu0 %v2360
        %2371 = vmatprep.subr.bf16.mxu0 0
        %2372 = vmatpush1.bf16.msra.mxu0 %v2361
        %2373 = vmatprep.subr.bf16.mxu0 0
        %2374 = vmatpush1.bf16.msra.mxu0 %v2362
        %2375 = vmatprep.subr.bf16.mxu0 0
        %2376 = vmatpush1.bf16.msra.mxu0 0
        %2377 = vmatprep.subr.bf16.mxu0 0
        %2378 = vmatpush1.bf16.msra.mxu0 0
        %2379 = vmatprep.subr.bf16.mxu0 0
        %2380 = vmatpush1.bf16.msra.mxu0 0
        %2381 = vmatprep.subr.bf16.mxu0 0
        %2382 = vmatpush1.bf16.msra.mxu0 0
        %2383 = vmatprep.subr.bf16.mxu0 0
        %2384 = vmatpush1.bf16.msra.mxu0 0
        %2385 = vmatprep.subr.bf16.mxu0 0
        %2386 = vmatpush1.bf16.msra.mxu0 0
        %2387 = vmatprep.subr.bf16.mxu0 0
        %2388 = vmatpush1.bf16.msra.mxu0 0
        %2389 = vmatprep.subr.bf16.mxu0 0
        %2390 = vmatpush1.bf16.msra.mxu0 0
        %2391 = vmatprep.subr.bf16.mxu0 0
        %2392 = vmatpush1.bf16.msra.mxu0 0
        %2393 = vmatprep.subr.bf16.mxu0 0
        %2394 = vmatpush1.bf16.msra.mxu0 0
        %2395 = vmatprep.subr.bf16.mxu0 0
        %2396 = vmatpush1.bf16.msra.mxu0 0
        %2397 = vmatprep.subr.bf16.mxu0 0
        %2398 = vmatpush1.bf16.msra.mxu0 0
        %2399 = vmatprep.mubr.bf16.mxu0 0
        %2400 = vmatmul.mubr.bf16.gmra.mrb[0].mxu0 %v1154
        %v2401 = vpop.f32.mrb[0].mxu0
        %v2402 = vadd.f32 %v2341, %v2401
        %v2403 = vpop.f32.mrb[0].mxu0
        %v2404 = vpop.f32.mrb[0].mxu0
        %v2405 = vpop.f32.mrb[0].mxu0
        %2406 = vdwg.mxu0
        %s2407 = scalar_lea.vmem %s978, 96
        %v2408 = vld [vmem:[%s2407] sm:$0xf]
        %v2409 = vld [vmem:[%s2407 + $0x4] sm:$0xf]
        %v2410 = vld [vmem:[%s2407 + $0x8] sm:$0xf]
        %v2411 = vld [vmem:[%s2407 + $0xc] sm:$0xf]
        %v2412 = vld [vmem:[%s2407 + $0x10] sm:$0xf]
        %v2413 = vld [vmem:[%s2407 + $0x14] sm:$0xf]
        %v2414 = vld [vmem:[%s2407 + $0x18] sm:$0xf]
        %v2415 = vld [vmem:[%s2407 + $0x1c] sm:$0xf]
        %s2416 = scalar_lea.vmem %s991, 3
        %v2417 = vld [vmem:[%s2416] sm:$0x1]
        %v2419 = vlaneseq
        %v2420 = vshrl.u32 %v2419, 7
        %v2421 = vsub.s32 0, %v2420
        %v2422 = vrot.slane %v2417, %v2421
        %v2432 = vunpack.c.l.b16 %v2408
        %v2433 = vunpack.c.l.b16 %v2409
        %v2434 = vunpack.c.l.b16 %v2410
        %v2435 = vunpack.c.l.b16 %v2411
        %v2436 = vunpack.c.l.b16 %v2412
        %v2437 = vunpack.c.l.b16 %v2413
        %v2438 = vunpack.c.l.b16 %v2414
        %v2439 = vunpack.c.l.b16 %v2415
        %v2440 = vpack.c.b16 %v2433, %v2432
        %v2441 = vpack.c.b16 %v2435, %v2434
        %v2442 = vpack.c.b16 %v2437, %v2436
        %v2443 = vpack.c.b16 %v2439, %v2438
        %2448 = vmatprep.subr.bf16.mxu0 0
        %2449 = vmatpush1.bf16.msra.mxu0 %v2440
        %2450 = vmatprep.subr.bf16.mxu0 0
        %2451 = vmatpush1.bf16.msra.mxu0 %v2441
        %2452 = vmatprep.subr.bf16.mxu0 0
        %2453 = vmatpush1.bf16.msra.mxu0 %v2442
        %2454 = vmatprep.subr.bf16.mxu0 0
        %2455 = vmatpush1.bf16.msra.mxu0 %v2443
        %2456 = vmatprep.subr.bf16.mxu0 0
        %2457 = vmatpush1.bf16.msra.mxu0 0
        %2458 = vmatprep.subr.bf16.mxu0 0
        %2459 = vmatpush1.bf16.msra.mxu0 0
        %2460 = vmatprep.subr.bf16.mxu0 0
        %2461 = vmatpush1.bf16.msra.mxu0 0
        %2462 = vmatprep.subr.bf16.mxu0 0
        %2463 = vmatpush1.bf16.msra.mxu0 0
        %2464 = vmatprep.subr.bf16.mxu0 0
        %2465 = vmatpush1.bf16.msra.mxu0 0
        %2466 = vmatprep.subr.bf16.mxu0 0
        %2467 = vmatpush1.bf16.msra.mxu0 0
        %2468 = vmatprep.subr.bf16.mxu0 0
        %2469 = vmatpush1.bf16.msra.mxu0 0
        %2470 = vmatprep.subr.bf16.mxu0 0
        %2471 = vmatpush1.bf16.msra.mxu0 0
        %2472 = vmatprep.subr.bf16.mxu0 0
        %2473 = vmatpush1.bf16.msra.mxu0 0
        %2474 = vmatprep.subr.bf16.mxu0 0
        %2475 = vmatpush1.bf16.msra.mxu0 0
        %2476 = vmatprep.subr.bf16.mxu0 0
        %2477 = vmatpush1.bf16.msra.mxu0 0
        %2478 = vmatprep.subr.bf16.mxu0 0
        %2479 = vmatpush1.bf16.msra.mxu0 0
        %2480 = vmatprep.mubr.bf16.mxu0 0
        %2481 = vmatmul.mubr.bf16.gmra.mrb[0].mxu0 %v1154
        %v2482 = vpop.f32.mrb[0].mxu0
        %v2483 = vadd.f32 %v2422, %v2482
        %v2484 = vpop.f32.mrb[0].mxu0
        %v2485 = vpop.f32.mrb[0].mxu0
        %v2486 = vpop.f32.mrb[0].mxu0
        %2487 = vdwg.mxu0
        %s2488 = scalar_lea.vmem %s983, 96
        %v2489 = vld [vmem:[%s2488] sm:$0xf]
        %v2490 = vld [vmem:[%s2488 + $0x4] sm:$0xf]
        %v2491 = vld [vmem:[%s2488 + $0x8] sm:$0xf]
        %v2492 = vld [vmem:[%s2488 + $0xc] sm:$0xf]
        %v2493 = vld [vmem:[%s2488 + $0x10] sm:$0xf]
        %v2494 = vld [vmem:[%s2488 + $0x14] sm:$0xf]
        %v2495 = vld [vmem:[%s2488 + $0x18] sm:$0xf]
        %v2496 = vld [vmem:[%s2488 + $0x1c] sm:$0xf]
        %s2497 = scalar_lea.vmem %s995, 3
        %v2498 = vld [vmem:[%s2497] sm:$0x1]
        %v2500 = vlaneseq
        %v2501 = vshrl.u32 %v2500, 7
        %v2502 = vsub.s32 0, %v2501
        %v2503 = vrot.slane %v2498, %v2502
        %v2513 = vunpack.c.l.b16 %v2489
        %v2514 = vunpack.c.l.b16 %v2490
        %v2515 = vunpack.c.l.b16 %v2491
        %v2516 = vunpack.c.l.b16 %v2492
        %v2517 = vunpack.c.l.b16 %v2493
        %v2518 = vunpack.c.l.b16 %v2494
        %v2519 = vunpack.c.l.b16 %v2495
        %v2520 = vunpack.c.l.b16 %v2496
        %v2521 = vpack.c.b16 %v2514, %v2513
        %v2522 = vpack.c.b16 %v2516, %v2515
        %v2523 = vpack.c.b16 %v2518, %v2517
        %v2524 = vpack.c.b16 %v2520, %v2519
        %2529 = vmatprep.subr.bf16.mxu0 0
        %2530 = vmatpush1.bf16.msra.mxu0 %v2521
        %2531 = vmatprep.subr.bf16.mxu0 0
        %2532 = vmatpush1.bf16.msra.mxu0 %v2522
        %2533 = vmatprep.subr.bf16.mxu0 0
        %2534 = vmatpush1.bf16.msra.mxu0 %v2523
        %2535 = vmatprep.subr.bf16.mxu0 0
        %2536 = vmatpush1.bf16.msra.mxu0 %v2524
        %2537 = vmatprep.subr.bf16.mxu0 0
        %2538 = vmatpush1.bf16.msra.mxu0 0
        %2539 = vmatprep.subr.bf16.mxu0 0
        %2540 = vmatpush1.bf16.msra.mxu0 0
        %2541 = vmatprep.subr.bf16.mxu0 0
        %2542 = vmatpush1.bf16.msra.mxu0 0
        %2543 = vmatprep.subr.bf16.mxu0 0
        %2544 = vmatpush1.bf16.msra.mxu0 0
        %2545 = vmatprep.subr.bf16.mxu0 0
        %2546 = vmatpush1.bf16.msra.mxu0 0
        %2547 = vmatprep.subr.bf16.mxu0 0
        %2548 = vmatpush1.bf16.msra.mxu0 0
        %2549 = vmatprep.subr.bf16.mxu0 0
        %2550 = vmatpush1.bf16.msra.mxu0 0
        %2551 = vmatprep.subr.bf16.mxu0 0
        %2552 = vmatpush1.bf16.msra.mxu0 0
        %2553 = vmatprep.subr.bf16.mxu0 0
        %2554 = vmatpush1.bf16.msra.mxu0 0
        %2555 = vmatprep.subr.bf16.mxu0 0
        %2556 = vmatpush1.bf16.msra.mxu0 0
        %2557 = vmatprep.subr.bf16.mxu0 0
        %2558 = vmatpush1.bf16.msra.mxu0 0
        %2559 = vmatprep.subr.bf16.mxu0 0
        %2560 = vmatpush1.bf16.msra.mxu0 0
        %2561 = vmatprep.mubr.bf16.mxu0 0
        %2562 = vmatmul.mubr.bf16.gmra.mrb[0].mxu0 %v1154
        %v2563 = vpop.f32.mrb[0].mxu0
        %v2564 = vadd.f32 %v2503, %v2563
        %v2565 = vpop.f32.mrb[0].mxu0
        %v2566 = vpop.f32.mrb[0].mxu0
        %v2567 = vpop.f32.mrb[0].mxu0
        %2568 = vdwg.mxu0
        %v2569 = vpack.c.bf16 %v2402, %v2402
        %v2570 = vpack.c.bf16 %v2483, %v2483
        %v2571 = vpack.c.bf16 %v2564, %v2564
        %v2573 = vsel %vm1357, %v2569, 0
        %v2576 = vsel %vm1357, %v2570, 0
        %2578 = vmatprep.subr.bf16.mxu0 0
        %2579 = vmatpush1.bf16.xpose.msra.mxu0 %v2576
        %2580 = vmatprep.subr.bf16.mxu0 0
        %2581 = vmatpush1.bf16.xpose.msra.mxu0 0
        %2582 = vmatprep.subr.bf16.mxu0 0
        %2583 = vmatpush1.bf16.xpose.msra.mxu0 0
        %2584 = vmatprep.subr.bf16.mxu0 0
        %2585 = vmatpush1.bf16.xpose.msra.mxu0 0
        %2586 = vmatprep.subr.bf16.mxu0 0
        %2587 = vmatpush1.bf16.xpose.msra.mxu0 0
        %2588 = vmatprep.subr.bf16.mxu0 0
        %2589 = vmatpush1.bf16.xpose.msra.mxu0 0
        %2590 = vmatprep.subr.bf16.mxu0 0
        %2591 = vmatpush1.bf16.xpose.msra.mxu0 0
        %2592 = vmatprep.subr.bf16.mxu0 0
        %2593 = vmatpush1.bf16.xpose.msra.mxu0 0
        %2594 = vmatprep.subr.bf16.mxu0 0
        %2595 = vmatpush1.bf16.xpose.msra.mxu0 0
        %2596 = vmatprep.subr.bf16.mxu0 0
        %2597 = vmatpush1.bf16.xpose.msra.mxu0 0
        %2598 = vmatprep.subr.bf16.mxu0 0
        %2599 = vmatpush1.bf16.xpose.msra.mxu0 0
        %2600 = vmatprep.subr.bf16.mxu0 0
        %2601 = vmatpush1.bf16.xpose.msra.mxu0 0
        %2602 = vmatprep.subr.bf16.mxu0 0
        %2603 = vmatpush1.bf16.xpose.msra.mxu0 0
        %2604 = vmatprep.subr.bf16.mxu0 0
        %2605 = vmatpush1.bf16.xpose.msra.mxu0 0
        %2606 = vmatprep.subr.bf16.mxu0 0
        %2607 = vmatpush1.bf16.xpose.msra.mxu0 0
        %2608 = vmatprep.subr.bf16.mxu0 0
        %2609 = vmatpush1.bf16.xpose.msra.mxu0 0
        %2610 = vmatprep.mubr.bf16.mxu0 0
        %2611 = vmatmul.mubr.bf16.gmra.mrb[0].mxu0 %v2573
        %v2612 = vpop.f32.mrb[0].mxu0
        %v2613 = vadd.f32 0.0, %v2612
        %v2614 = vpop.f32.mrb[0].mxu0
        %v2615 = vpop.f32.mrb[0].mxu0
        %v2616 = vpop.f32.mrb[0].mxu0
        %2617 = vdwg.mxu0
        %v2618 = vmul.f32 %v2613, 0.25
        %v2619 = vsel %vm1405, %v2618, -inf
        %2620 = vmax.xlane.f32.xlu0 %v2619
        %v2621 = vpop.xlane.xlu0 %2620
        %v2622 = vsub.f32 %v2618, %v2621
        %v2623 = vmul.f32 %v2622, 1.442695
        %v2624 = vpow.pop %v2623
        %v2625 = vsel %vm1405, %v2624, 0.0
        %2626 = vadd.xlane.f32.xlu0 %v2625
        %v2627 = vpop.xlane.xlu0 %2626
        %v2628 = vrcp.pop %v2627
        %v2629 = vmul.f32 %v2624, %v2628
        %v2630 = vpack.c.bf16 %v2629, %v2629
        %v2632 = vsel %vm1405, %v2630, 0
        %v2635 = vsel %vm1421, %v2571, 0
        %2637 = vmatprep.subr.bf16.mxu0 0
        %2638 = vmatpush1.bf16.msra.mxu0 %v2635
        %2639 = vmatprep.subr.bf16.mxu0 0
        %2640 = vmatpush1.bf16.msra.mxu0 0
        %2641 = vmatprep.subr.bf16.mxu0 0
        %2642 = vmatpush1.bf16.msra.mxu0 0
        %2643 = vmatprep.subr.bf16.mxu0 0
        %2644 = vmatpush1.bf16.msra.mxu0 0
        %2645 = vmatprep.subr.bf16.mxu0 0
        %2646 = vmatpush1.bf16.msra.mxu0 0
        %2647 = vmatprep.subr.bf16.mxu0 0
        %2648 = vmatpush1.bf16.msra.mxu0 0
        %2649 = vmatprep.subr.bf16.mxu0 0
        %2650 = vmatpush1.bf16.msra.mxu0 0
        %2651 = vmatprep.subr.bf16.mxu0 0
        %2652 = vmatpush1.bf16.msra.mxu0 0
        %2653 = vmatprep.subr.bf16.mxu0 0
        %2654 = vmatpush1.bf16.msra.mxu0 0
        %2655 = vmatprep.subr.bf16.mxu0 0
        %2656 = vmatpush1.bf16.msra.mxu0 0
        %2657 = vmatprep.subr.bf16.mxu0 0
        %2658 = vmatpush1.bf16.msra.mxu0 0
        %2659 = vmatprep.subr.bf16.mxu0 0
        %2660 = vmatpush1.bf16.msra.mxu0 0
        %2661 = vmatprep.subr.bf16.mxu0 0
        %2662 = vmatpush1.bf16.msra.mxu0 0
        %2663 = vmatprep.subr.bf16.mxu0 0
        %2664 = vmatpush1.bf16.msra.mxu0 0
        %2665 = vmatprep.subr.bf16.mxu0 0
        %2666 = vmatpush1.bf16.msra.mxu0 0
        %2667 = vmatprep.subr.bf16.mxu0 0
        %2668 = vmatpush1.bf16.msra.mxu0 0
        %2669 = vmatprep.mubr.bf16.mxu0 0
        %2670 = vmatmul.mubr.bf16.gmra.mrb[0].mxu0 %v2632
        %v2671 = vpop.f32.mrb[0].mxu0
        %v2672 = vadd.f32 0.0, %v2671
        %v2673 = vpop.f32.mrb[0].mxu0
        %v2674 = vpop.f32.mrb[0].mxu0
        %v2675 = vpop.f32.mrb[0].mxu0
        %2676 = vdwg.mxu0
        %v2677 = vpack.c.bf16 %v2672, %v2672
        %s2678 = scalar_lea.vmem %s1000, 24
        %v2679 = vld [vmem:[%s2678] sm:$0xf]
        %v2680 = vld [vmem:[%s2678 + $0x4] sm:$0xf]
        %v2683 = vunpack.c.l.b16 %v2679
        %v2684 = vunpack.c.l.b16 %v2680
        %v2685 = vpack.c.b16 %v2684, %v2683
        %v2688 = vsel %vm1357, %v2677, 0
        %2690 = vmatprep.subr.bf16.mxu0 0
        %2691 = vmatpush1.bf16.msra.mxu0 %v2685
        %2692 = vmatprep.subr.bf16.mxu0 0
        %2693 = vmatpush1.bf16.msra.mxu0 0
        %2694 = vmatprep.subr.bf16.mxu0 0
        %2695 = vmatpush1.bf16.msra.mxu0 0
        %2696 = vmatprep.subr.bf16.mxu0 0
        %2697 = vmatpush1.bf16.msra.mxu0 0
        %2698 = vmatprep.subr.bf16.mxu0 0
        %2699 = vmatpush1.bf16.msra.mxu0 0
        %2700 = vmatprep.subr.bf16.mxu0 0
        %2701 = vmatpush1.bf16.msra.mxu0 0
        %2702 = vmatprep.subr.bf16.mxu0 0
        %2703 = vmatpush1.bf16.msra.mxu0 0
        %2704 = vmatprep.subr.bf16.mxu0 0
        %2705 = vmatpush1.bf16.msra.mxu0 0
        %2706 = vmatprep.subr.bf16.mxu0 0
        %2707 = vmatpush1.bf16.msra.mxu0 0
        %2708 = vmatprep.subr.bf16.mxu0 0
        %2709 = vmatpush1.bf16.msra.mxu0 0
        %2710 = vmatprep.subr.bf16.mxu0 0
        %2711 = vmatpush1.bf16.msra.mxu0 0
        %2712 = vmatprep.subr.bf16.mxu0 0
        %2713 = vmatpush1.bf16.msra.mxu0 0
        %2714 = vmatprep.subr.bf16.mxu0 0
        %2715 = vmatpush1.bf16.msra.mxu0 0
        %2716 = vmatprep.subr.bf16.mxu0 0
        %2717 = vmatpush1.bf16.msra.mxu0 0
        %2718 = vmatprep.subr.bf16.mxu0 0
        %2719 = vmatpush1.bf16.msra.mxu0 0
        %2720 = vmatprep.subr.bf16.mxu0 0
        %2721 = vmatpush1.bf16.msra.mxu0 0
        %2722 = vmatprep.mubr.bf16.mxu0 0
        %2723 = vmatmul.mubr.bf16.gmra.mrb[0].mxu0 %v2688
        %v2724 = vpop.f32.mrb[0].mxu0
        %v2725 = vadd.f32 0.0, %v2724
        %v2726 = vpop.f32.mrb[0].mxu0
        %v2727 = vpop.f32.mrb[0].mxu0
        %v2728 = vpop.f32.mrb[0].mxu0
        %2729 = vdwg.mxu0
        %v2730 = vadd.f32 %v2325, %v2725
        %v2731 = vld [vmem:[%s1003] sm:$0x1]
        %v2733 = vlaneseq
        %v2734 = vshrl.u32 %v2733, 7
        %v2735 = vsub.s32 0, %v2734
        %v2736 = vrot.slane %v2731, %v2735
        %v2738 = vadd.f32 %v2730, %v2736
        %v2739 = vadd.f32 %v1111, %v2738
        %v2740 = vld [vmem:[%s1006] sm:$0x1]
        %v2741 = vld [vmem:[%s1009] sm:$0x1]
        %v2742 = vsel %vm1152, %v2739, 0.0
        %2743 = vadd.xlane.f32.xlu0 %v2742
        %v2744 = vpop.xlane.xlu0 %2743
        %v2745 = vrcp.pop 64.0
        %v2746 = vmul.f32 %v2744, %v2745
        %v2747 = vsub.f32 %v2739, %v2746
        %v2748 = vmul.f32 %v2747, %v2747
        %v2749 = vsel %vm1152, %v2748, 0.0
        %2750 = vadd.xlane.f32.xlu0 %v2749
        %v2751 = vpop.xlane.xlu0 %2750
        %v2752 = vmul.f32 %v2751, %v2745
        %v2753 = vadd.f32 %v2752, 1e-05
        %v2754 = vrsqrt.pop %v2753
        %v2755 = vmul.f32 %v2747, %v2754
        %v2757 = vlaneseq
        %v2758 = vshrl.u32 %v2757, 7
        %v2759 = vsub.s32 0, %v2758
        %v2760 = vrot.slane %v2740, %v2759
        %v2762 = vmul.f32 %v2755, %v2760
        %v2764 = vlaneseq
        %v2765 = vshrl.u32 %v2764, 7
        %v2766 = vsub.s32 0, %v2765
        %v2767 = vrot.slane %v2741, %v2766
        %v2769 = vadd.f32 %v2762, %v2767
        %v2770 = vpack.c.bf16 %v2769, %v2769
        %v2771 = vld [vmem:[%s1014] sm:$0xff]
        %v2772 = vld [vmem:[%s1014 + $0x8] sm:$0xff]
        %v2773 = vld [vmem:[%s1014 + $0x10] sm:$0xff]
        %v2774 = vld [vmem:[%s1014 + $0x18] sm:$0xff]
        %v2775 = vld [vmem:[%s1014 + $0x20] sm:$0xff]
        %v2776 = vld [vmem:[%s1014 + $0x28] sm:$0xff]
        %v2777 = vld [vmem:[%s1014 + $0x30] sm:$0xff]
        %v2778 = vld [vmem:[%s1014 + $0x38] sm:$0xff]
        %v2779 = vld [vmem:[%s1018] sm:$0x3]
        %v2781 = vlaneseq
        %v2782 = vshrl.u32 %v2781, 7
        %v2783 = vsub.s32 0, %v2782
        %v2784 = vrot.slane %v2779, %v2783
        %v2785 = vlaneseq
        %v2786 = vshrl.u32 %v2785, 7
        %v2787 = vsub.s32 1, %v2786
        %v2788 = vrot.slane %v2779, %v2787
        %v2799 = vunpack.c.l.b16 %v2771
        %v2800 = vunpack.c.h.b16 %v2771
        %v2801 = vunpack.c.l.b16 %v2772
        %v2802 = vunpack.c.h.b16 %v2772
        %v2803 = vunpack.c.l.b16 %v2773
        %v2804 = vunpack.c.h.b16 %v2773
        %v2805 = vunpack.c.l.b16 %v2774
        %v2806 = vunpack.c.h.b16 %v2774
        %v2807 = vunpack.c.l.b16 %v2775
        %v2808 = vunpack.c.h.b16 %v2775
        %v2809 = vunpack.c.l.b16 %v2776
        %v2810 = vunpack.c.h.b16 %v2776
        %v2811 = vunpack.c.l.b16 %v2777
        %v2812 = vunpack.c.h.b16 %v2777
        %v2813 = vunpack.c.l.b16 %v2778
        %v2814 = vunpack.c.h.b16 %v2778
        %v2815 = vpack.c.b16 %v2801, %v2799
        %v2816 = vpack.c.b16 %v2802, %v2800
        %v2817 = vpack.c.b16 %v2805, %v2803
        %v2818 = vpack.c.b16 %v2806, %v2804
        %v2819 = vpack.c.b16 %v2809, %v2807
        %v2820 = vpack.c.b16 %v2810, %v2808
        %v2821 = vpack.c.b16 %v2813, %v2811
        %v2822 = vpack.c.b16 %v2814, %v2812
        %v2832 = vsel %vm1152, %v2770, 0
        %2834 = vmatprep.subr.bf16.mxu0 %v2816
        %2835 = vmatpush1.bf16.msra.mxu0 %v2815
        %2836 = vmatprep.subr.bf16.mxu0 %v2818
        %2837 = vmatpush1.bf16.msra.mxu0 %v2817
        %2838 = vmatprep.subr.bf16.mxu0 %v2820
        %2839 = vmatpush1.bf16.msra.mxu0 %v2819
        %2840 = vmatprep.subr.bf16.mxu0 %v2822
        %2841 = vmatpush1.bf16.msra.mxu0 %v2821
        %2842 = vmatprep.subr.bf16.mxu0 0
        %2843 = vmatpush1.bf16.msra.mxu0 0
        %2844 = vmatprep.subr.bf16.mxu0 0
        %2845 = vmatpush1.bf16.msra.mxu0 0
        %2846 = vmatprep.subr.bf16.mxu0 0
        %2847 = vmatpush1.bf16.msra.mxu0 0
        %2848 = vmatprep.subr.bf16.mxu0 0
        %2849 = vmatpush1.bf16.msra.mxu0 0
        %2850 = vmatprep.subr.bf16.mxu0 0
        %2851 = vmatpush1.bf16.msra.mxu0 0
        %2852 = vmatprep.subr.bf16.mxu0 0
        %2853 = vmatpush1.bf16.msra.mxu0 0
        %2854 = vmatprep.subr.bf16.mxu0 0
        %2855 = vmatpush1.bf16.msra.mxu0 0
        %2856 = vmatprep.subr.bf16.mxu0 0
        %2857 = vmatpush1.bf16.msra.mxu0 0
        %2858 = vmatprep.subr.bf16.mxu0 0
        %2859 = vmatpush1.bf16.msra.mxu0 0
        %2860 = vmatprep.subr.bf16.mxu0 0
        %2861 = vmatpush1.bf16.msra.mxu0 0
        %2862 = vmatprep.subr.bf16.mxu0 0
        %2863 = vmatpush1.bf16.msra.mxu0 0
        %2864 = vmatprep.subr.bf16.mxu0 0
        %2865 = vmatpush1.bf16.msra.mxu0 0
        %2866 = vmatprep.mubr.bf16.mxu0 0
        %2867 = vmatmul.mubr.bf16.gmra.mrb[0].mxu0 %v2832
        %v2868 = vpop.f32.mrb[0].mxu0
        %v2869 = vadd.f32 %v2784, %v2868
        %v2870 = vpop.f32.mrb[0].mxu0
        %v2871 = vadd.f32 %v2788, %v2870
        %v2872 = vpop.f32.mrb[0].mxu0
        %v2873 = vpop.f32.mrb[0].mxu0
        %2874 = vdwg.mxu0
        %v2875 = vmax.f32 %v2869, 0.0
        %v2876 = vmax.f32 %v2871, 0.0
        %v2877 = vpack.c.bf16 %v2875, %v2875
        %v2878 = vpack.c.bf16 %v2876, %v2876
        %v2879 = vld [vmem:[%s1023] sm:$0xf]
        %v2880 = vld [vmem:[%s1023 + $0x4] sm:$0xf]
        %v2881 = vld [vmem:[%s1023 + $0x8] sm:$0xf]
        %v2882 = vld [vmem:[%s1023 + $0xc] sm:$0xf]
        %v2883 = vld [vmem:[%s1023 + $0x10] sm:$0xf]
        %v2884 = vld [vmem:[%s1023 + $0x14] sm:$0xf]
        %v2885 = vld [vmem:[%s1023 + $0x18] sm:$0xf]
        %v2886 = vld [vmem:[%s1023 + $0x1c] sm:$0xf]
        %v2887 = vld [vmem:[%s1023 + $0x20] sm:$0xf]
        %v2888 = vld [vmem:[%s1023 + $0x24] sm:$0xf]
        %v2889 = vld [vmem:[%s1023 + $0x28] sm:$0xf]
        %v2890 = vld [vmem:[%s1023 + $0x2c] sm:$0xf]
        %v2891 = vld [vmem:[%s1023 + $0x30] sm:$0xf]
        %v2892 = vld [vmem:[%s1023 + $0x34] sm:$0xf]
        %v2893 = vld [vmem:[%s1023 + $0x38] sm:$0xf]
        %v2894 = vld [vmem:[%s1023 + $0x3c] sm:$0xf]
        %v2895 = vld [vmem:[%s1023 + $0x40] sm:$0xf]
        %v2896 = vld [vmem:[%s1023 + $0x44] sm:$0xf]
        %v2897 = vld [vmem:[%s1023 + $0x48] sm:$0xf]
        %v2898 = vld [vmem:[%s1023 + $0x4c] sm:$0xf]
        %v2899 = vld [vmem:[%s1023 + $0x50] sm:$0xf]
        %v2900 = vld [vmem:[%s1023 + $0x54] sm:$0xf]
        %v2901 = vld [vmem:[%s1023 + $0x58] sm:$0xf]
        %v2902 = vld [vmem:[%s1023 + $0x5c] sm:$0xf]
        %v2903 = vld [vmem:[%s1023 + $0x60] sm:$0xf]
        %v2904 = vld [vmem:[%s1023 + $0x64] sm:$0xf]
        %v2905 = vld [vmem:[%s1023 + $0x68] sm:$0xf]
        %v2906 = vld [vmem:[%s1023 + $0x6c] sm:$0xf]
        %v2907 = vld [vmem:[%s1023 + $0x70] sm:$0xf]
        %v2908 = vld [vmem:[%s1023 + $0x74] sm:$0xf]
        %v2909 = vld [vmem:[%s1023 + $0x78] sm:$0xf]
        %v2910 = vld [vmem:[%s1023 + $0x7c] sm:$0xf]
        %v2911 = vld [vmem:[%s1026] sm:$0x1]
        %v2913 = vlaneseq
        %v2914 = vshrl.u32 %v2913, 7
        %v2915 = vsub.s32 0, %v2914
        %v2916 = vrot.slane %v2911, %v2915
        %v2950 = vunpack.c.l.b16 %v2879
        %v2951 = vunpack.c.l.b16 %v2880
        %v2952 = vunpack.c.l.b16 %v2881
        %v2953 = vunpack.c.l.b16 %v2882
        %v2954 = vunpack.c.l.b16 %v2883
        %v2955 = vunpack.c.l.b16 %v2884
        %v2956 = vunpack.c.l.b16 %v2885
        %v2957 = vunpack.c.l.b16 %v2886
        %v2958 = vunpack.c.l.b16 %v2887
        %v2959 = vunpack.c.l.b16 %v2888
        %v2960 = vunpack.c.l.b16 %v2889
        %v2961 = vunpack.c.l.b16 %v2890
        %v2962 = vunpack.c.l.b16 %v2891
        %v2963 = vunpack.c.l.b16 %v2892
        %v2964 = vunpack.c.l.b16 %v2893
        %v2965 = vunpack.c.l.b16 %v2894
        %v2966 = vunpack.c.l.b16 %v2895
        %v2967 = vunpack.c.l.b16 %v2896
        %v2968 = vunpack.c.l.b16 %v2897
        %v2969 = vunpack.c.l.b16 %v2898
        %v2970 = vunpack.c.l.b16 %v2899
        %v2971 = vunpack.c.l.b16 %v2900
        %v2972 = vunpack.c.l.b16 %v2901
        %v2973 = vunpack.c.l.b16 %v2902
        %v2974 = vunpack.c.l.b16 %v2903
        %v2975 = vunpack.c.l.b16 %v2904
        %v2976 = vunpack.c.l.b16 %v2905
        %v2977 = vunpack.c.l.b16 %v2906
        %v2978 = vunpack.c.l.b16 %v2907
        %v2979 = vunpack.c.l.b16 %v2908
        %v2980 = vunpack.c.l.b16 %v2909
        %v2981 = vunpack.c.l.b16 %v2910
        %v2982 = vpack.c.b16 %v2951, %v2950
        %v2983 = vpack.c.b16 %v2953, %v2952
        %v2984 = vpack.c.b16 %v2955, %v2954
        %v2985 = vpack.c.b16 %v2957, %v2956
        %v2986 = vpack.c.b16 %v2959, %v2958
        %v2987 = vpack.c.b16 %v2961, %v2960
        %v2988 = vpack.c.b16 %v2963, %v2962
        %v2989 = vpack.c.b16 %v2965, %v2964
        %v2990 = vpack.c.b16 %v2967, %v2966
        %v2991 = vpack.c.b16 %v2969, %v2968
        %v2992 = vpack.c.b16 %v2971, %v2970
        %v2993 = vpack.c.b16 %v2973, %v2972
        %v2994 = vpack.c.b16 %v2975, %v2974
        %v2995 = vpack.c.b16 %v2977, %v2976
        %v2996 = vpack.c.b16 %v2979, %v2978
        %v2997 = vpack.c.b16 %v2981, %v2980
        %3014 = vmatprep.subr.bf16.mxu0 0
        %3015 = vmatpush1.bf16.msra.mxu0 %v2982
        %3016 = vmatprep.subr.bf16.mxu0 0
        %3017 = vmatpush1.bf16.msra.mxu0 %v2983
        %3018 = vmatprep.subr.bf16.mxu0 0
        %3019 = vmatpush1.bf16.msra.mxu0 %v2984
        %3020 = vmatprep.subr.bf16.mxu0 0
        %3021 = vmatpush1.bf16.msra.mxu0 %v2985
        %3022 = vmatprep.subr.bf16.mxu0 0
        %3023 = vmatpush1.bf16.msra.mxu0 %v2986
        %3024 = vmatprep.subr.bf16.mxu0 0
        %3025 = vmatpush1.bf16.msra.mxu0 %v2987
        %3026 = vmatprep.subr.bf16.mxu0 0
        %3027 = vmatpush1.bf16.msra.mxu0 %v2988
        %3028 = vmatprep.subr.bf16.mxu0 0
        %3029 = vmatpush1.bf16.msra.mxu0 %v2989
        %3030 = vmatprep.subr.bf16.mxu0 0
        %3031 = vmatpush1.bf16.msra.mxu0 %v2990
        %3032 = vmatprep.subr.bf16.mxu0 0
        %3033 = vmatpush1.bf16.msra.mxu0 %v2991
        %3034 = vmatprep.subr.bf16.mxu0 0
        %3035 = vmatpush1.bf16.msra.mxu0 %v2992
        %3036 = vmatprep.subr.bf16.mxu0 0
        %3037 = vmatpush1.bf16.msra.mxu0 %v2993
        %3038 = vmatprep.subr.bf16.mxu0 0
        %3039 = vmatpush1.bf16.msra.mxu0 %v2994
        %3040 = vmatprep.subr.bf16.mxu0 0
        %3041 = vmatpush1.bf16.msra.mxu0 %v2995
        %3042 = vmatprep.subr.bf16.mxu0 0
        %3043 = vmatpush1.bf16.msra.mxu0 %v2996
        %3044 = vmatprep.subr.bf16.mxu0 0
        %3045 = vmatpush1.bf16.msra.mxu0 %v2997
        %3046 = vmatprep.mubr.bf16.mxu0 %v2878
        %3047 = vmatmul.mubr.bf16.gmra.mrb[0].mxu0 %v2877
        %v3048 = vpop.f32.mrb[0].mxu0
        %v3049 = vadd.f32 %v2916, %v3048
        %v3050 = vpop.f32.mrb[0].mxu0
        %v3051 = vpop.f32.mrb[0].mxu0
        %v3052 = vpop.f32.mrb[0].mxu0
        %3053 = vdwg.mxu0
        %v3054 = vadd.f32 %v2769, %v3049
        %v3055 = vld [vmem:[%s1029] sm:$0x1]
        %v3056 = vld [vmem:[%s1032] sm:$0x1]
        %v3057 = vsel %vm1152, %v3054, 0.0
        %3058 = vadd.xlane.f32.xlu0 %v3057
        %v3059 = vpop.xlane.xlu0 %3058
        %v3060 = vmul.f32 %v3059, %v2745
        %v3061 = vsub.f32 %v3054, %v3060
        %v3062 = vmul.f32 %v3061, %v3061
        %v3063 = vsel %vm1152, %v3062, 0.0
        %3064 = vadd.xlane.f32.xlu0 %v3063
        %v3065 = vpop.xlane.xlu0 %3064
        %v3066 = vmul.f32 %v3065, %v2745
        %v3067 = vadd.f32 %v3066, 1e-05
        %v3068 = vrsqrt.pop %v3067
        %v3069 = vmul.f32 %v3061, %v3068
        %v3071 = vlaneseq
        %v3072 = vshrl.u32 %v3071, 7
        %v3073 = vsub.s32 0, %v3072
        %v3074 = vrot.slane %v3055, %v3073
        %v3076 = vmul.f32 %v3069, %v3074
        %v3078 = vlaneseq
        %v3079 = vshrl.u32 %v3078, 7
        %v3080 = vsub.s32 0, %v3079
        %v3081 = vrot.slane %v3056, %v3080
        %v3083 = vadd.f32 %v3076, %v3081
        %3084 = vst.msk [vmem:[#allocation2] sm:$0xff] %vm1152, %v3083
        %p3085 = scmp.eq.s32.totalorder %s47, 1
        // Predicated region
        $region113: #{tpu_custom_call.1} parent=107 // pred_check
          %p3086 = pneg %p3085
        $region114: #{tpu_custom_call.1} parent=107 // pred_check_branch
          %3088 = sbr.rel (%p3086) target = $region116
        $region115: #{tpu_custom_call.1} parent=107 // pred_region
          %v3089 = vld [vmem:[#allocation2] sm:$0xff]
          %3090 = vst.msk [vmem:[%s952] sm:$0xff] %vm1152, %v3089
          %v3091 = vsel %vm1152, %v3089, 0.0
          %v3092 = vrot.slane %v3091, 4
          %v3093 = vadd.f32 %v3091, %v3092
          %v3094 = vrot.slane %v3093, 2
          %v3095 = vadd.f32 %v3093, %v3094
          %v3096 = vrot.slane %v3095, 1
          %v3097 = vadd.f32 %v3095, %v3096
          %v3098 = vrcp.pop 8.0
          %v3099 = vmul.f32 %v3097, %v3098
          %vm3100 = vcmask 516096
          %3101 = vst.msk [vmem:[%s958] sm:$0x1] %vm3100, %v3099
          %v3102 = vld [vmem:[%s20] sm:$0xff]
          %v3103 = vld [vmem:[%s20 + $0x8] sm:$0xff]
          %v3104 = vld [vmem:[%s20 + $0x10] sm:$0xff]
          %v3105 = vld [vmem:[%s20 + $0x18] sm:$0xff]
          %v3106 = vld [vmem:[%s20 + $0x20] sm:$0xff]
          %v3107 = vld [vmem:[%s20 + $0x28] sm:$0xff]
          %v3108 = vld [vmem:[%s20 + $0x30] sm:$0xff]
          %v3109 = vld [vmem:[%s20 + $0x38] sm:$0xff]
          %v3110 = vld [vmem:[%s21] sm:$0x1]
          %v3112 = vsel %vm1152, %v3099, 0
          %3114 = vmatprep.subr.mxu0 0.0
          %3115 = vmatpush1.msra.mxu0 %v3102
          %3116 = vmatprep.subr.mxu0 0.0
          %3117 = vmatpush1.msra.mxu0 %v3103
          %3118 = vmatprep.subr.mxu0 0.0
          %3119 = vmatpush1.msra.mxu0 %v3104
          %3120 = vmatprep.subr.mxu0 0.0
          %3121 = vmatpush1.msra.mxu0 %v3105
          %3122 = vmatprep.subr.mxu0 0.0
          %3123 = vmatpush1.msra.mxu0 %v3106
          %3124 = vmatprep.subr.mxu0 0.0
          %3125 = vmatpush1.msra.mxu0 %v3107
          %3126 = vmatprep.subr.mxu0 0.0
          %3127 = vmatpush1.msra.mxu0 %v3108
          %3128 = vmatprep.subr.mxu0 0.0
          %3129 = vmatpush1.msra.mxu0 %v3109
          %3130 = vmatprep.subr.mxu0 0.0
          %3131 = vmatpush1.msra.mxu0 0.0
          %3132 = vmatprep.subr.mxu0 0.0
          %3133 = vmatpush1.msra.mxu0 0.0
          %3134 = vmatprep.subr.mxu0 0.0
          %3135 = vmatpush1.msra.mxu0 0.0
          %3136 = vmatprep.subr.mxu0 0.0
          %3137 = vmatpush1.msra.mxu0 0.0
          %3138 = vmatprep.subr.mxu0 0.0
          %3139 = vmatpush1.msra.mxu0 0.0
          %3140 = vmatprep.subr.mxu0 0.0
          %3141 = vmatpush1.msra.mxu0 0.0
          %3142 = vmatprep.subr.mxu0 0.0
          %3143 = vmatpush1.msra.mxu0 0.0
          %3144 = vmatprep.subr.mxu0 0.0
          %3145 = vmatpush1.msra.mxu0 0.0
          %3146 = vmatprep.subr.mxu0 0.0
          %3147 = vmatpush1.msra.mxu0 0.0
          %3148 = vmatprep.subr.mxu0 0.0
          %3149 = vmatpush1.msra.mxu0 0.0
          %3150 = vmatprep.subr.mxu0 0.0
          %3151 = vmatpush1.msra.mxu0 0.0
          %3152 = vmatprep.subr.mxu0 0.0
          %3153 = vmatpush1.msra.mxu0 0.0
          %3154 = vmatprep.subr.mxu0 0.0
          %3155 = vmatpush1.msra.mxu0 0.0
          %3156 = vmatprep.subr.mxu0 0.0
          %3157 = vmatpush1.msra.mxu0 0.0
          %3158 = vmatprep.subr.mxu0 0.0
          %3159 = vmatpush1.msra.mxu0 0.0
          %3160 = vmatprep.subr.mxu0 0.0
          %3161 = vmatpush1.msra.mxu0 0.0
          %3162 = vmatprep.subr.mxu0 0.0
          %3163 = vmatpush1.msra.mxu0 0.0
          %3164 = vmatprep.subr.mxu0 0.0
          %3165 = vmatpush1.msra.mxu0 0.0
          %3166 = vmatprep.subr.mxu0 0.0
          %3167 = vmatpush1.msra.mxu0 0.0
          %3168 = vmatprep.subr.mxu0 0.0
          %3169 = vmatpush1.msra.mxu0 0.0
          %3170 = vmatprep.subr.mxu0 0.0
          %3171 = vmatpush1.msra.mxu0 0.0
          %3172 = vmatprep.subr.mxu0 0.0
          %3173 = vmatpush1.msra.mxu0 0.0
          %3174 = vmatprep.subr.mxu0 0.0
          %3175 = vmatpush1.msra.mxu0 0.0
          %3176 = vmatprep.subr.mxu0 0.0
          %3177 = vmatpush1.msra.mxu0 0.0
          %3178 = vmatprep.mubr.f32.mxu0 0.0
          %3179 = vmatmul.mubr.f32.gmra.mrb[0].mxu0 %v3112
          %v3180 = vpop.f32.mrb[0].mxu0
          %v3181 = vadd.f32 %v3110, %v3180
          %v3182 = vpop.f32.mrb[0].mxu0
          %3183 = vdwg.mxu0
          %vm3184 = vcmask 49152
          %v3185 = vsel %vm3184, %v3181, -inf
          %3186 = vmax.xlane.f32.xlu0 %v3185
          %v3187 = vpop.xlane.xlu0 %3186
          %v3188 = vsub.f32 %v3181, %v3187
          %v3189 = vmul.f32 %v3188, 1.442695
          %v3190 = vpow.pop %v3189
          %v3191 = vsel %vm3184, %v3190, 0.0
          %3192 = vadd.xlane.f32.xlu0 %v3191
          %v3193 = vpop.xlane.xlu0 %3192
          %v3194 = vrcp.pop %v3193
          %v3195 = vmul.f32 %v3190, %v3194
          %v3196 = vsub.f32 0.0, %v3181
          %v3197 = vmul.f32 %v3196, 1.442695
          %v3198 = vpow.pop %v3197
          %v3199 = vadd.f32 %v3198, 1.0
          %v3200 = vrcp.pop %v3199
          %v3201 = vmul.f32 1.0, %v3200
          %vm3202 = vcmask 56320
          %v3203 = vsel %vm3202, %v3195, %v3201
          %vm3204 = vcmask 113664
          %v3205 = vsel %vm3204, %v3203, %v3201
          %vm3206 = vcmask 121856
          %v3207 = vsel %vm3206, %v3205, 0.0
          %vm3208 = vcmask 122880
          %3209 = vst.msk [vmem:[%s964] sm:$0x1] %vm3208, %v3207
        $region116: #{tpu_custom_call.1} parent=107 // pred_fallthru
          _
        %s3210 = sand.u32 %s609, 1
        %s3211 = scalar_lea.sflag [#allocation4], %s3210
        %s3212 = sand.u32 %s609, 1
        %s3213 = smul.addr %s3212, 8
        %s3214 = scalar_lea.vmem [#allocation3], %s3213
        %s3215 = sand.u32 %s42, 1
        %s3216 = scalar_lea.sflag [#allocation6], %s3215
        %s3217 = sand.u32 %s635, 1
        %s3218 = scalar_lea.vmem [#allocation5], %s3217
        %s3219 = sand.u32 %s42, 1
        %s3220 = scalar_lea.sflag [#allocation6], %s3219
        %s3221 = sand.u32 %s661, 1
        %s3222 = scalar_lea.vmem [#allocation7], %s3221
        // Predicated region
        $region117: #{tpu_custom_call.1} parent=107 // pred_check
          %p3223 = pneg %p619
        $region118: #{tpu_custom_call.1} parent=107 // pred_check_branch
          %3225 = sbr.rel (%p3223) target = $region120
        $region119: #{tpu_custom_call.1} parent=107 // pred_region
          %s3227 = ssub.s32 128, 128
          %3228 = vsyncadd %s3211, %s3227
          %s3229 = smul.addr %s46, 128
          %s3230 = scalar_lea.hbm %s22, %s3229
          %s3232 = sshll.u32 %s3214, 4
          %s3233 = int_to_ptr.vmem [resolvable:$true] %s3232
          %3235 = dma.vmem_to_hbm [thread:$0]  %s3233, 128, %s3230, %s3211
        $region120: #{tpu_custom_call.1} parent=107 // pred_fallthru
          _
        // Predicated region
        $region121: #{tpu_custom_call.1} parent=107 // pred_check
          %p3236 = pneg %p645
        $region122: #{tpu_custom_call.1} parent=107 // pred_check_branch
          %3238 = sbr.rel (%p3236) target = $region124
        $region123: #{tpu_custom_call.1} parent=107 // pred_region
          %s3240 = ssub.s32 16, 16
          %3241 = vsyncadd %s3216, %s3240
          %s3242 = smul.addr %s46, 16
          %s3243 = scalar_lea.hbm %s23, %s3242
          %s3245 = sshll.u32 %s3218, 4
          %s3246 = int_to_ptr.vmem [resolvable:$true] %s3245
          %3248 = dma.vmem_to_hbm [thread:$0]  %s3246, 16, %s3243, %s3216
        $region124: #{tpu_custom_call.1} parent=107 // pred_fallthru
          _
        // Predicated region
        $region125: #{tpu_custom_call.1} parent=107 // pred_check
          %p3249 = pneg %p671
        $region126: #{tpu_custom_call.1} parent=107 // pred_check_branch
          %3251 = sbr.rel (%p3249) target = $region128
        $region127: #{tpu_custom_call.1} parent=107 // pred_region
          %s3253 = ssub.s32 16, 16
          %3254 = vsyncadd %s3220, %s3253
          %s3255 = smul.addr %s46, 16
          %s3256 = scalar_lea.hbm %s24, %s3255
          %s3258 = sshll.u32 %s3222, 4
          %s3259 = int_to_ptr.vmem [resolvable:$true] %s3258
          %3261 = dma.vmem_to_hbm [thread:$0]  %s3259, 16, %s3256, %s3220
        $region128: #{tpu_custom_call.1} parent=107 // pred_fallthru
          _
      $region108: #{tpu_custom_call.1} parent=5 // pred_fallthru
        _
      %p3262 = scmp.le.s32.totalorder 2, %s37
      // Predicated region
      $region129: #{tpu_custom_call.1} parent=5 // pred_check
        %p3263 = pneg %p3262
      $region130: #{tpu_custom_call.1} parent=5 // pred_check_branch
        %3265 = sbr.rel (%p3263) target = $region132
      $region131: #{tpu_custom_call.1} parent=5 // pred_region
        %s3266 = ssub.s32 %s37, 2
        // Predicated region
        $region133: #{tpu_custom_call.1} parent=131 // pred_check
          %p3267 = pneg %p625
        $region134: #{tpu_custom_call.1} parent=131 // pred_check_branch
          %3269 = sbr.rel (%p3267) target = $region136
        $region135: #{tpu_custom_call.1} parent=131 // pred_region
          %s3270 = sand.u32 %s610, 1
          %s3271 = scalar_lea.sflag [#allocation4], %s3270
          %s3272 = sand.u32 %s610, 1
          %s3273 = smul.addr %s3272, 8
          %s3274 = scalar_lea.vmem [#allocation3], %s3273
          %3275 = dma.done %s3271, 128
        $region136: #{tpu_custom_call.1} parent=131 // pred_fallthru
          _
        // Predicated region
        $region137: #{tpu_custom_call.1} parent=131 // pred_check
          %p3276 = pneg %p651
        $region138: #{tpu_custom_call.1} parent=131 // pred_check_branch
          %3278 = sbr.rel (%p3276) target = $region140
        $region139: #{tpu_custom_call.1} parent=131 // pred_region
          %s3279 = sand.u32 %s43, 1
          %s3280 = scalar_lea.sflag [#allocation6], %s3279
          %s3281 = sand.u32 %s636, 1
          %s3282 = scalar_lea.vmem [#allocation5], %s3281
          %3283 = dma.done %s3280, 16
        $region140: #{tpu_custom_call.1} parent=131 // pred_fallthru
          _
        // Predicated region
        $region141: #{tpu_custom_call.1} parent=131 // pred_check
          %p3284 = pneg %p677
        $region142: #{tpu_custom_call.1} parent=131 // pred_check_branch
          %3286 = sbr.rel (%p3284) target = $region144
        $region143: #{tpu_custom_call.1} parent=131 // pred_region
          %s3287 = sand.u32 %s43, 1
          %s3288 = scalar_lea.sflag [#allocation6], %s3287
          %s3289 = sand.u32 %s662, 1
          %s3290 = scalar_lea.vmem [#allocation7], %s3289
          %3291 = dma.done %s3288, 16
        $region144: #{tpu_custom_call.1} parent=131 // pred_fallthru
          _
      $region132: #{tpu_custom_call.1} parent=5 // pred_fallthru
        _
    $region6: #{tpu_custom_call.1} parent=1 // loop_footer
      %s41 = sadd.s32 1, %s37
    $region7: #{tpu_custom_call.1} parent=1 // loop_footer_branch
      %36 = sbr.rel target = $region3
    $region8: #{tpu_custom_call.1} parent=1 // loop_exit
      _
    %3292 = vsyncpa [#allocation4], 1
    %s3293 = scalar_lea.sflag [#allocation4], 1
    %3294 = vsyncpa %s3293, 1
    %3295 = vsyncpa [#allocation6], 1
    %s3296 = scalar_lea.sflag [#allocation6], 1
    %3297 = vsyncpa %s3296, 1

</llo_original>
